<compile_context>
chip_gen: v5e
topology: v5e:2x2
jax: 0.10.0
libtpu: 0.0.40
codegen_flags: <defaults>
</compile_context>

<pallas_src>
import functools

import jax
import jax.numpy as jnp
from jax import lax
from jax.experimental import pallas as pl
from jax.experimental.pallas import tpu as pltpu


def _distinct_shifts(k, dilations):
    """Distinct nonzero per-tap time shifts (k-1-j)*d, sorted."""
    return tuple(sorted({(k - 1 - j) * d for d in dilations for j in range(k)} - {0}))


# ---------------------------------------------------------------------------
# Pallas kernel
# ---------------------------------------------------------------------------
def _make_wavenet_kernel(BT, H, L, k, dilations, shift_idx):
    """Full Wavenet forward over the flattened (B*T, C) activation slab."""

    def kernel(x_ref, shift_ref, in_w_ref, in_b_ref,
               filt_w_ref, filt_b_ref, gate_w_ref, gate_b_ref,
               res_w_ref, res_b_ref, skip_w_ref, skip_b_ref,
               w1_ref, b1_ref, w2_ref, b2_ref, o_ref):
        # input_to_hidden 1x1 conv (bf16 MXU operands, f32 accumulate).
        x = x_ref[...].astype(jnp.bfloat16)                      # (BT, Cin)
        h = jnp.dot(x, in_w_ref[...],
                    preferred_element_type=jnp.float32) + in_b_ref[...]  # (BT,H) f32

        skip_sum = jnp.zeros((BT, H), jnp.float32)

        for l in range(L):                                       # static unroll
            d = dilations[l]
            h_bf = h.astype(jnp.bfloat16)

            # Per-tap operands.  A nonzero tap shift is applied with ONE MXU
            # matmul against the precomputed block-diagonal causal-shift matrix
            # (rows that would cross a batch boundary / pull from the causal
            # zero-padding come out exactly zero).  No roll, no mask, no concat.
            taps = []
            for j in range(k):
                s = (k - 1 - j) * d
                if s == 0:
                    taps.append(h_bf)
                else:
                    sh = jnp.dot(shift_ref[shift_idx[s]], h_bf,
                                 preferred_element_type=jnp.float32)
                    taps.append(sh.astype(jnp.bfloat16))

            # Un-fused filter / gate convs: per-tap (BT,H)@(H,H) dots, f32 acc.
            filt = filt_b_ref[l]                                  # (1, H) f32
            gate = gate_b_ref[l]                                  # (1, H) f32
            for j in range(k):
                filt = filt + jnp.dot(taps[j], filt_w_ref[l * k + j],
                                      preferred_element_type=jnp.float32)
                gate = gate + jnp.dot(taps[j], gate_w_ref[l * k + j],
                                      preferred_element_type=jnp.float32)

            # sigmoid(g) == 0.5*(1 + tanh(0.5*g)) -> single EUP push per layer
            # for the gate (plus one for the filter tanh).  All f32 on the VPU/EUP.
            z = jnp.tanh(filt) * (0.5 * (1.0 + jnp.tanh(0.5 * gate)))  # (BT, H)

            # Un-fused residual / skip 1x1 convs (no mid-vreg lane slice).
            z_bf = z.astype(jnp.bfloat16)
            h = h + jnp.dot(z_bf, res_w_ref[l],
                            preferred_element_type=jnp.float32) + res_b_ref[l]
            skip_sum = skip_sum + jnp.dot(z_bf, skip_w_ref[l],
                                          preferred_element_type=jnp.float32) + skip_b_ref[l]

        y = jnp.maximum(skip_sum, 0.0).astype(jnp.bfloat16)
        y = jnp.dot(y, w1_ref[...], preferred_element_type=jnp.float32) + b1_ref[...]
        y = jnp.maximum(y, 0.0).astype(jnp.bfloat16)
        # Final head is lane-padded to 128 output channels -> lane-dense,
        # unmasked stores; written back as bf16 to halve output HBM traffic.
        y = jnp.dot(y, w2_ref[...], preferred_element_type=jnp.float32) + b2_ref[...]
        o_ref[...] = y.astype(o_ref.dtype)

    return kernel


# ---------------------------------------------------------------------------
# Wrapper
# ---------------------------------------------------------------------------
def wavenet_forward(x, kparams, *, kernel_size, dilations, out_channels):
    """x: (B, T, Cin) float32 -> (B, T, out_channels) float32."""
    B, T, Cin = x.shape
    H = kparams["in_w"].shape[1]
    Cpad = kparams["w2"].shape[1]              # lane-padded head width (128-mult)
    L = len(dilations)
    k = kernel_size
    BT = B * T

    shifts = _distinct_shifts(k, dilations)
    shift_idx = {s: i for i, s in enumerate(shifts)}

    kern = _make_wavenet_kernel(BT, H, L, k, tuple(dilations), shift_idx)

    names = ("shift_mats", "in_w", "in_b", "filt_w", "filt_b", "gate_w",
             "gate_b", "res_w", "res_b", "skip_w", "skip_b",
             "w1", "b1", "w2", "b2")
    weights = [kparams[n] for n in names]

    def full_spec(a):
        nd = a.ndim
        return pl.BlockSpec(a.shape, lambda i, nd=nd: (0,) * nd)

    x_flat = x.reshape(BT, Cin)
    in_specs = [full_spec(x_flat)] + [full_spec(w) for w in weights]
    out_spec = pl.BlockSpec((BT, Cpad), lambda i: (0, 0))

    # Single grid step: the whole (small) batch is folded into the kernel, so
    # weights are loaded once and there is no per-step pipeline overhead.
    out = pl.pallas_call(
        kern,
        out_shape=jax.ShapeDtypeStruct((BT, Cpad), jnp.bfloat16),
        grid_spec=pltpu.PrefetchScalarGridSpec(
            num_scalar_prefetch=0,
            grid=(1,),
            in_specs=in_specs,
            out_specs=out_spec,
        ),
        compiler_params=pltpu.CompilerParams(
            dimension_semantics=("arbitrary",)),
    )(x_flat, *weights)

    return (out[:, :out_channels].astype(jnp.float32)
            .reshape(B, T, out_channels))


# ---------------------------------------------------------------------------
# Reference (plain JAX, mirrors PyTorch NCW conv semantics)
# ---------------------------------------------------------------------------
def _conv1d_pt(x, w, b, dilation=1):
    # x: (B, Cin, T), w: (Cout, Cin, K), b: (Cout,)
    y = lax.conv_general_dilated(
        x, w, window_strides=(1,), padding="VALID",
        rhs_dilation=(dilation,), dimension_numbers=("NCH", "OIH", "NCH"))
    return y + b[None, :, None]


def reference_forward(x_btc, pt, kernel_size, dilations):
    x = jnp.transpose(x_btc, (0, 2, 1))                     # (B, Cin, T)
    x = _conv1d_pt(x, pt["in_w"], pt["in_b"])               # (B, H, T)
    H = x.shape[1]
    skip_sum = jnp.zeros_like(x)
    for l, d in enumerate(dilations):
        pad = (kernel_size - 1) * d
        xp = jnp.pad(x, ((0, 0), (0, 0), (pad, 0)))
        fg = _conv1d_pt(xp, pt["fg_w"][l], pt["fg_b"][l], dilation=d)
        filt, gate = fg[:, :H, :], fg[:, H:, :]
        z = jnp.tanh(filt) * jax.nn.sigmoid(gate)
        residual = x[:, :, -z.shape[2]:] + _conv1d_pt(z, pt["rw"][l], pt["rb"][l])
        skip = _conv1d_pt(z, pt["sw"][l], pt["sb"][l])
        skip_sum = skip_sum[:, :, -skip.shape[2]:] + skip
        x = residual
    y = _conv1d_pt(jax.nn.relu(skip_sum), pt["w1"], pt["b1"])
    y = _conv1d_pt(jax.nn.relu(y), pt["w2"], pt["b2"])
    return y                                                # (B, Cout, T)


# ---------------------------------------------------------------------------
# Deterministic parameter init (PyTorch weight conventions, then repacked)
# ---------------------------------------------------------------------------
def init_params(key, Cin, Cout, H, L, k, dilations, B, T, scale=0.3):
    ks = jax.random.split(key, 12)
    pt = {
        "in_w": scale * jax.random.normal(ks[0], (H, Cin, 1), jnp.float32),
        "in_b": scale * jax.random.normal(ks[1], (H,), jnp.float32),
        "fg_w": scale * jax.random.normal(ks[2], (L, 2 * H, H, k), jnp.float32),
        "fg_b": scale * jax.random.normal(ks[3], (L, 2 * H), jnp.float32),
        "rw": scale * jax.random.normal(ks[4], (L, H, H, 1), jnp.float32),
        "rb": scale * jax.random.normal(ks[5], (L, H), jnp.float32),
        "sw": scale * jax.random.normal(ks[6], (L, H, H, 1), jnp.float32),
        "sb": scale * jax.random.normal(ks[7], (L, H), jnp.float32),
        "w1": scale * jax.random.normal(ks[8], (H, H, 1), jnp.float32),
        "b1": scale * jax.random.normal(ks[9], (H,), jnp.float32),
        "w2": scale * jax.random.normal(ks[10], (Cout, H, 1), jnp.float32),
        "b2": scale * jax.random.normal(ks[11], (Cout,), jnp.float32),
    }

    bf16 = jnp.bfloat16

    # --- repack for the (BT, C)-layout kernel -------------------------------
    # Un-fused per-tap filter / gate weights: (L, 2H, H, k) -> (L*k, H, H).
    fg = pt["fg_w"]
    filt_w = jnp.transpose(fg[:, :H, :, :], (0, 3, 2, 1)).reshape(L * k, H, H)
    gate_w = jnp.transpose(fg[:, H:, :, :], (0, 3, 2, 1)).reshape(L * k, H, H)
    filt_b = pt["fg_b"][:, None, :H]                       # (L, 1, H) f32
    gate_b = pt["fg_b"][:, None, H:]                       # (L, 1, H) f32

    # Un-fused residual / skip 1x1 weights: (L, H, H) each.
    res_w = jnp.transpose(pt["rw"][..., 0], (0, 2, 1))
    skip_w = jnp.transpose(pt["sw"][..., 0], (0, 2, 1))

    # Lane-dense final head: pad Cout up to a 128 multiple (sliced off outside).
    Cpad = max(128, ((Cout + 127) // 128) * 128)
    w2 = pt["w2"][:, :, 0].T                               # (H, Cout)
    w2p = jnp.zeros((H, Cpad), jnp.float32).at[:, :Cout].set(w2)
    b2p = jnp.zeros((1, Cpad), jnp.float32).at[0, :Cout].set(pt["b2"])

    # Block-diagonal causal shift matrices, one per distinct nonzero tap shift:
    # out[r] = h[r - s] when (r mod T) >= s, else 0  (== causal zero padding).
    BT = B * T
    shifts = _distinct_shifts(k, dilations)
    row = jnp.arange(BT)[:, None]
    col = jnp.arange(BT)[None, :]
    mats = [((row - col == s) & (row % T >= s)).astype(jnp.float32)
            for s in shifts]
    if not mats:                                           # k == 1: unused dummy
        mats = [jnp.zeros((BT, BT), jnp.float32)]
    shift_mats = jnp.stack(mats, axis=0).astype(bf16)      # (n_shift, BT, BT)

    kparams = {
        "shift_mats": shift_mats,                          # (n_shift, BT, BT) bf16
        "in_w": pt["in_w"][:, :, 0].T.astype(bf16),        # (Cin, H)
        "in_b": pt["in_b"][None, :],                       # (1, H)  f32
        "filt_w": filt_w.astype(bf16),                     # (L*k, H, H)
        "filt_b": filt_b,                                  # (L, 1, H) f32
        "gate_w": gate_w.astype(bf16),                     # (L*k, H, H)
        "gate_b": gate_b,                                  # (L, 1, H) f32
        "res_w": res_w.astype(bf16),                       # (L, H, H)
        "res_b": pt["rb"][:, None, :],                     # (L, 1, H) f32
        "skip_w": skip_w.astype(bf16),                     # (L, H, H)
        "skip_b": pt["sb"][:, None, :],                    # (L, 1, H) f32
        "w1": pt["w1"][:, :, 0].T.astype(bf16),            # (H, H)
        "b1": pt["b1"][None, :],                           # (1, H)  f32
        "w2": w2p.astype(bf16),                            # (H, Cpad)
        "b2": b2p,                                         # (1, Cpad) f32
    }
    return pt, kparams


if __name__ == "__main__":
    # Module hyper-parameters (small, forward-consistent shapes).
    input_channels = 4
    output_channels = 4
    hidden_channels = 32
    num_layers = 3
    num_stacks = 2
    kernel_size = 2
    dilation_rate = 2
    B, T = 2, 16

    L = num_stacks * num_layers
    dilations = tuple(dilation_rate ** (j % num_layers) for j in range(L))

    key = jax.random.PRNGKey(0)
    kx, kp = jax.random.split(key)
    x = jax.random.normal(kx, (B, T, input_channels), jnp.float32)

    pt_params, kparams = init_params(
        kp, input_channels, output_channels, hidden_channels, L,
        kernel_size, dilations, B, T)

    run = jax.jit(functools.partial(
        wavenet_forward, kernel_size=kernel_size, dilations=dilations,
        out_channels=output_channels))
    out = jax.block_until_ready(run(x, kparams))           # (B, T, Cout)

    ref = reference_forward(x, pt_params, kernel_size, dilations)  # (B, Cout, T)
    ref = jnp.transpose(ref, (0, 2, 1))

    assert out.shape == (B, T, output_channels)
    err = float(jnp.max(jnp.abs(out - ref)))
    ref_scale = float(jnp.max(jnp.abs(ref)))
    # bf16 MXU operands + bf16 output store (f32 accumulation) -> loose tolerance.
    assert err <= 5e-2 * ref_scale + 5e-2, (
        f"max abs err {err} vs ref scale {ref_scale}")

    print("KERNEL_OK")
</pallas_src>

<mosaic_0001>
module attributes {stable_mosaic.version = 11 : i64} {
  func.func @kernel(%arg0: i32, %arg1: memref<32x4xf32, #tpu.memory_space<vmem>>, %arg2: memref<3x32x32xbf16, #tpu.memory_space<vmem>>, %arg3: memref<4x32xbf16, #tpu.memory_space<vmem>>, %arg4: memref<1x32xf32, #tpu.memory_space<vmem>>, %arg5: memref<12x32x32xbf16, #tpu.memory_space<vmem>>, %arg6: memref<6x1x32xf32, #tpu.memory_space<vmem>>, %arg7: memref<12x32x32xbf16, #tpu.memory_space<vmem>>, %arg8: memref<6x1x32xf32, #tpu.memory_space<vmem>>, %arg9: memref<6x32x32xbf16, #tpu.memory_space<vmem>>, %arg10: memref<6x1x32xf32, #tpu.memory_space<vmem>>, %arg11: memref<6x32x32xbf16, #tpu.memory_space<vmem>>, %arg12: memref<6x1x32xf32, #tpu.memory_space<vmem>>, %arg13: memref<32x32xbf16, #tpu.memory_space<vmem>>, %arg14: memref<1x32xf32, #tpu.memory_space<vmem>>, %arg15: memref<32x128xbf16, #tpu.memory_space<vmem>>, %arg16: memref<1x128xf32, #tpu.memory_space<vmem>>, %arg17: memref<32x128xbf16, #tpu.memory_space<vmem>>) attributes {dimension_semantics = [#tpu.dimension_semantics<arbitrary>], iteration_bounds = array<i64: 1>, scalar_prefetch = 0 : i64, scratch_operands = 0 : i64, tpu.core_type = #tpu.core_type<tc>, window_params = [{pipeline_mode = #tpu.pipeline_mode<synchronous>, transform_indices = @transform_0, window_bounds = array<i64: 32, 4>}, {pipeline_mode = #tpu.pipeline_mode<synchronous>, transform_indices = @transform_1, window_bounds = array<i64: 3, 32, 32>}, {pipeline_mode = #tpu.pipeline_mode<synchronous>, transform_indices = @transform_2, window_bounds = array<i64: 4, 32>}, {pipeline_mode = #tpu.pipeline_mode<synchronous>, transform_indices = @transform_3, window_bounds = array<i64: 1, 32>}, {pipeline_mode = #tpu.pipeline_mode<synchronous>, transform_indices = @transform_4, window_bounds = array<i64: 12, 32, 32>}, {pipeline_mode = #tpu.pipeline_mode<synchronous>, transform_indices = @transform_5, window_bounds = array<i64: 6, 1, 32>}, {pipeline_mode = #tpu.pipeline_mode<synchronous>, transform_indices = @transform_6, window_bounds = array<i64: 12, 32, 32>}, {pipeline_mode = #tpu.pipeline_mode<synchronous>, transform_indices = @transform_7, window_bounds = array<i64: 6, 1, 32>}, {pipeline_mode = #tpu.pipeline_mode<synchronous>, transform_indices = @transform_8, window_bounds = array<i64: 6, 32, 32>}, {pipeline_mode = #tpu.pipeline_mode<synchronous>, transform_indices = @transform_9, window_bounds = array<i64: 6, 1, 32>}, {pipeline_mode = #tpu.pipeline_mode<synchronous>, transform_indices = @transform_10, window_bounds = array<i64: 6, 32, 32>}, {pipeline_mode = #tpu.pipeline_mode<synchronous>, transform_indices = @transform_11, window_bounds = array<i64: 6, 1, 32>}, {pipeline_mode = #tpu.pipeline_mode<synchronous>, transform_indices = @transform_12, window_bounds = array<i64: 32, 32>}, {pipeline_mode = #tpu.pipeline_mode<synchronous>, transform_indices = @transform_13, window_bounds = array<i64: 1, 32>}, {pipeline_mode = #tpu.pipeline_mode<synchronous>, transform_indices = @transform_14, window_bounds = array<i64: 32, 128>}, {pipeline_mode = #tpu.pipeline_mode<synchronous>, transform_indices = @transform_15, window_bounds = array<i64: 1, 128>}, {pipeline_mode = #tpu.pipeline_mode<synchronous>, transform_indices = @transform_16, window_bounds = array<i64: 32, 128>}]} {
    %c0 = arith.constant 0 : index
    %c0_0 = arith.constant 0 : index
    %0 = vector.load %arg1[%c0, %c0_0] : memref<32x4xf32, #tpu.memory_space<vmem>>, vector<32x4xf32>
    %1 = arith.truncf %0 : vector<32x4xf32> to vector<32x4xbf16>
    %c0_1 = arith.constant 0 : index
    %c0_2 = arith.constant 0 : index
    %2 = vector.load %arg3[%c0_1, %c0_2] : memref<4x32xbf16, #tpu.memory_space<vmem>>, vector<4x32xbf16>
    %cst = arith.constant dense<0.000000e+00> : vector<32x32xf32>
    %3 = tpu.matmul %1, %2, %cst {dimension_numbers = #tpu.dot_dimension_numbers<[1], [0], [0], [1], [0, 0, 1, 1], [], []>} : vector<32x4xbf16>, vector<4x32xbf16>, vector<32x32xf32> -> vector<32x32xf32>
    %c0_3 = arith.constant 0 : index
    %c0_4 = arith.constant 0 : index
    %4 = vector.load %arg4[%c0_3, %c0_4] : memref<1x32xf32, #tpu.memory_space<vmem>>, vector<1x32xf32>
    %5 = vector.broadcast %4 : vector<1x32xf32> to vector<32x32xf32>
    %6 = arith.addf %3, %5 : vector<32x32xf32>
    %cst_5 = arith.constant 0.000000e+00 : f32
    %7 = vector.broadcast %cst_5 : f32 to vector<32x32xf32>
    %8 = arith.truncf %6 : vector<32x32xf32> to vector<32x32xbf16>
    %c0_6 = arith.constant 0 : index
    %c0_7 = arith.constant 0 : index
    %c0_8 = arith.constant 0 : index
    %9 = vector.load %arg2[%c0_6, %c0_7, %c0_8] : memref<3x32x32xbf16, #tpu.memory_space<vmem>>, vector<1x32x32xbf16>
    %10 = vector.shape_cast %9 : vector<1x32x32xbf16> to vector<32x32xbf16>
    %cst_9 = arith.constant dense<0.000000e+00> : vector<32x32xf32>
    %11 = tpu.matmul %10, %8, %cst_9 {dimension_numbers = #tpu.dot_dimension_numbers<[1], [0], [0], [1], [0, 0, 1, 1], [], []>} : vector<32x32xbf16>, vector<32x32xbf16>, vector<32x32xf32> -> vector<32x32xf32>
    %12 = arith.truncf %11 : vector<32x32xf32> to vector<32x32xbf16>
    %c0_10 = arith.constant 0 : index
    %c0_11 = arith.constant 0 : index
    %c0_12 = arith.constant 0 : index
    %13 = vector.load %arg6[%c0_10, %c0_11, %c0_12] : memref<6x1x32xf32, #tpu.memory_space<vmem>>, vector<1x1x32xf32>
    %14 = vector.shape_cast %13 : vector<1x1x32xf32> to vector<1x32xf32>
    %c0_13 = arith.constant 0 : index
    %c0_14 = arith.constant 0 : index
    %c0_15 = arith.constant 0 : index
    %15 = vector.load %arg8[%c0_13, %c0_14, %c0_15] : memref<6x1x32xf32, #tpu.memory_space<vmem>>, vector<1x1x32xf32>
    %16 = vector.shape_cast %15 : vector<1x1x32xf32> to vector<1x32xf32>
    %c0_16 = arith.constant 0 : index
    %c0_17 = arith.constant 0 : index
    %c0_18 = arith.constant 0 : index
    %17 = vector.load %arg5[%c0_16, %c0_17, %c0_18] : memref<12x32x32xbf16, #tpu.memory_space<vmem>>, vector<1x32x32xbf16>
    %18 = vector.shape_cast %17 : vector<1x32x32xbf16> to vector<32x32xbf16>
    %cst_19 = arith.constant dense<0.000000e+00> : vector<32x32xf32>
    %19 = tpu.matmul %12, %18, %cst_19 {dimension_numbers = #tpu.dot_dimension_numbers<[1], [0], [0], [1], [0, 0, 1, 1], [], []>} : vector<32x32xbf16>, vector<32x32xbf16>, vector<32x32xf32> -> vector<32x32xf32>
    %20 = vector.broadcast %14 : vector<1x32xf32> to vector<32x32xf32>
    %21 = arith.addf %20, %19 : vector<32x32xf32>
    %c0_20 = arith.constant 0 : index
    %c0_21 = arith.constant 0 : index
    %c0_22 = arith.constant 0 : index
    %22 = vector.load %arg7[%c0_20, %c0_21, %c0_22] : memref<12x32x32xbf16, #tpu.memory_space<vmem>>, vector<1x32x32xbf16>
    %23 = vector.shape_cast %22 : vector<1x32x32xbf16> to vector<32x32xbf16>
    %cst_23 = arith.constant dense<0.000000e+00> : vector<32x32xf32>
    %24 = tpu.matmul %12, %23, %cst_23 {dimension_numbers = #tpu.dot_dimension_numbers<[1], [0], [0], [1], [0, 0, 1, 1], [], []>} : vector<32x32xbf16>, vector<32x32xbf16>, vector<32x32xf32> -> vector<32x32xf32>
    %25 = vector.broadcast %16 : vector<1x32xf32> to vector<32x32xf32>
    %26 = arith.addf %25, %24 : vector<32x32xf32>
    %c1 = arith.constant 1 : index
    %c0_24 = arith.constant 0 : index
    %c0_25 = arith.constant 0 : index
    %27 = vector.load %arg5[%c1, %c0_24, %c0_25] : memref<12x32x32xbf16, #tpu.memory_space<vmem>>, vector<1x32x32xbf16>
    %28 = vector.shape_cast %27 : vector<1x32x32xbf16> to vector<32x32xbf16>
    %cst_26 = arith.constant dense<0.000000e+00> : vector<32x32xf32>
    %29 = tpu.matmul %8, %28, %cst_26 {dimension_numbers = #tpu.dot_dimension_numbers<[1], [0], [0], [1], [0, 0, 1, 1], [], []>} : vector<32x32xbf16>, vector<32x32xbf16>, vector<32x32xf32> -> vector<32x32xf32>
    %30 = arith.addf %21, %29 : vector<32x32xf32>
    %c1_27 = arith.constant 1 : index
    %c0_28 = arith.constant 0 : index
    %c0_29 = arith.constant 0 : index
    %31 = vector.load %arg7[%c1_27, %c0_28, %c0_29] : memref<12x32x32xbf16, #tpu.memory_space<vmem>>, vector<1x32x32xbf16>
    %32 = vector.shape_cast %31 : vector<1x32x32xbf16> to vector<32x32xbf16>
    %cst_30 = arith.constant dense<0.000000e+00> : vector<32x32xf32>
    %33 = tpu.matmul %8, %32, %cst_30 {dimension_numbers = #tpu.dot_dimension_numbers<[1], [0], [0], [1], [0, 0, 1, 1], [], []>} : vector<32x32xbf16>, vector<32x32xbf16>, vector<32x32xf32> -> vector<32x32xf32>
    %34 = arith.addf %26, %33 : vector<32x32xf32>
    %35 = math.tanh %30 : vector<32x32xf32>
    %cst_31 = arith.constant 5.000000e-01 : f32
    %36 = vector.broadcast %cst_31 : f32 to vector<32x32xf32>
    %37 = arith.mulf %36, %34 : vector<32x32xf32>
    %38 = math.tanh %37 : vector<32x32xf32>
    %cst_32 = arith.constant 1.000000e+00 : f32
    %39 = vector.broadcast %cst_32 : f32 to vector<32x32xf32>
    %40 = arith.addf %39, %38 : vector<32x32xf32>
    %cst_33 = arith.constant 5.000000e-01 : f32
    %41 = vector.broadcast %cst_33 : f32 to vector<32x32xf32>
    %42 = arith.mulf %41, %40 : vector<32x32xf32>
    %43 = arith.mulf %35, %42 : vector<32x32xf32>
    %44 = arith.truncf %43 : vector<32x32xf32> to vector<32x32xbf16>
    %c0_34 = arith.constant 0 : index
    %c0_35 = arith.constant 0 : index
    %c0_36 = arith.constant 0 : index
    %45 = vector.load %arg9[%c0_34, %c0_35, %c0_36] : memref<6x32x32xbf16, #tpu.memory_space<vmem>>, vector<1x32x32xbf16>
    %46 = vector.shape_cast %45 : vector<1x32x32xbf16> to vector<32x32xbf16>
    %cst_37 = arith.constant dense<0.000000e+00> : vector<32x32xf32>
    %47 = tpu.matmul %44, %46, %cst_37 {dimension_numbers = #tpu.dot_dimension_numbers<[1], [0], [0], [1], [0, 0, 1, 1], [], []>} : vector<32x32xbf16>, vector<32x32xbf16>, vector<32x32xf32> -> vector<32x32xf32>
    %48 = arith.addf %6, %47 : vector<32x32xf32>
    %c0_38 = arith.constant 0 : index
    %c0_39 = arith.constant 0 : index
    %c0_40 = arith.constant 0 : index
    %49 = vector.load %arg10[%c0_38, %c0_39, %c0_40] : memref<6x1x32xf32, #tpu.memory_space<vmem>>, vector<1x1x32xf32>
    %50 = vector.shape_cast %49 : vector<1x1x32xf32> to vector<1x32xf32>
    %51 = vector.broadcast %50 : vector<1x32xf32> to vector<32x32xf32>
    %52 = arith.addf %48, %51 : vector<32x32xf32>
    %c0_41 = arith.constant 0 : index
    %c0_42 = arith.constant 0 : index
    %c0_43 = arith.constant 0 : index
    %53 = vector.load %arg11[%c0_41, %c0_42, %c0_43] : memref<6x32x32xbf16, #tpu.memory_space<vmem>>, vector<1x32x32xbf16>
    %54 = vector.shape_cast %53 : vector<1x32x32xbf16> to vector<32x32xbf16>
    %cst_44 = arith.constant dense<0.000000e+00> : vector<32x32xf32>
    %55 = tpu.matmul %44, %54, %cst_44 {dimension_numbers = #tpu.dot_dimension_numbers<[1], [0], [0], [1], [0, 0, 1, 1], [], []>} : vector<32x32xbf16>, vector<32x32xbf16>, vector<32x32xf32> -> vector<32x32xf32>
    %56 = arith.addf %7, %55 : vector<32x32xf32>
    %c0_45 = arith.constant 0 : index
    %c0_46 = arith.constant 0 : index
    %c0_47 = arith.constant 0 : index
    %57 = vector.load %arg12[%c0_45, %c0_46, %c0_47] : memref<6x1x32xf32, #tpu.memory_space<vmem>>, vector<1x1x32xf32>
    %58 = vector.shape_cast %57 : vector<1x1x32xf32> to vector<1x32xf32>
    %59 = vector.broadcast %58 : vector<1x32xf32> to vector<32x32xf32>
    %60 = arith.addf %56, %59 : vector<32x32xf32>
    %61 = arith.truncf %52 : vector<32x32xf32> to vector<32x32xbf16>
    %c1_48 = arith.constant 1 : index
    %c0_49 = arith.constant 0 : index
    %c0_50 = arith.constant 0 : index
    %62 = vector.load %arg2[%c1_48, %c0_49, %c0_50] : memref<3x32x32xbf16, #tpu.memory_space<vmem>>, vector<1x32x32xbf16>
    %63 = vector.shape_cast %62 : vector<1x32x32xbf16> to vector<32x32xbf16>
    %cst_51 = arith.constant dense<0.000000e+00> : vector<32x32xf32>
    %64 = tpu.matmul %63, %61, %cst_51 {dimension_numbers = #tpu.dot_dimension_numbers<[1], [0], [0], [1], [0, 0, 1, 1], [], []>} : vector<32x32xbf16>, vector<32x32xbf16>, vector<32x32xf32> -> vector<32x32xf32>
    %65 = arith.truncf %64 : vector<32x32xf32> to vector<32x32xbf16>
    %c1_52 = arith.constant 1 : index
    %c0_53 = arith.constant 0 : index
    %c0_54 = arith.constant 0 : index
    %66 = vector.load %arg6[%c1_52, %c0_53, %c0_54] : memref<6x1x32xf32, #tpu.memory_space<vmem>>, vector<1x1x32xf32>
    %67 = vector.shape_cast %66 : vector<1x1x32xf32> to vector<1x32xf32>
    %c1_55 = arith.constant 1 : index
    %c0_56 = arith.constant 0 : index
    %c0_57 = arith.constant 0 : index
    %68 = vector.load %arg8[%c1_55, %c0_56, %c0_57] : memref<6x1x32xf32, #tpu.memory_space<vmem>>, vector<1x1x32xf32>
    %69 = vector.shape_cast %68 : vector<1x1x32xf32> to vector<1x32xf32>
    %c2 = arith.constant 2 : index
    %c0_58 = arith.constant 0 : index
    %c0_59 = arith.constant 0 : index
    %70 = vector.load %arg5[%c2, %c0_58, %c0_59] : memref<12x32x32xbf16, #tpu.memory_space<vmem>>, vector<1x32x32xbf16>
    %71 = vector.shape_cast %70 : vector<1x32x32xbf16> to vector<32x32xbf16>
    %cst_60 = arith.constant dense<0.000000e+00> : vector<32x32xf32>
    %72 = tpu.matmul %65, %71, %cst_60 {dimension_numbers = #tpu.dot_dimension_numbers<[1], [0], [0], [1], [0, 0, 1, 1], [], []>} : vector<32x32xbf16>, vector<32x32xbf16>, vector<32x32xf32> -> vector<32x32xf32>
    %73 = vector.broadcast %67 : vector<1x32xf32> to vector<32x32xf32>
    %74 = arith.addf %73, %72 : vector<32x32xf32>
    %c2_61 = arith.constant 2 : index
    %c0_62 = arith.constant 0 : index
    %c0_63 = arith.constant 0 : index
    %75 = vector.load %arg7[%c2_61, %c0_62, %c0_63] : memref<12x32x32xbf16, #tpu.memory_space<vmem>>, vector<1x32x32xbf16>
    %76 = vector.shape_cast %75 : vector<1x32x32xbf16> to vector<32x32xbf16>
    %cst_64 = arith.constant dense<0.000000e+00> : vector<32x32xf32>
    %77 = tpu.matmul %65, %76, %cst_64 {dimension_numbers = #tpu.dot_dimension_numbers<[1], [0], [0], [1], [0, 0, 1, 1], [], []>} : vector<32x32xbf16>, vector<32x32xbf16>, vector<32x32xf32> -> vector<32x32xf32>
    %78 = vector.broadcast %69 : vector<1x32xf32> to vector<32x32xf32>
    %79 = arith.addf %78, %77 : vector<32x32xf32>
    %c3 = arith.constant 3 : index
    %c0_65 = arith.constant 0 : index
    %c0_66 = arith.constant 0 : index
    %80 = vector.load %arg5[%c3, %c0_65, %c0_66] : memref<12x32x32xbf16, #tpu.memory_space<vmem>>, vector<1x32x32xbf16>
    %81 = vector.shape_cast %80 : vector<1x32x32xbf16> to vector<32x32xbf16>
    %cst_67 = arith.constant dense<0.000000e+00> : vector<32x32xf32>
    %82 = tpu.matmul %61, %81, %cst_67 {dimension_numbers = #tpu.dot_dimension_numbers<[1], [0], [0], [1], [0, 0, 1, 1], [], []>} : vector<32x32xbf16>, vector<32x32xbf16>, vector<32x32xf32> -> vector<32x32xf32>
    %83 = arith.addf %74, %82 : vector<32x32xf32>
    %c3_68 = arith.constant 3 : index
    %c0_69 = arith.constant 0 : index
    %c0_70 = arith.constant 0 : index
    %84 = vector.load %arg7[%c3_68, %c0_69, %c0_70] : memref<12x32x32xbf16, #tpu.memory_space<vmem>>, vector<1x32x32xbf16>
    %85 = vector.shape_cast %84 : vector<1x32x32xbf16> to vector<32x32xbf16>
    %cst_71 = arith.constant dense<0.000000e+00> : vector<32x32xf32>
    %86 = tpu.matmul %61, %85, %cst_71 {dimension_numbers = #tpu.dot_dimension_numbers<[1], [0], [0], [1], [0, 0, 1, 1], [], []>} : vector<32x32xbf16>, vector<32x32xbf16>, vector<32x32xf32> -> vector<32x32xf32>
    %87 = arith.addf %79, %86 : vector<32x32xf32>
    %88 = math.tanh %83 : vector<32x32xf32>
    %cst_72 = arith.constant 5.000000e-01 : f32
    %89 = vector.broadcast %cst_72 : f32 to vector<32x32xf32>
    %90 = arith.mulf %89, %87 : vector<32x32xf32>
    %91 = math.tanh %90 : vector<32x32xf32>
    %cst_73 = arith.constant 1.000000e+00 : f32
    %92 = vector.broadcast %cst_73 : f32 to vector<32x32xf32>
    %93 = arith.addf %92, %91 : vector<32x32xf32>
    %cst_74 = arith.constant 5.000000e-01 : f32
    %94 = vector.broadcast %cst_74 : f32 to vector<32x32xf32>
    %95 = arith.mulf %94, %93 : vector<32x32xf32>
    %96 = arith.mulf %88, %95 : vector<32x32xf32>
    %97 = arith.truncf %96 : vector<32x32xf32> to vector<32x32xbf16>
    %c1_75 = arith.constant 1 : index
    %c0_76 = arith.constant 0 : index
    %c0_77 = arith.constant 0 : index
    %98 = vector.load %arg9[%c1_75, %c0_76, %c0_77] : memref<6x32x32xbf16, #tpu.memory_space<vmem>>, vector<1x32x32xbf16>
    %99 = vector.shape_cast %98 : vector<1x32x32xbf16> to vector<32x32xbf16>
    %cst_78 = arith.constant dense<0.000000e+00> : vector<32x32xf32>
    %100 = tpu.matmul %97, %99, %cst_78 {dimension_numbers = #tpu.dot_dimension_numbers<[1], [0], [0], [1], [0, 0, 1, 1], [], []>} : vector<32x32xbf16>, vector<32x32xbf16>, vector<32x32xf32> -> vector<32x32xf32>
    %101 = arith.addf %52, %100 : vector<32x32xf32>
    %c1_79 = arith.constant 1 : index
    %c0_80 = arith.constant 0 : index
    %c0_81 = arith.constant 0 : index
    %102 = vector.load %arg10[%c1_79, %c0_80, %c0_81] : memref<6x1x32xf32, #tpu.memory_space<vmem>>, vector<1x1x32xf32>
    %103 = vector.shape_cast %102 : vector<1x1x32xf32> to vector<1x32xf32>
    %104 = vector.broadcast %103 : vector<1x32xf32> to vector<32x32xf32>
    %105 = arith.addf %101, %104 : vector<32x32xf32>
    %c1_82 = arith.constant 1 : index
    %c0_83 = arith.constant 0 : index
    %c0_84 = arith.constant 0 : index
    %106 = vector.load %arg11[%c1_82, %c0_83, %c0_84] : memref<6x32x32xbf16, #tpu.memory_space<vmem>>, vector<1x32x32xbf16>
    %107 = vector.shape_cast %106 : vector<1x32x32xbf16> to vector<32x32xbf16>
    %cst_85 = arith.constant dense<0.000000e+00> : vector<32x32xf32>
    %108 = tpu.matmul %97, %107, %cst_85 {dimension_numbers = #tpu.dot_dimension_numbers<[1], [0], [0], [1], [0, 0, 1, 1], [], []>} : vector<32x32xbf16>, vector<32x32xbf16>, vector<32x32xf32> -> vector<32x32xf32>
    %109 = arith.addf %60, %108 : vector<32x32xf32>
    %c1_86 = arith.constant 1 : index
    %c0_87 = arith.constant 0 : index
    %c0_88 = arith.constant 0 : index
    %110 = vector.load %arg12[%c1_86, %c0_87, %c0_88] : memref<6x1x32xf32, #tpu.memory_space<vmem>>, vector<1x1x32xf32>
    %111 = vector.shape_cast %110 : vector<1x1x32xf32> to vector<1x32xf32>
    %112 = vector.broadcast %111 : vector<1x32xf32> to vector<32x32xf32>
    %113 = arith.addf %109, %112 : vector<32x32xf32>
    %114 = arith.truncf %105 : vector<32x32xf32> to vector<32x32xbf16>
    %c2_89 = arith.constant 2 : index
    %c0_90 = arith.constant 0 : index
    %c0_91 = arith.constant 0 : index
    %115 = vector.load %arg2[%c2_89, %c0_90, %c0_91] : memref<3x32x32xbf16, #tpu.memory_space<vmem>>, vector<1x32x32xbf16>
    %116 = vector.shape_cast %115 : vector<1x32x32xbf16> to vector<32x32xbf16>
    %cst_92 = arith.constant dense<0.000000e+00> : vector<32x32xf32>
    %117 = tpu.matmul %116, %114, %cst_92 {dimension_numbers = #tpu.dot_dimension_numbers<[1], [0], [0], [1], [0, 0, 1, 1], [], []>} : vector<32x32xbf16>, vector<32x32xbf16>, vector<32x32xf32> -> vector<32x32xf32>
    %118 = arith.truncf %117 : vector<32x32xf32> to vector<32x32xbf16>
    %c2_93 = arith.constant 2 : index
    %c0_94 = arith.constant 0 : index
    %c0_95 = arith.constant 0 : index
    %119 = vector.load %arg6[%c2_93, %c0_94, %c0_95] : memref<6x1x32xf32, #tpu.memory_space<vmem>>, vector<1x1x32xf32>
    %120 = vector.shape_cast %119 : vector<1x1x32xf32> to vector<1x32xf32>
    %c2_96 = arith.constant 2 : index
    %c0_97 = arith.constant 0 : index
    %c0_98 = arith.constant 0 : index
    %121 = vector.load %arg8[%c2_96, %c0_97, %c0_98] : memref<6x1x32xf32, #tpu.memory_space<vmem>>, vector<1x1x32xf32>
    %122 = vector.shape_cast %121 : vector<1x1x32xf32> to vector<1x32xf32>
    %c4 = arith.constant 4 : index
    %c0_99 = arith.constant 0 : index
    %c0_100 = arith.constant 0 : index
    %123 = vector.load %arg5[%c4, %c0_99, %c0_100] : memref<12x32x32xbf16, #tpu.memory_space<vmem>>, vector<1x32x32xbf16>
    %124 = vector.shape_cast %123 : vector<1x32x32xbf16> to vector<32x32xbf16>
    %cst_101 = arith.constant dense<0.000000e+00> : vector<32x32xf32>
    %125 = tpu.matmul %118, %124, %cst_101 {dimension_numbers = #tpu.dot_dimension_numbers<[1], [0], [0], [1], [0, 0, 1, 1], [], []>} : vector<32x32xbf16>, vector<32x32xbf16>, vector<32x32xf32> -> vector<32x32xf32>
    %126 = vector.broadcast %120 : vector<1x32xf32> to vector<32x32xf32>
    %127 = arith.addf %126, %125 : vector<32x32xf32>
    %c4_102 = arith.constant 4 : index
    %c0_103 = arith.constant 0 : index
    %c0_104 = arith.constant 0 : index
    %128 = vector.load %arg7[%c4_102, %c0_103, %c0_104] : memref<12x32x32xbf16, #tpu.memory_space<vmem>>, vector<1x32x32xbf16>
    %129 = vector.shape_cast %128 : vector<1x32x32xbf16> to vector<32x32xbf16>
    %cst_105 = arith.constant dense<0.000000e+00> : vector<32x32xf32>
    %130 = tpu.matmul %118, %129, %cst_105 {dimension_numbers = #tpu.dot_dimension_numbers<[1], [0], [0], [1], [0, 0, 1, 1], [], []>} : vector<32x32xbf16>, vector<32x32xbf16>, vector<32x32xf32> -> vector<32x32xf32>
    %131 = vector.broadcast %122 : vector<1x32xf32> to vector<32x32xf32>
    %132 = arith.addf %131, %130 : vector<32x32xf32>
    %c5 = arith.constant 5 : index
    %c0_106 = arith.constant 0 : index
    %c0_107 = arith.constant 0 : index
    %133 = vector.load %arg5[%c5, %c0_106, %c0_107] : memref<12x32x32xbf16, #tpu.memory_space<vmem>>, vector<1x32x32xbf16>
    %134 = vector.shape_cast %133 : vector<1x32x32xbf16> to vector<32x32xbf16>
    %cst_108 = arith.constant dense<0.000000e+00> : vector<32x32xf32>
    %135 = tpu.matmul %114, %134, %cst_108 {dimension_numbers = #tpu.dot_dimension_numbers<[1], [0], [0], [1], [0, 0, 1, 1], [], []>} : vector<32x32xbf16>, vector<32x32xbf16>, vector<32x32xf32> -> vector<32x32xf32>
    %136 = arith.addf %127, %135 : vector<32x32xf32>
    %c5_109 = arith.constant 5 : index
    %c0_110 = arith.constant 0 : index
    %c0_111 = arith.constant 0 : index
    %137 = vector.load %arg7[%c5_109, %c0_110, %c0_111] : memref<12x32x32xbf16, #tpu.memory_space<vmem>>, vector<1x32x32xbf16>
    %138 = vector.shape_cast %137 : vector<1x32x32xbf16> to vector<32x32xbf16>
    %cst_112 = arith.constant dense<0.000000e+00> : vector<32x32xf32>
    %139 = tpu.matmul %114, %138, %cst_112 {dimension_numbers = #tpu.dot_dimension_numbers<[1], [0], [0], [1], [0, 0, 1, 1], [], []>} : vector<32x32xbf16>, vector<32x32xbf16>, vector<32x32xf32> -> vector<32x32xf32>
    %140 = arith.addf %132, %139 : vector<32x32xf32>
    %141 = math.tanh %136 : vector<32x32xf32>
    %cst_113 = arith.constant 5.000000e-01 : f32
    %142 = vector.broadcast %cst_113 : f32 to vector<32x32xf32>
    %143 = arith.mulf %142, %140 : vector<32x32xf32>
    %144 = math.tanh %143 : vector<32x32xf32>
    %cst_114 = arith.constant 1.000000e+00 : f32
    %145 = vector.broadcast %cst_114 : f32 to vector<32x32xf32>
    %146 = arith.addf %145, %144 : vector<32x32xf32>
    %cst_115 = arith.constant 5.000000e-01 : f32
    %147 = vector.broadcast %cst_115 : f32 to vector<32x32xf32>
    %148 = arith.mulf %147, %146 : vector<32x32xf32>
    %149 = arith.mulf %141, %148 : vector<32x32xf32>
    %150 = arith.truncf %149 : vector<32x32xf32> to vector<32x32xbf16>
    %c2_116 = arith.constant 2 : index
    %c0_117 = arith.constant 0 : index
    %c0_118 = arith.constant 0 : index
    %151 = vector.load %arg9[%c2_116, %c0_117, %c0_118] : memref<6x32x32xbf16, #tpu.memory_space<vmem>>, vector<1x32x32xbf16>
    %152 = vector.shape_cast %151 : vector<1x32x32xbf16> to vector<32x32xbf16>
    %cst_119 = arith.constant dense<0.000000e+00> : vector<32x32xf32>
    %153 = tpu.matmul %150, %152, %cst_119 {dimension_numbers = #tpu.dot_dimension_numbers<[1], [0], [0], [1], [0, 0, 1, 1], [], []>} : vector<32x32xbf16>, vector<32x32xbf16>, vector<32x32xf32> -> vector<32x32xf32>
    %154 = arith.addf %105, %153 : vector<32x32xf32>
    %c2_120 = arith.constant 2 : index
    %c0_121 = arith.constant 0 : index
    %c0_122 = arith.constant 0 : index
    %155 = vector.load %arg10[%c2_120, %c0_121, %c0_122] : memref<6x1x32xf32, #tpu.memory_space<vmem>>, vector<1x1x32xf32>
    %156 = vector.shape_cast %155 : vector<1x1x32xf32> to vector<1x32xf32>
    %157 = vector.broadcast %156 : vector<1x32xf32> to vector<32x32xf32>
    %158 = arith.addf %154, %157 : vector<32x32xf32>
    %c2_123 = arith.constant 2 : index
    %c0_124 = arith.constant 0 : index
    %c0_125 = arith.constant 0 : index
    %159 = vector.load %arg11[%c2_123, %c0_124, %c0_125] : memref<6x32x32xbf16, #tpu.memory_space<vmem>>, vector<1x32x32xbf16>
    %160 = vector.shape_cast %159 : vector<1x32x32xbf16> to vector<32x32xbf16>
    %cst_126 = arith.constant dense<0.000000e+00> : vector<32x32xf32>
    %161 = tpu.matmul %150, %160, %cst_126 {dimension_numbers = #tpu.dot_dimension_numbers<[1], [0], [0], [1], [0, 0, 1, 1], [], []>} : vector<32x32xbf16>, vector<32x32xbf16>, vector<32x32xf32> -> vector<32x32xf32>
    %162 = arith.addf %113, %161 : vector<32x32xf32>
    %c2_127 = arith.constant 2 : index
    %c0_128 = arith.constant 0 : index
    %c0_129 = arith.constant 0 : index
    %163 = vector.load %arg12[%c2_127, %c0_128, %c0_129] : memref<6x1x32xf32, #tpu.memory_space<vmem>>, vector<1x1x32xf32>
    %164 = vector.shape_cast %163 : vector<1x1x32xf32> to vector<1x32xf32>
    %165 = vector.broadcast %164 : vector<1x32xf32> to vector<32x32xf32>
    %166 = arith.addf %162, %165 : vector<32x32xf32>
    %167 = arith.truncf %158 : vector<32x32xf32> to vector<32x32xbf16>
    %c0_130 = arith.constant 0 : index
    %c0_131 = arith.constant 0 : index
    %c0_132 = arith.constant 0 : index
    %168 = vector.load %arg2[%c0_130, %c0_131, %c0_132] : memref<3x32x32xbf16, #tpu.memory_space<vmem>>, vector<1x32x32xbf16>
    %169 = vector.shape_cast %168 : vector<1x32x32xbf16> to vector<32x32xbf16>
    %cst_133 = arith.constant dense<0.000000e+00> : vector<32x32xf32>
    %170 = tpu.matmul %169, %167, %cst_133 {dimension_numbers = #tpu.dot_dimension_numbers<[1], [0], [0], [1], [0, 0, 1, 1], [], []>} : vector<32x32xbf16>, vector<32x32xbf16>, vector<32x32xf32> -> vector<32x32xf32>
    %171 = arith.truncf %170 : vector<32x32xf32> to vector<32x32xbf16>
    %c3_134 = arith.constant 3 : index
    %c0_135 = arith.constant 0 : index
    %c0_136 = arith.constant 0 : index
    %172 = vector.load %arg6[%c3_134, %c0_135, %c0_136] : memref<6x1x32xf32, #tpu.memory_space<vmem>>, vector<1x1x32xf32>
    %173 = vector.shape_cast %172 : vector<1x1x32xf32> to vector<1x32xf32>
    %c3_137 = arith.constant 3 : index
    %c0_138 = arith.constant 0 : index
    %c0_139 = arith.constant 0 : index
    %174 = vector.load %arg8[%c3_137, %c0_138, %c0_139] : memref<6x1x32xf32, #tpu.memory_space<vmem>>, vector<1x1x32xf32>
    %175 = vector.shape_cast %174 : vector<1x1x32xf32> to vector<1x32xf32>
    %c6 = arith.constant 6 : index
    %c0_140 = arith.constant 0 : index
    %c0_141 = arith.constant 0 : index
    %176 = vector.load %arg5[%c6, %c0_140, %c0_141] : memref<12x32x32xbf16, #tpu.memory_space<vmem>>, vector<1x32x32xbf16>
    %177 = vector.shape_cast %176 : vector<1x32x32xbf16> to vector<32x32xbf16>
    %cst_142 = arith.constant dense<0.000000e+00> : vector<32x32xf32>
    %178 = tpu.matmul %171, %177, %cst_142 {dimension_numbers = #tpu.dot_dimension_numbers<[1], [0], [0], [1], [0, 0, 1, 1], [], []>} : vector<32x32xbf16>, vector<32x32xbf16>, vector<32x32xf32> -> vector<32x32xf32>
    %179 = vector.broadcast %173 : vector<1x32xf32> to vector<32x32xf32>
    %180 = arith.addf %179, %178 : vector<32x32xf32>
    %c6_143 = arith.constant 6 : index
    %c0_144 = arith.constant 0 : index
    %c0_145 = arith.constant 0 : index
    %181 = vector.load %arg7[%c6_143, %c0_144, %c0_145] : memref<12x32x32xbf16, #tpu.memory_space<vmem>>, vector<1x32x32xbf16>
    %182 = vector.shape_cast %181 : vector<1x32x32xbf16> to vector<32x32xbf16>
    %cst_146 = arith.constant dense<0.000000e+00> : vector<32x32xf32>
    %183 = tpu.matmul %171, %182, %cst_146 {dimension_numbers = #tpu.dot_dimension_numbers<[1], [0], [0], [1], [0, 0, 1, 1], [], []>} : vector<32x32xbf16>, vector<32x32xbf16>, vector<32x32xf32> -> vector<32x32xf32>
    %184 = vector.broadcast %175 : vector<1x32xf32> to vector<32x32xf32>
    %185 = arith.addf %184, %183 : vector<32x32xf32>
    %c7 = arith.constant 7 : index
    %c0_147 = arith.constant 0 : index
    %c0_148 = arith.constant 0 : index
    %186 = vector.load %arg5[%c7, %c0_147, %c0_148] : memref<12x32x32xbf16, #tpu.memory_space<vmem>>, vector<1x32x32xbf16>
    %187 = vector.shape_cast %186 : vector<1x32x32xbf16> to vector<32x32xbf16>
    %cst_149 = arith.constant dense<0.000000e+00> : vector<32x32xf32>
    %188 = tpu.matmul %167, %187, %cst_149 {dimension_numbers = #tpu.dot_dimension_numbers<[1], [0], [0], [1], [0, 0, 1, 1], [], []>} : vector<32x32xbf16>, vector<32x32xbf16>, vector<32x32xf32> -> vector<32x32xf32>
    %189 = arith.addf %180, %188 : vector<32x32xf32>
    %c7_150 = arith.constant 7 : index
    %c0_151 = arith.constant 0 : index
    %c0_152 = arith.constant 0 : index
    %190 = vector.load %arg7[%c7_150, %c0_151, %c0_152] : memref<12x32x32xbf16, #tpu.memory_space<vmem>>, vector<1x32x32xbf16>
    %191 = vector.shape_cast %190 : vector<1x32x32xbf16> to vector<32x32xbf16>
    %cst_153 = arith.constant dense<0.000000e+00> : vector<32x32xf32>
    %192 = tpu.matmul %167, %191, %cst_153 {dimension_numbers = #tpu.dot_dimension_numbers<[1], [0], [0], [1], [0, 0, 1, 1], [], []>} : vector<32x32xbf16>, vector<32x32xbf16>, vector<32x32xf32> -> vector<32x32xf32>
    %193 = arith.addf %185, %192 : vector<32x32xf32>
    %194 = math.tanh %189 : vector<32x32xf32>
    %cst_154 = arith.constant 5.000000e-01 : f32
    %195 = vector.broadcast %cst_154 : f32 to vector<32x32xf32>
    %196 = arith.mulf %195, %193 : vector<32x32xf32>
    %197 = math.tanh %196 : vector<32x32xf32>
    %cst_155 = arith.constant 1.000000e+00 : f32
    %198 = vector.broadcast %cst_155 : f32 to vector<32x32xf32>
    %199 = arith.addf %198, %197 : vector<32x32xf32>
    %cst_156 = arith.constant 5.000000e-01 : f32
    %200 = vector.broadcast %cst_156 : f32 to vector<32x32xf32>
    %201 = arith.mulf %200, %199 : vector<32x32xf32>
    %202 = arith.mulf %194, %201 : vector<32x32xf32>
    %203 = arith.truncf %202 : vector<32x32xf32> to vector<32x32xbf16>
    %c3_157 = arith.constant 3 : index
    %c0_158 = arith.constant 0 : index
    %c0_159 = arith.constant 0 : index
    %204 = vector.load %arg9[%c3_157, %c0_158, %c0_159] : memref<6x32x32xbf16, #tpu.memory_space<vmem>>, vector<1x32x32xbf16>
    %205 = vector.shape_cast %204 : vector<1x32x32xbf16> to vector<32x32xbf16>
    %cst_160 = arith.constant dense<0.000000e+00> : vector<32x32xf32>
    %206 = tpu.matmul %203, %205, %cst_160 {dimension_numbers = #tpu.dot_dimension_numbers<[1], [0], [0], [1], [0, 0, 1, 1], [], []>} : vector<32x32xbf16>, vector<32x32xbf16>, vector<32x32xf32> -> vector<32x32xf32>
    %207 = arith.addf %158, %206 : vector<32x32xf32>
    %c3_161 = arith.constant 3 : index
    %c0_162 = arith.constant 0 : index
    %c0_163 = arith.constant 0 : index
    %208 = vector.load %arg10[%c3_161, %c0_162, %c0_163] : memref<6x1x32xf32, #tpu.memory_space<vmem>>, vector<1x1x32xf32>
    %209 = vector.shape_cast %208 : vector<1x1x32xf32> to vector<1x32xf32>
    %210 = vector.broadcast %209 : vector<1x32xf32> to vector<32x32xf32>
    %211 = arith.addf %207, %210 : vector<32x32xf32>
    %c3_164 = arith.constant 3 : index
    %c0_165 = arith.constant 0 : index
    %c0_166 = arith.constant 0 : index
    %212 = vector.load %arg11[%c3_164, %c0_165, %c0_166] : memref<6x32x32xbf16, #tpu.memory_space<vmem>>, vector<1x32x32xbf16>
    %213 = vector.shape_cast %212 : vector<1x32x32xbf16> to vector<32x32xbf16>
    %cst_167 = arith.constant dense<0.000000e+00> : vector<32x32xf32>
    %214 = tpu.matmul %203, %213, %cst_167 {dimension_numbers = #tpu.dot_dimension_numbers<[1], [0], [0], [1], [0, 0, 1, 1], [], []>} : vector<32x32xbf16>, vector<32x32xbf16>, vector<32x32xf32> -> vector<32x32xf32>
    %215 = arith.addf %166, %214 : vector<32x32xf32>
    %c3_168 = arith.constant 3 : index
    %c0_169 = arith.constant 0 : index
    %c0_170 = arith.constant 0 : index
    %216 = vector.load %arg12[%c3_168, %c0_169, %c0_170] : memref<6x1x32xf32, #tpu.memory_space<vmem>>, vector<1x1x32xf32>
    %217 = vector.shape_cast %216 : vector<1x1x32xf32> to vector<1x32xf32>
    %218 = vector.broadcast %217 : vector<1x32xf32> to vector<32x32xf32>
    %219 = arith.addf %215, %218 : vector<32x32xf32>
    %220 = arith.truncf %211 : vector<32x32xf32> to vector<32x32xbf16>
    %c1_171 = arith.constant 1 : index
    %c0_172 = arith.constant 0 : index
    %c0_173 = arith.constant 0 : index
    %221 = vector.load %arg2[%c1_171, %c0_172, %c0_173] : memref<3x32x32xbf16, #tpu.memory_space<vmem>>, vector<1x32x32xbf16>
    %222 = vector.shape_cast %221 : vector<1x32x32xbf16> to vector<32x32xbf16>
    %cst_174 = arith.constant dense<0.000000e+00> : vector<32x32xf32>
    %223 = tpu.matmul %222, %220, %cst_174 {dimension_numbers = #tpu.dot_dimension_numbers<[1], [0], [0], [1], [0, 0, 1, 1], [], []>} : vector<32x32xbf16>, vector<32x32xbf16>, vector<32x32xf32> -> vector<32x32xf32>
    %224 = arith.truncf %223 : vector<32x32xf32> to vector<32x32xbf16>
    %c4_175 = arith.constant 4 : index
    %c0_176 = arith.constant 0 : index
    %c0_177 = arith.constant 0 : index
    %225 = vector.load %arg6[%c4_175, %c0_176, %c0_177] : memref<6x1x32xf32, #tpu.memory_space<vmem>>, vector<1x1x32xf32>
    %226 = vector.shape_cast %225 : vector<1x1x32xf32> to vector<1x32xf32>
    %c4_178 = arith.constant 4 : index
    %c0_179 = arith.constant 0 : index
    %c0_180 = arith.constant 0 : index
    %227 = vector.load %arg8[%c4_178, %c0_179, %c0_180] : memref<6x1x32xf32, #tpu.memory_space<vmem>>, vector<1x1x32xf32>
    %228 = vector.shape_cast %227 : vector<1x1x32xf32> to vector<1x32xf32>
    %c8 = arith.constant 8 : index
    %c0_181 = arith.constant 0 : index
    %c0_182 = arith.constant 0 : index
    %229 = vector.load %arg5[%c8, %c0_181, %c0_182] : memref<12x32x32xbf16, #tpu.memory_space<vmem>>, vector<1x32x32xbf16>
    %230 = vector.shape_cast %229 : vector<1x32x32xbf16> to vector<32x32xbf16>
    %cst_183 = arith.constant dense<0.000000e+00> : vector<32x32xf32>
    %231 = tpu.matmul %224, %230, %cst_183 {dimension_numbers = #tpu.dot_dimension_numbers<[1], [0], [0], [1], [0, 0, 1, 1], [], []>} : vector<32x32xbf16>, vector<32x32xbf16>, vector<32x32xf32> -> vector<32x32xf32>
    %232 = vector.broadcast %226 : vector<1x32xf32> to vector<32x32xf32>
    %233 = arith.addf %232, %231 : vector<32x32xf32>
    %c8_184 = arith.constant 8 : index
    %c0_185 = arith.constant 0 : index
    %c0_186 = arith.constant 0 : index
    %234 = vector.load %arg7[%c8_184, %c0_185, %c0_186] : memref<12x32x32xbf16, #tpu.memory_space<vmem>>, vector<1x32x32xbf16>
    %235 = vector.shape_cast %234 : vector<1x32x32xbf16> to vector<32x32xbf16>
    %cst_187 = arith.constant dense<0.000000e+00> : vector<32x32xf32>
    %236 = tpu.matmul %224, %235, %cst_187 {dimension_numbers = #tpu.dot_dimension_numbers<[1], [0], [0], [1], [0, 0, 1, 1], [], []>} : vector<32x32xbf16>, vector<32x32xbf16>, vector<32x32xf32> -> vector<32x32xf32>
    %237 = vector.broadcast %228 : vector<1x32xf32> to vector<32x32xf32>
    %238 = arith.addf %237, %236 : vector<32x32xf32>
    %c9 = arith.constant 9 : index
    %c0_188 = arith.constant 0 : index
    %c0_189 = arith.constant 0 : index
    %239 = vector.load %arg5[%c9, %c0_188, %c0_189] : memref<12x32x32xbf16, #tpu.memory_space<vmem>>, vector<1x32x32xbf16>
    %240 = vector.shape_cast %239 : vector<1x32x32xbf16> to vector<32x32xbf16>
    %cst_190 = arith.constant dense<0.000000e+00> : vector<32x32xf32>
    %241 = tpu.matmul %220, %240, %cst_190 {dimension_numbers = #tpu.dot_dimension_numbers<[1], [0], [0], [1], [0, 0, 1, 1], [], []>} : vector<32x32xbf16>, vector<32x32xbf16>, vector<32x32xf32> -> vector<32x32xf32>
    %242 = arith.addf %233, %241 : vector<32x32xf32>
    %c9_191 = arith.constant 9 : index
    %c0_192 = arith.constant 0 : index
    %c0_193 = arith.constant 0 : index
    %243 = vector.load %arg7[%c9_191, %c0_192, %c0_193] : memref<12x32x32xbf16, #tpu.memory_space<vmem>>, vector<1x32x32xbf16>
    %244 = vector.shape_cast %243 : vector<1x32x32xbf16> to vector<32x32xbf16>
    %cst_194 = arith.constant dense<0.000000e+00> : vector<32x32xf32>
    %245 = tpu.matmul %220, %244, %cst_194 {dimension_numbers = #tpu.dot_dimension_numbers<[1], [0], [0], [1], [0, 0, 1, 1], [], []>} : vector<32x32xbf16>, vector<32x32xbf16>, vector<32x32xf32> -> vector<32x32xf32>
    %246 = arith.addf %238, %245 : vector<32x32xf32>
    %247 = math.tanh %242 : vector<32x32xf32>
    %cst_195 = arith.constant 5.000000e-01 : f32
    %248 = vector.broadcast %cst_195 : f32 to vector<32x32xf32>
    %249 = arith.mulf %248, %246 : vector<32x32xf32>
    %250 = math.tanh %249 : vector<32x32xf32>
    %cst_196 = arith.constant 1.000000e+00 : f32
    %251 = vector.broadcast %cst_196 : f32 to vector<32x32xf32>
    %252 = arith.addf %251, %250 : vector<32x32xf32>
    %cst_197 = arith.constant 5.000000e-01 : f32
    %253 = vector.broadcast %cst_197 : f32 to vector<32x32xf32>
    %254 = arith.mulf %253, %252 : vector<32x32xf32>
    %255 = arith.mulf %247, %254 : vector<32x32xf32>
    %256 = arith.truncf %255 : vector<32x32xf32> to vector<32x32xbf16>
    %c4_198 = arith.constant 4 : index
    %c0_199 = arith.constant 0 : index
    %c0_200 = arith.constant 0 : index
    %257 = vector.load %arg9[%c4_198, %c0_199, %c0_200] : memref<6x32x32xbf16, #tpu.memory_space<vmem>>, vector<1x32x32xbf16>
    %258 = vector.shape_cast %257 : vector<1x32x32xbf16> to vector<32x32xbf16>
    %cst_201 = arith.constant dense<0.000000e+00> : vector<32x32xf32>
    %259 = tpu.matmul %256, %258, %cst_201 {dimension_numbers = #tpu.dot_dimension_numbers<[1], [0], [0], [1], [0, 0, 1, 1], [], []>} : vector<32x32xbf16>, vector<32x32xbf16>, vector<32x32xf32> -> vector<32x32xf32>
    %260 = arith.addf %211, %259 : vector<32x32xf32>
    %c4_202 = arith.constant 4 : index
    %c0_203 = arith.constant 0 : index
    %c0_204 = arith.constant 0 : index
    %261 = vector.load %arg10[%c4_202, %c0_203, %c0_204] : memref<6x1x32xf32, #tpu.memory_space<vmem>>, vector<1x1x32xf32>
    %262 = vector.shape_cast %261 : vector<1x1x32xf32> to vector<1x32xf32>
    %263 = vector.broadcast %262 : vector<1x32xf32> to vector<32x32xf32>
    %264 = arith.addf %260, %263 : vector<32x32xf32>
    %c4_205 = arith.constant 4 : index
    %c0_206 = arith.constant 0 : index
    %c0_207 = arith.constant 0 : index
    %265 = vector.load %arg11[%c4_205, %c0_206, %c0_207] : memref<6x32x32xbf16, #tpu.memory_space<vmem>>, vector<1x32x32xbf16>
    %266 = vector.shape_cast %265 : vector<1x32x32xbf16> to vector<32x32xbf16>
    %cst_208 = arith.constant dense<0.000000e+00> : vector<32x32xf32>
    %267 = tpu.matmul %256, %266, %cst_208 {dimension_numbers = #tpu.dot_dimension_numbers<[1], [0], [0], [1], [0, 0, 1, 1], [], []>} : vector<32x32xbf16>, vector<32x32xbf16>, vector<32x32xf32> -> vector<32x32xf32>
    %268 = arith.addf %219, %267 : vector<32x32xf32>
    %c4_209 = arith.constant 4 : index
    %c0_210 = arith.constant 0 : index
    %c0_211 = arith.constant 0 : index
    %269 = vector.load %arg12[%c4_209, %c0_210, %c0_211] : memref<6x1x32xf32, #tpu.memory_space<vmem>>, vector<1x1x32xf32>
    %270 = vector.shape_cast %269 : vector<1x1x32xf32> to vector<1x32xf32>
    %271 = vector.broadcast %270 : vector<1x32xf32> to vector<32x32xf32>
    %272 = arith.addf %268, %271 : vector<32x32xf32>
    %273 = arith.truncf %264 : vector<32x32xf32> to vector<32x32xbf16>
    %c2_212 = arith.constant 2 : index
    %c0_213 = arith.constant 0 : index
    %c0_214 = arith.constant 0 : index
    %274 = vector.load %arg2[%c2_212, %c0_213, %c0_214] : memref<3x32x32xbf16, #tpu.memory_space<vmem>>, vector<1x32x32xbf16>
    %275 = vector.shape_cast %274 : vector<1x32x32xbf16> to vector<32x32xbf16>
    %cst_215 = arith.constant dense<0.000000e+00> : vector<32x32xf32>
    %276 = tpu.matmul %275, %273, %cst_215 {dimension_numbers = #tpu.dot_dimension_numbers<[1], [0], [0], [1], [0, 0, 1, 1], [], []>} : vector<32x32xbf16>, vector<32x32xbf16>, vector<32x32xf32> -> vector<32x32xf32>
    %277 = arith.truncf %276 : vector<32x32xf32> to vector<32x32xbf16>
    %c5_216 = arith.constant 5 : index
    %c0_217 = arith.constant 0 : index
    %c0_218 = arith.constant 0 : index
    %278 = vector.load %arg6[%c5_216, %c0_217, %c0_218] : memref<6x1x32xf32, #tpu.memory_space<vmem>>, vector<1x1x32xf32>
    %279 = vector.shape_cast %278 : vector<1x1x32xf32> to vector<1x32xf32>
    %c5_219 = arith.constant 5 : index
    %c0_220 = arith.constant 0 : index
    %c0_221 = arith.constant 0 : index
    %280 = vector.load %arg8[%c5_219, %c0_220, %c0_221] : memref<6x1x32xf32, #tpu.memory_space<vmem>>, vector<1x1x32xf32>
    %281 = vector.shape_cast %280 : vector<1x1x32xf32> to vector<1x32xf32>
    %c10 = arith.constant 10 : index
    %c0_222 = arith.constant 0 : index
    %c0_223 = arith.constant 0 : index
    %282 = vector.load %arg5[%c10, %c0_222, %c0_223] : memref<12x32x32xbf16, #tpu.memory_space<vmem>>, vector<1x32x32xbf16>
    %283 = vector.shape_cast %282 : vector<1x32x32xbf16> to vector<32x32xbf16>
    %cst_224 = arith.constant dense<0.000000e+00> : vector<32x32xf32>
    %284 = tpu.matmul %277, %283, %cst_224 {dimension_numbers = #tpu.dot_dimension_numbers<[1], [0], [0], [1], [0, 0, 1, 1], [], []>} : vector<32x32xbf16>, vector<32x32xbf16>, vector<32x32xf32> -> vector<32x32xf32>
    %285 = vector.broadcast %279 : vector<1x32xf32> to vector<32x32xf32>
    %286 = arith.addf %285, %284 : vector<32x32xf32>
    %c10_225 = arith.constant 10 : index
    %c0_226 = arith.constant 0 : index
    %c0_227 = arith.constant 0 : index
    %287 = vector.load %arg7[%c10_225, %c0_226, %c0_227] : memref<12x32x32xbf16, #tpu.memory_space<vmem>>, vector<1x32x32xbf16>
    %288 = vector.shape_cast %287 : vector<1x32x32xbf16> to vector<32x32xbf16>
    %cst_228 = arith.constant dense<0.000000e+00> : vector<32x32xf32>
    %289 = tpu.matmul %277, %288, %cst_228 {dimension_numbers = #tpu.dot_dimension_numbers<[1], [0], [0], [1], [0, 0, 1, 1], [], []>} : vector<32x32xbf16>, vector<32x32xbf16>, vector<32x32xf32> -> vector<32x32xf32>
    %290 = vector.broadcast %281 : vector<1x32xf32> to vector<32x32xf32>
    %291 = arith.addf %290, %289 : vector<32x32xf32>
    %c11 = arith.constant 11 : index
    %c0_229 = arith.constant 0 : index
    %c0_230 = arith.constant 0 : index
    %292 = vector.load %arg5[%c11, %c0_229, %c0_230] : memref<12x32x32xbf16, #tpu.memory_space<vmem>>, vector<1x32x32xbf16>
    %293 = vector.shape_cast %292 : vector<1x32x32xbf16> to vector<32x32xbf16>
    %cst_231 = arith.constant dense<0.000000e+00> : vector<32x32xf32>
    %294 = tpu.matmul %273, %293, %cst_231 {dimension_numbers = #tpu.dot_dimension_numbers<[1], [0], [0], [1], [0, 0, 1, 1], [], []>} : vector<32x32xbf16>, vector<32x32xbf16>, vector<32x32xf32> -> vector<32x32xf32>
    %295 = arith.addf %286, %294 : vector<32x32xf32>
    %c11_232 = arith.constant 11 : index
    %c0_233 = arith.constant 0 : index
    %c0_234 = arith.constant 0 : index
    %296 = vector.load %arg7[%c11_232, %c0_233, %c0_234] : memref<12x32x32xbf16, #tpu.memory_space<vmem>>, vector<1x32x32xbf16>
    %297 = vector.shape_cast %296 : vector<1x32x32xbf16> to vector<32x32xbf16>
    %cst_235 = arith.constant dense<0.000000e+00> : vector<32x32xf32>
    %298 = tpu.matmul %273, %297, %cst_235 {dimension_numbers = #tpu.dot_dimension_numbers<[1], [0], [0], [1], [0, 0, 1, 1], [], []>} : vector<32x32xbf16>, vector<32x32xbf16>, vector<32x32xf32> -> vector<32x32xf32>
    %299 = arith.addf %291, %298 : vector<32x32xf32>
    %300 = math.tanh %295 : vector<32x32xf32>
    %cst_236 = arith.constant 5.000000e-01 : f32
    %301 = vector.broadcast %cst_236 : f32 to vector<32x32xf32>
    %302 = arith.mulf %301, %299 : vector<32x32xf32>
    %303 = math.tanh %302 : vector<32x32xf32>
    %cst_237 = arith.constant 1.000000e+00 : f32
    %304 = vector.broadcast %cst_237 : f32 to vector<32x32xf32>
    %305 = arith.addf %304, %303 : vector<32x32xf32>
    %cst_238 = arith.constant 5.000000e-01 : f32
    %306 = vector.broadcast %cst_238 : f32 to vector<32x32xf32>
    %307 = arith.mulf %306, %305 : vector<32x32xf32>
    %308 = arith.mulf %300, %307 : vector<32x32xf32>
    %309 = arith.truncf %308 : vector<32x32xf32> to vector<32x32xbf16>
    %c5_239 = arith.constant 5 : index
    %c0_240 = arith.constant 0 : index
    %c0_241 = arith.constant 0 : index
    %310 = vector.load %arg11[%c5_239, %c0_240, %c0_241] : memref<6x32x32xbf16, #tpu.memory_space<vmem>>, vector<1x32x32xbf16>
    %311 = vector.shape_cast %310 : vector<1x32x32xbf16> to vector<32x32xbf16>
    %cst_242 = arith.constant dense<0.000000e+00> : vector<32x32xf32>
    %312 = tpu.matmul %309, %311, %cst_242 {dimension_numbers = #tpu.dot_dimension_numbers<[1], [0], [0], [1], [0, 0, 1, 1], [], []>} : vector<32x32xbf16>, vector<32x32xbf16>, vector<32x32xf32> -> vector<32x32xf32>
    %313 = arith.addf %272, %312 : vector<32x32xf32>
    %c5_243 = arith.constant 5 : index
    %c0_244 = arith.constant 0 : index
    %c0_245 = arith.constant 0 : index
    %314 = vector.load %arg12[%c5_243, %c0_244, %c0_245] : memref<6x1x32xf32, #tpu.memory_space<vmem>>, vector<1x1x32xf32>
    %315 = vector.shape_cast %314 : vector<1x1x32xf32> to vector<1x32xf32>
    %316 = vector.broadcast %315 : vector<1x32xf32> to vector<32x32xf32>
    %317 = arith.addf %313, %316 : vector<32x32xf32>
    %cst_246 = arith.constant 0.000000e+00 : f32
    %318 = vector.broadcast %cst_246 : f32 to vector<32x32xf32>
    %319 = arith.maximumf %317, %318 : vector<32x32xf32>
    %320 = arith.truncf %319 : vector<32x32xf32> to vector<32x32xbf16>
    %c0_247 = arith.constant 0 : index
    %c0_248 = arith.constant 0 : index
    %321 = vector.load %arg13[%c0_247, %c0_248] : memref<32x32xbf16, #tpu.memory_space<vmem>>, vector<32x32xbf16>
    %cst_249 = arith.constant dense<0.000000e+00> : vector<32x32xf32>
    %322 = tpu.matmul %320, %321, %cst_249 {dimension_numbers = #tpu.dot_dimension_numbers<[1], [0], [0], [1], [0, 0, 1, 1], [], []>} : vector<32x32xbf16>, vector<32x32xbf16>, vector<32x32xf32> -> vector<32x32xf32>
    %c0_250 = arith.constant 0 : index
    %c0_251 = arith.constant 0 : index
    %323 = vector.load %arg14[%c0_250, %c0_251] : memref<1x32xf32, #tpu.memory_space<vmem>>, vector<1x32xf32>
    %324 = vector.broadcast %323 : vector<1x32xf32> to vector<32x32xf32>
    %325 = arith.addf %322, %324 : vector<32x32xf32>
    %cst_252 = arith.constant 0.000000e+00 : f32
    %326 = vector.broadcast %cst_252 : f32 to vector<32x32xf32>
    %327 = arith.maximumf %325, %326 : vector<32x32xf32>
    %328 = arith.truncf %327 : vector<32x32xf32> to vector<32x32xbf16>
    %c0_253 = arith.constant 0 : index
    %c0_254 = arith.constant 0 : index
    %329 = vector.load %arg15[%c0_253, %c0_254] : memref<32x128xbf16, #tpu.memory_space<vmem>>, vector<32x128xbf16>
    %cst_255 = arith.constant dense<0.000000e+00> : vector<32x128xf32>
    %330 = tpu.matmul %328, %329, %cst_255 {dimension_numbers = #tpu.dot_dimension_numbers<[1], [0], [0], [1], [0, 0, 1, 1], [], []>} : vector<32x32xbf16>, vector<32x128xbf16>, vector<32x128xf32> -> vector<32x128xf32>
    %c0_256 = arith.constant 0 : index
    %c0_257 = arith.constant 0 : index
    %331 = vector.load %arg16[%c0_256, %c0_257] : memref<1x128xf32, #tpu.memory_space<vmem>>, vector<1x128xf32>
    %332 = vector.broadcast %331 : vector<1x128xf32> to vector<32x128xf32>
    %333 = arith.addf %330, %332 : vector<32x128xf32>
    %334 = arith.truncf %333 : vector<32x128xf32> to vector<32x128xbf16>
    %c0_258 = arith.constant 0 : index
    %c0_259 = arith.constant 0 : index
    %335 = vector.load %arg17[%c0_258, %c0_259] : memref<32x128xbf16, #tpu.memory_space<vmem>>, vector<32x128xbf16>
    tpu.vector_store %arg17[%c0_258, %c0_259], %334 {strides = array<i32>} : memref<32x128xbf16, #tpu.memory_space<vmem>>, vector<32x128xbf16>,
    return
  }
  func.func @transform_0(%arg0: i32) -> (i32, i32) {
    %c0_i32 = arith.constant 0 : i32
    %c0_i32_0 = arith.constant 0 : i32
    %c0_i32_1 = arith.constant 0 : i32
    return %c0_i32, %c0_i32_0 : i32, i32
  }
  func.func @transform_1(%arg0: i32) -> (i32, i32, i32) {
    %c0_i32 = arith.constant 0 : i32
    %c0_i32_0 = arith.constant 0 : i32
    %c0_i32_1 = arith.constant 0 : i32
    %c0_i32_2 = arith.constant 0 : i32
    return %c0_i32, %c0_i32_0, %c0_i32_1 : i32, i32, i32
  }
  func.func @transform_2(%arg0: i32) -> (i32, i32) {
    %c0_i32 = arith.constant 0 : i32
    %c0_i32_0 = arith.constant 0 : i32
    %c0_i32_1 = arith.constant 0 : i32
    return %c0_i32, %c0_i32_0 : i32, i32
  }
  func.func @transform_3(%arg0: i32) -> (i32, i32) {
    %c0_i32 = arith.constant 0 : i32
    %c0_i32_0 = arith.constant 0 : i32
    %c0_i32_1 = arith.constant 0 : i32
    return %c0_i32, %c0_i32_0 : i32, i32
  }
  func.func @transform_4(%arg0: i32) -> (i32, i32, i32) {
    %c0_i32 = arith.constant 0 : i32
    %c0_i32_0 = arith.constant 0 : i32
    %c0_i32_1 = arith.constant 0 : i32
    %c0_i32_2 = arith.constant 0 : i32
    return %c0_i32, %c0_i32_0, %c0_i32_1 : i32, i32, i32
  }
  func.func @transform_5(%arg0: i32) -> (i32, i32, i32) {
    %c0_i32 = arith.constant 0 : i32
    %c0_i32_0 = arith.constant 0 : i32
    %c0_i32_1 = arith.constant 0 : i32
    %c0_i32_2 = arith.constant 0 : i32
    return %c0_i32, %c0_i32_0, %c0_i32_1 : i32, i32, i32
  }
  func.func @transform_6(%arg0: i32) -> (i32, i32, i32) {
    %c0_i32 = arith.constant 0 : i32
    %c0_i32_0 = arith.constant 0 : i32
    %c0_i32_1 = arith.constant 0 : i32
    %c0_i32_2 = arith.constant 0 : i32
    return %c0_i32, %c0_i32_0, %c0_i32_1 : i32, i32, i32
  }
  func.func @transform_7(%arg0: i32) -> (i32, i32, i32) {
    %c0_i32 = arith.constant 0 : i32
    %c0_i32_0 = arith.constant 0 : i32
    %c0_i32_1 = arith.constant 0 : i32
    %c0_i32_2 = arith.constant 0 : i32
    return %c0_i32, %c0_i32_0, %c0_i32_1 : i32, i32, i32
  }
  func.func @transform_8(%arg0: i32) -> (i32, i32, i32) {
    %c0_i32 = arith.constant 0 : i32
    %c0_i32_0 = arith.constant 0 : i32
    %c0_i32_1 = arith.constant 0 : i32
    %c0_i32_2 = arith.constant 0 : i32
    return %c0_i32, %c0_i32_0, %c0_i32_1 : i32, i32, i32
  }
  func.func @transform_9(%arg0: i32) -> (i32, i32, i32) {
    %c0_i32 = arith.constant 0 : i32
    %c0_i32_0 = arith.constant 0 : i32
    %c0_i32_1 = arith.constant 0 : i32
    %c0_i32_2 = arith.constant 0 : i32
    return %c0_i32, %c0_i32_0, %c0_i32_1 : i32, i32, i32
  }
  func.func @transform_10(%arg0: i32) -> (i32, i32, i32) {
    %c0_i32 = arith.constant 0 : i32
    %c0_i32_0 = arith.constant 0 : i32
    %c0_i32_1 = arith.constant 0 : i32
    %c0_i32_2 = arith.constant 0 : i32
    return %c0_i32, %c0_i32_0, %c0_i32_1 : i32, i32, i32
  }
  func.func @transform_11(%arg0: i32) -> (i32, i32, i32) {
    %c0_i32 = arith.constant 0 : i32
    %c0_i32_0 = arith.constant 0 : i32
    %c0_i32_1 = arith.constant 0 : i32
    %c0_i32_2 = arith.constant 0 : i32
    return %c0_i32, %c0_i32_0, %c0_i32_1 : i32, i32, i32
  }
  func.func @transform_12(%arg0: i32) -> (i32, i32) {
    %c0_i32 = arith.constant 0 : i32
    %c0_i32_0 = arith.constant 0 : i32
    %c0_i32_1 = arith.constant 0 : i32
    return %c0_i32, %c0_i32_0 : i32, i32
  }
  func.func @transform_13(%arg0: i32) -> (i32, i32) {
    %c0_i32 = arith.constant 0 : i32
    %c0_i32_0 = arith.constant 0 : i32
    %c0_i32_1 = arith.constant 0 : i32
    return %c0_i32, %c0_i32_0 : i32, i32
  }
  func.func @transform_14(%arg0: i32) -> (i32, i32) {
    %c0_i32 = arith.constant 0 : i32
    %c0_i32_0 = arith.constant 0 : i32
    %c0_i32_1 = arith.constant 0 : i32
    return %c0_i32, %c0_i32_0 : i32, i32
  }
  func.func @transform_15(%arg0: i32) -> (i32, i32) {
    %c0_i32 = arith.constant 0 : i32
    %c0_i32_0 = arith.constant 0 : i32
    %c0_i32_1 = arith.constant 0 : i32
    return %c0_i32, %c0_i32_0 : i32, i32
  }
  func.func @transform_16(%arg0: i32) -> (i32, i32) {
    %c0_i32 = arith.constant 0 : i32
    %c0_i32_0 = arith.constant 0 : i32
    %c0_i32_1 = arith.constant 0 : i32
    return %c0_i32, %c0_i32_0 : i32, i32
  }
}

</mosaic_0001>

<llo_original>
// kernel: wavenet_forward.1
$region0: #{wavenet_forward.1}
  #allocation0 [shape = 'u32[]', space=smem, size = 0x4, offset = 0x4, fixed_abs, tag = 'smem constant byte address 0x4 - core index']
  #allocation1 [shape = 'u32[72,128]{1,0:T(1,128)}', space=vmem, size = 0x9000, scoped, tag = 'internal scratch']
  %s0 = inlined_call_operand.vmem [shape: f32[32,4], index: 0, kind: input, shape index: {}]
  %s1 = inlined_call_operand.vmem [shape: bf16[3,32,32], index: 1, kind: input, shape index: {}]
  %s2 = inlined_call_operand.vmem [shape: bf16[4,32], index: 2, kind: input, shape index: {}]
  %s3 = inlined_call_operand.vmem [shape: f32[1,32], index: 3, kind: input, shape index: {}]
  %s4 = inlined_call_operand.hbm [shape: bf16[12,32,32], index: 4, kind: input, shape index: {}]
  %s5 = inlined_call_operand.hbm [shape: f32[6,1,32], index: 5, kind: input, shape index: {}]
  %s6 = inlined_call_operand.hbm [shape: bf16[12,32,32], index: 6, kind: input, shape index: {}]
  %s7 = inlined_call_operand.hbm [shape: f32[6,1,32], index: 7, kind: input, shape index: {}]
  %s8 = inlined_call_operand.hbm [shape: bf16[6,32,32], index: 8, kind: input, shape index: {}]
  %s9 = inlined_call_operand.hbm [shape: f32[6,1,32], index: 9, kind: input, shape index: {}]
  %s10 = inlined_call_operand.hbm [shape: bf16[6,32,32], index: 10, kind: input, shape index: {}]
  %s11 = inlined_call_operand.hbm [shape: f32[6,1,32], index: 11, kind: input, shape index: {}]
  %s12 = inlined_call_operand.hbm [shape: bf16[32,32], index: 12, kind: input, shape index: {}]
  %s13 = inlined_call_operand.hbm [shape: f32[1,32], index: 13, kind: input, shape index: {}]
  %s14 = inlined_call_operand.hbm [shape: bf16[32,128], index: 14, kind: input, shape index: {}]
  %s15 = inlined_call_operand.hbm [shape: f32[1,128], index: 15, kind: input, shape index: {}]
  %s16 = inlined_call_operand.vmem [shape: bf16[32,128], index: 16, kind: output, shape index: {}]
  %s17 = sld [smem:[#allocation0]]
  $region122: #{wavenet_forward.1} parent=0
    _
  %s19 = ssub.s32 1, %s17
  %s20 = scalar_select 0, %s19, %s17
  $region1: #{wavenet_forward.1} parent=0
    #allocation2 [shape = 'u8[98304]{0}', space=vmem, size = 0x18000, scoped, tag = 'input window, operand 4, single buffered']
    #allocation3 [shape = 's32[1]{0}', space=sflag, size = 0x4, scoped, tag = 'scoped memory for wavenet_forward.1']
    #allocation4 [shape = 'u8[3072]{0}', space=vmem, size = 0xc00, scoped, tag = 'input window, operand 5, single buffered']
    #allocation5 [shape = 's32[1]{0}', space=sflag, size = 0x4, scoped, tag = 'scoped memory for wavenet_forward.1']
    #allocation6 [shape = 'u8[98304]{0}', space=vmem, size = 0x18000, scoped, tag = 'input window, operand 6, single buffered']
    #allocation7 [shape = 'u8[3072]{0}', space=vmem, size = 0xc00, scoped, tag = 'input window, operand 7, single buffered']
    #allocation8 [shape = 's32[1]{0}', space=sflag, size = 0x4, scoped, tag = 'scoped memory for wavenet_forward.1']
    #allocation9 [shape = 'u8[49152]{0}', space=vmem, size = 0xc000, scoped, tag = 'input window, operand 8, single buffered']
    #allocation10 [shape = 'u8[3072]{0}', space=vmem, size = 0xc00, scoped, tag = 'input window, operand 9, single buffered']
    #allocation11 [shape = 's32[1]{0}', space=sflag, size = 0x4, scoped, tag = 'scoped memory for wavenet_forward.1']
    #allocation12 [shape = 'u8[49152]{0}', space=vmem, size = 0xc000, scoped, tag = 'input window, operand 10, single buffered']
    #allocation13 [shape = 'u8[3072]{0}', space=vmem, size = 0xc00, scoped, tag = 'input window, operand 11, single buffered']
    #allocation14 [shape = 's32[1]{0}', space=sflag, size = 0x4, scoped, tag = 'scoped memory for wavenet_forward.1']
    #allocation15 [shape = 'u8[8192]{0}', space=vmem, size = 0x2000, scoped, tag = 'input window, operand 12, single buffered']
    #allocation16 [shape = 'u8[512]{0}', space=vmem, size = 0x400, scoped, tag = 'input window, operand 13, single buffered']
    #allocation17 [shape = 's32[1]{0}', space=sflag, size = 0x4, scoped, tag = 'scoped memory for wavenet_forward.1']
    #allocation18 [shape = 'u8[8192]{0}', space=vmem, size = 0x2000, scoped, tag = 'input window, operand 14, single buffered']
    #allocation19 [shape = 'u8[512]{0}', space=vmem, size = 0x400, scoped, tag = 'input window, operand 15, single buffered']
    #allocation20 [shape = 's32[1]{0}', space=sflag, size = 0x4, scoped, tag = 'scoped memory for wavenet_forward.1']
    %21 = vsyncpa [#allocation3], 0
    %22 = vsyncpa [#allocation5], 0
    %23 = vsyncpa [#allocation8], 0
    %24 = vsyncpa [#allocation11], 0
    %25 = vsyncpa [#allocation14], 0
    %26 = vsyncpa [#allocation17], 0
    %27 = vsyncpa [#allocation20], 0
    // Predicated region
    $region2: #{wavenet_forward.1} parent=1 // pred_check
      _
    $region3: #{wavenet_forward.1} parent=1 // pred_check_branch
      %29 = sbr.rel (0) target = $region5
    $region4: #{wavenet_forward.1} parent=1 // pred_region
      _
    $region5: #{wavenet_forward.1} parent=1 // pred_fallthru
      _
    // Predicated region
    $region6: #{wavenet_forward.1} parent=1 // pred_check
      _
    $region7: #{wavenet_forward.1} parent=1 // pred_check_branch
      %31 = sbr.rel (0) target = $region9
    $region8: #{wavenet_forward.1} parent=1 // pred_region
      _
    $region9: #{wavenet_forward.1} parent=1 // pred_fallthru
      _
    // Predicated region
    $region10: #{wavenet_forward.1} parent=1 // pred_check
      _
    $region11: #{wavenet_forward.1} parent=1 // pred_check_branch
      %33 = sbr.rel (0) target = $region13
    $region12: #{wavenet_forward.1} parent=1 // pred_region
      _
    $region13: #{wavenet_forward.1} parent=1 // pred_fallthru
      _
    // Predicated region
    $region14: #{wavenet_forward.1} parent=1 // pred_check
      _
    $region15: #{wavenet_forward.1} parent=1 // pred_check_branch
      %35 = sbr.rel (0) target = $region17
    $region16: #{wavenet_forward.1} parent=1 // pred_region
      _
    $region17: #{wavenet_forward.1} parent=1 // pred_fallthru
      _
    // Predicated region
    $region18: #{wavenet_forward.1} parent=1 // pred_check
      _
    $region19: #{wavenet_forward.1} parent=1 // pred_check_branch
      %37 = sbr.rel (0) target = $region21
    $region20: #{wavenet_forward.1} parent=1 // pred_region
      %39 = vsyncadd [#allocation3], 0
      %s40 = sshll.u32 %s4, 4
      %s41 = int_to_ptr.hbm [resolvable:$true] %s40
      %s42 = sshll.u32 [#allocation2], 4
      %s43 = int_to_ptr.vmem [resolvable:$true] %s42
      %48 = dma.hbm_to_vmem [thread:$0]  %s41, 3072, %s43, [#allocation3], 64, 64, 4
    $region21: #{wavenet_forward.1} parent=1 // pred_fallthru
      _
    // Predicated region
    $region22: #{wavenet_forward.1} parent=1 // pred_check
      _
    $region23: #{wavenet_forward.1} parent=1 // pred_check_branch
      %50 = sbr.rel (0) target = $region25
    $region24: #{wavenet_forward.1} parent=1 // pred_region
      %52 = vsyncadd [#allocation5], 0
      %s53 = sshll.u32 %s5, 4
      %s54 = int_to_ptr.hbm [resolvable:$true] %s53
      %s55 = sshll.u32 [#allocation4], 4
      %s56 = int_to_ptr.vmem [resolvable:$true] %s55
      %61 = dma.hbm_to_vmem [thread:$0]  %s54, 96, %s56, [#allocation5], 16, 16, 1
    $region25: #{wavenet_forward.1} parent=1 // pred_fallthru
      _
    // Predicated region
    $region26: #{wavenet_forward.1} parent=1 // pred_check
      _
    $region27: #{wavenet_forward.1} parent=1 // pred_check_branch
      %63 = sbr.rel (0) target = $region29
    $region28: #{wavenet_forward.1} parent=1 // pred_region
      %65 = vsyncadd [#allocation5], 0
      %s66 = sshll.u32 %s6, 4
      %s67 = int_to_ptr.hbm [resolvable:$true] %s66
      %s68 = sshll.u32 [#allocation6], 4
      %s69 = int_to_ptr.vmem [resolvable:$true] %s68
      %74 = dma.hbm_to_vmem [thread:$0]  %s67, 3072, %s69, [#allocation5], 64, 64, 4
    $region29: #{wavenet_forward.1} parent=1 // pred_fallthru
      _
    // Predicated region
    $region30: #{wavenet_forward.1} parent=1 // pred_check
      _
    $region31: #{wavenet_forward.1} parent=1 // pred_check_branch
      %76 = sbr.rel (0) target = $region33
    $region32: #{wavenet_forward.1} parent=1 // pred_region
      %78 = vsyncadd [#allocation8], 0
      %s79 = sshll.u32 %s7, 4
      %s80 = int_to_ptr.hbm [resolvable:$true] %s79
      %s81 = sshll.u32 [#allocation7], 4
      %s82 = int_to_ptr.vmem [resolvable:$true] %s81
      %87 = dma.hbm_to_vmem [thread:$0]  %s80, 96, %s82, [#allocation8], 16, 16, 1
    $region33: #{wavenet_forward.1} parent=1 // pred_fallthru
      _
    // Predicated region
    $region34: #{wavenet_forward.1} parent=1 // pred_check
      _
    $region35: #{wavenet_forward.1} parent=1 // pred_check_branch
      %89 = sbr.rel (0) target = $region37
    $region36: #{wavenet_forward.1} parent=1 // pred_region
      %91 = vsyncadd [#allocation8], 0
      %s92 = sshll.u32 %s8, 4
      %s93 = int_to_ptr.hbm [resolvable:$true] %s92
      %s94 = sshll.u32 [#allocation9], 4
      %s95 = int_to_ptr.vmem [resolvable:$true] %s94
      %100 = dma.hbm_to_vmem [thread:$0]  %s93, 1536, %s95, [#allocation8], 64, 64, 4
    $region37: #{wavenet_forward.1} parent=1 // pred_fallthru
      _
    // Predicated region
    $region38: #{wavenet_forward.1} parent=1 // pred_check
      _
    $region39: #{wavenet_forward.1} parent=1 // pred_check_branch
      %102 = sbr.rel (0) target = $region41
    $region40: #{wavenet_forward.1} parent=1 // pred_region
      %104 = vsyncadd [#allocation11], 0
      %s105 = sshll.u32 %s9, 4
      %s106 = int_to_ptr.hbm [resolvable:$true] %s105
      %s107 = sshll.u32 [#allocation10], 4
      %s108 = int_to_ptr.vmem [resolvable:$true] %s107
      %113 = dma.hbm_to_vmem [thread:$0]  %s106, 96, %s108, [#allocation11], 16, 16, 1
    $region41: #{wavenet_forward.1} parent=1 // pred_fallthru
      _
    // Predicated region
    $region42: #{wavenet_forward.1} parent=1 // pred_check
      _
    $region43: #{wavenet_forward.1} parent=1 // pred_check_branch
      %115 = sbr.rel (0) target = $region45
    $region44: #{wavenet_forward.1} parent=1 // pred_region
      %117 = vsyncadd [#allocation11], 0
      %s118 = sshll.u32 %s10, 4
      %s119 = int_to_ptr.hbm [resolvable:$true] %s118
      %s120 = sshll.u32 [#allocation12], 4
      %s121 = int_to_ptr.vmem [resolvable:$true] %s120
      %126 = dma.hbm_to_vmem [thread:$0]  %s119, 1536, %s121, [#allocation11], 64, 64, 4
    $region45: #{wavenet_forward.1} parent=1 // pred_fallthru
      _
    // Predicated region
    $region46: #{wavenet_forward.1} parent=1 // pred_check
      _
    $region47: #{wavenet_forward.1} parent=1 // pred_check_branch
      %128 = sbr.rel (0) target = $region49
    $region48: #{wavenet_forward.1} parent=1 // pred_region
      %130 = vsyncadd [#allocation14], 0
      %s131 = sshll.u32 %s11, 4
      %s132 = int_to_ptr.hbm [resolvable:$true] %s131
      %s133 = sshll.u32 [#allocation13], 4
      %s134 = int_to_ptr.vmem [resolvable:$true] %s133
      %139 = dma.hbm_to_vmem [thread:$0]  %s132, 96, %s134, [#allocation14], 16, 16, 1
    $region49: #{wavenet_forward.1} parent=1 // pred_fallthru
      _
    // Predicated region
    $region50: #{wavenet_forward.1} parent=1 // pred_check
      _
    $region51: #{wavenet_forward.1} parent=1 // pred_check_branch
      %141 = sbr.rel (0) target = $region53
    $region52: #{wavenet_forward.1} parent=1 // pred_region
      %143 = vsyncadd [#allocation14], 0
      %s144 = sshll.u32 %s12, 4
      %s145 = int_to_ptr.hbm [resolvable:$true] %s144
      %s146 = sshll.u32 [#allocation15], 4
      %s147 = int_to_ptr.vmem [resolvable:$true] %s146
      %152 = dma.hbm_to_vmem [thread:$0]  %s145, 256, %s147, [#allocation14], 64, 64, 4
    $region53: #{wavenet_forward.1} parent=1 // pred_fallthru
      _
    // Predicated region
    $region54: #{wavenet_forward.1} parent=1 // pred_check
      _
    $region55: #{wavenet_forward.1} parent=1 // pred_check_branch
      %154 = sbr.rel (0) target = $region57
    $region56: #{wavenet_forward.1} parent=1 // pred_region
      %156 = vsyncadd [#allocation17], 0
      %s158 = sshll.u32 %s13, 4
      %s159 = int_to_ptr.hbm [resolvable:$true] %s158
      %s160 = sshll.u32 [#allocation16], 4
      %s161 = int_to_ptr.vmem [resolvable:$true] %s160
      %163 = dma.hbm_to_vmem [thread:$0]  %s159, 16, %s161, [#allocation17]
    $region57: #{wavenet_forward.1} parent=1 // pred_fallthru
      _
    // Predicated region
    $region58: #{wavenet_forward.1} parent=1 // pred_check
      _
    $region59: #{wavenet_forward.1} parent=1 // pred_check_branch
      %165 = sbr.rel (0) target = $region61
    $region60: #{wavenet_forward.1} parent=1 // pred_region
      %167 = vsyncadd [#allocation17], 0
      %s168 = sshll.u32 %s14, 4
      %s169 = int_to_ptr.hbm [resolvable:$true] %s168
      %s170 = sshll.u32 [#allocation18], 4
      %s171 = int_to_ptr.vmem [resolvable:$true] %s170
      %176 = dma.hbm_to_vmem [thread:$0]  %s169, 256, %s171, [#allocation17], 64, 64, 4
    $region61: #{wavenet_forward.1} parent=1 // pred_fallthru
      _
    // Predicated region
    $region62: #{wavenet_forward.1} parent=1 // pred_check
      _
    $region63: #{wavenet_forward.1} parent=1 // pred_check_branch
      %178 = sbr.rel (0) target = $region65
    $region64: #{wavenet_forward.1} parent=1 // pred_region
      %180 = vsyncadd [#allocation20], 0
      %s182 = sshll.u32 %s15, 4
      %s183 = int_to_ptr.hbm [resolvable:$true] %s182
      %s184 = sshll.u32 [#allocation19], 4
      %s185 = int_to_ptr.vmem [resolvable:$true] %s184
      %187 = dma.hbm_to_vmem [thread:$0]  %s183, 16, %s185, [#allocation20]
    $region65: #{wavenet_forward.1} parent=1 // pred_fallthru
      _
    // Predicated region
    $region66: #{wavenet_forward.1} parent=1 // pred_check
      _
    $region67: #{wavenet_forward.1} parent=1 // pred_check_branch
      %189 = sbr.rel (0) target = $region69
    $region68: #{wavenet_forward.1} parent=1 // pred_region
      %191 = dma.done [#allocation3], 3072
    $region69: #{wavenet_forward.1} parent=1 // pred_fallthru
      _
    // Predicated region
    $region70: #{wavenet_forward.1} parent=1 // pred_check
      _
    $region71: #{wavenet_forward.1} parent=1 // pred_check_branch
      %193 = sbr.rel (0) target = $region73
    $region72: #{wavenet_forward.1} parent=1 // pred_region
      %195 = dma.done [#allocation5], 96
    $region73: #{wavenet_forward.1} parent=1 // pred_fallthru
      _
    // Predicated region
    $region74: #{wavenet_forward.1} parent=1 // pred_check
      _
    $region75: #{wavenet_forward.1} parent=1 // pred_check_branch
      %197 = sbr.rel (0) target = $region77
    $region76: #{wavenet_forward.1} parent=1 // pred_region
      %199 = dma.done [#allocation5], 3072
    $region77: #{wavenet_forward.1} parent=1 // pred_fallthru
      _
    // Predicated region
    $region78: #{wavenet_forward.1} parent=1 // pred_check
      _
    $region79: #{wavenet_forward.1} parent=1 // pred_check_branch
      %201 = sbr.rel (0) target = $region81
    $region80: #{wavenet_forward.1} parent=1 // pred_region
      %203 = dma.done [#allocation8], 96
    $region81: #{wavenet_forward.1} parent=1 // pred_fallthru
      _
    // Predicated region
    $region82: #{wavenet_forward.1} parent=1 // pred_check
      _
    $region83: #{wavenet_forward.1} parent=1 // pred_check_branch
      %205 = sbr.rel (0) target = $region85
    $region84: #{wavenet_forward.1} parent=1 // pred_region
      %207 = dma.done [#allocation8], 1536
    $region85: #{wavenet_forward.1} parent=1 // pred_fallthru
      _
    // Predicated region
    $region86: #{wavenet_forward.1} parent=1 // pred_check
      _
    $region87: #{wavenet_forward.1} parent=1 // pred_check_branch
      %209 = sbr.rel (0) target = $region89
    $region88: #{wavenet_forward.1} parent=1 // pred_region
      %211 = dma.done [#allocation11], 96
    $region89: #{wavenet_forward.1} parent=1 // pred_fallthru
      _
    // Predicated region
    $region90: #{wavenet_forward.1} parent=1 // pred_check
      _
    $region91: #{wavenet_forward.1} parent=1 // pred_check_branch
      %213 = sbr.rel (0) target = $region93
    $region92: #{wavenet_forward.1} parent=1 // pred_region
      %215 = dma.done [#allocation11], 1536
    $region93: #{wavenet_forward.1} parent=1 // pred_fallthru
      _
    // Predicated region
    $region94: #{wavenet_forward.1} parent=1 // pred_check
      _
    $region95: #{wavenet_forward.1} parent=1 // pred_check_branch
      %217 = sbr.rel (0) target = $region97
    $region96: #{wavenet_forward.1} parent=1 // pred_region
      %219 = dma.done [#allocation14], 96
    $region97: #{wavenet_forward.1} parent=1 // pred_fallthru
      _
    // Predicated region
    $region98: #{wavenet_forward.1} parent=1 // pred_check
      _
    $region99: #{wavenet_forward.1} parent=1 // pred_check_branch
      %221 = sbr.rel (0) target = $region101
    $region100: #{wavenet_forward.1} parent=1 // pred_region
      %223 = dma.done [#allocation14], 256
    $region101: #{wavenet_forward.1} parent=1 // pred_fallthru
      _
    // Predicated region
    $region102: #{wavenet_forward.1} parent=1 // pred_check
      _
    $region103: #{wavenet_forward.1} parent=1 // pred_check_branch
      %225 = sbr.rel (0) target = $region105
    $region104: #{wavenet_forward.1} parent=1 // pred_region
      %227 = dma.done [#allocation17], 16
    $region105: #{wavenet_forward.1} parent=1 // pred_fallthru
      _
    // Predicated region
    $region106: #{wavenet_forward.1} parent=1 // pred_check
      _
    $region107: #{wavenet_forward.1} parent=1 // pred_check_branch
      %229 = sbr.rel (0) target = $region109
    $region108: #{wavenet_forward.1} parent=1 // pred_region
      %231 = dma.done [#allocation17], 256
    $region109: #{wavenet_forward.1} parent=1 // pred_fallthru
      _
    // Predicated region
    $region110: #{wavenet_forward.1} parent=1 // pred_check
      _
    $region111: #{wavenet_forward.1} parent=1 // pred_check_branch
      %233 = sbr.rel (0) target = $region113
    $region112: #{wavenet_forward.1} parent=1 // pred_region
      %235 = dma.done [#allocation20], 16
    $region113: #{wavenet_forward.1} parent=1 // pred_fallthru
      _
    %v237 = vld [vmem:[%s0] sm:$0xff]
    %v238 = vld [vmem:[%s0 + $0x8] sm:$0xff]
    %v239 = vld [vmem:[%s0 + $0x10] sm:$0xff]
    %v240 = vld [vmem:[%s0 + $0x18] sm:$0xff]
    %v241 = vpack.c.bf16 %v238, %v237
    %v242 = vpack.c.bf16 %v240, %v239
    %v243 = vld [vmem:[%s2] sm:$0x3]
    %v244 = vld [vmem:[%s3] sm:$0x1]
    %v246 = vperm.slane %v244, 0
    %vm248 = vcmask 31744
    %v250 = vsel %vm248, %v241, 0
    %v253 = vsel %vm248, %v242, 0
    %vm255 = vcmask 1041408
    %v257 = vsel %vm255, %v243, 0
    %259 = vmatpush.bf16.msra.mxu0 0
    %260 = vmatpush.bf16.msra.mxu0 0
    %261 = vmatpush.bf16.msra.mxu0 0
    %262 = vmatpush.bf16.msra.mxu0 0
    %263 = vmatpush.bf16.msra.mxu0 0
    %264 = vmatpush.bf16.msra.mxu0 0
    %265 = vmatpush.bf16.msra.mxu0 0
    %266 = vmatpush.bf16.msra.mxu0 %v257
    %267 = vmatmul.bf16.gmra.mxu0 %v250
    %v268 = vpop.f32.mrf.mxu0
    %v269 = vadd.f32 %v246, %v268
    %v270 = vpop.f32.mrf.mxu0
    %v271 = vadd.f32 %v246, %v270
    %272 = vmatmul.bf16.gmra.mxu0 %v253
    %v273 = vpop.f32.mrf.mxu0
    %v274 = vadd.f32 %v246, %v273
    %v275 = vpop.f32.mrf.mxu0
    %v276 = vadd.f32 %v246, %v275
    %277 = vdwg.mxu0
    %v278 = vpack.c.bf16 %v271, %v269
    %v279 = vpack.c.bf16 %v276, %v274
    %v280 = vld [vmem:[%s1] sm:$0xf]
    %v281 = vld [vmem:[%s1 + $0x4] sm:$0xf]
    %v282 = vld [vmem:[%s1 + $0x8] sm:$0xf]
    %v283 = vld [vmem:[%s1 + $0xc] sm:$0xf]
    %v288 = vunpack.c.l.b16 %v280
    %v289 = vunpack.c.l.b16 %v281
    %v290 = vunpack.c.l.b16 %v282
    %v291 = vunpack.c.l.b16 %v283
    %v292 = vpack.c.b16 %v289, %v288
    %v293 = vpack.c.b16 %v291, %v290
    %vm294 = vcmask 261120
    %v296 = vsel %vm294, %v292, 0
    %v299 = vsel %vm294, %v293, 0
    %301 = vmatpush.bf16.msra.mxu0 0
    %302 = vmatpush.bf16.msra.mxu0 0
    %303 = vmatpush.bf16.msra.mxu0 0
    %304 = vmatpush.bf16.msra.mxu0 0
    %305 = vmatpush.bf16.msra.mxu0 0
    %306 = vmatpush.bf16.msra.mxu0 0
    %307 = vmatpush.bf16.msra.mxu0 %v279
    %308 = vmatpush.bf16.msra.mxu0 %v278
    %309 = vmatmul.bf16.gmra.mxu0 %v296
    %v310 = vpop.f32.mrf.mxu0
    %v311 = vadd.f32 0.0, %v310
    %v312 = vpop.f32.mrf.mxu0
    %v313 = vadd.f32 0.0, %v312
    %314 = vmatmul.bf16.gmra.mxu0 %v299
    %v315 = vpop.f32.mrf.mxu0
    %v316 = vadd.f32 0.0, %v315
    %v317 = vpop.f32.mrf.mxu0
    %v318 = vadd.f32 0.0, %v317
    %319 = vdwg.mxu0
    %v320 = vpack.c.bf16 %v313, %v311
    %v321 = vpack.c.bf16 %v318, %v316
    %v322 = vld [vmem:[#allocation4] sm:$0x1]
    %v323 = vld [vmem:[#allocation7] sm:$0x1]
    %v324 = vld [vmem:[#allocation2] sm:$0xf]
    %v325 = vld [vmem:[#allocation2 + $0x4] sm:$0xf]
    %v326 = vld [vmem:[#allocation2 + $0x8] sm:$0xf]
    %v327 = vld [vmem:[#allocation2 + $0xc] sm:$0xf]
    %v332 = vunpack.c.l.b16 %v324
    %v333 = vunpack.c.l.b16 %v325
    %v334 = vunpack.c.l.b16 %v326
    %v335 = vunpack.c.l.b16 %v327
    %v336 = vpack.c.b16 %v333, %v332
    %v337 = vpack.c.b16 %v335, %v334
    %v341 = vsel %vm294, %v320, 0
    %v344 = vsel %vm294, %v321, 0
    %346 = vmatpush.bf16.msra.mxu0 0
    %347 = vmatpush.bf16.msra.mxu0 0
    %348 = vmatpush.bf16.msra.mxu0 0
    %349 = vmatpush.bf16.msra.mxu0 0
    %350 = vmatpush.bf16.msra.mxu0 0
    %351 = vmatpush.bf16.msra.mxu0 0
    %352 = vmatpush.bf16.msra.mxu0 %v337
    %353 = vmatpush.bf16.msra.mxu0 %v336
    %354 = vmatmul.bf16.gmra.mxu0 %v341
    %v355 = vpop.f32.mrf.mxu0
    %v356 = vadd.f32 0.0, %v355
    %v357 = vpop.f32.mrf.mxu0
    %v358 = vadd.f32 0.0, %v357
    %359 = vmatmul.bf16.gmra.mxu0 %v344
    %v360 = vpop.f32.mrf.mxu0
    %v361 = vadd.f32 0.0, %v360
    %v362 = vpop.f32.mrf.mxu0
    %v363 = vadd.f32 0.0, %v362
    %364 = vdwg.mxu0
    %v366 = vperm.slane %v322, 0
    %v368 = vadd.f32 %v366, %v356
    %v369 = vadd.f32 %v366, %v358
    %v370 = vadd.f32 %v366, %v361
    %v371 = vadd.f32 %v366, %v363
    %v372 = vld [vmem:[#allocation6] sm:$0xf]
    %v373 = vld [vmem:[#allocation6 + $0x4] sm:$0xf]
    %v374 = vld [vmem:[#allocation6 + $0x8] sm:$0xf]
    %v375 = vld [vmem:[#allocation6 + $0xc] sm:$0xf]
    %v380 = vunpack.c.l.b16 %v372
    %v381 = vunpack.c.l.b16 %v373
    %v382 = vunpack.c.l.b16 %v374
    %v383 = vunpack.c.l.b16 %v375
    %v384 = vpack.c.b16 %v381, %v380
    %v385 = vpack.c.b16 %v383, %v382
    %388 = vmatpush.bf16.msra.mxu0 0
    %389 = vmatpush.bf16.msra.mxu0 0
    %390 = vmatpush.bf16.msra.mxu0 0
    %391 = vmatpush.bf16.msra.mxu0 0
    %392 = vmatpush.bf16.msra.mxu0 0
    %393 = vmatpush.bf16.msra.mxu0 0
    %394 = vmatpush.bf16.msra.mxu0 %v385
    %395 = vmatpush.bf16.msra.mxu0 %v384
    %396 = vmatmul.bf16.gmra.mxu0 %v341
    %v397 = vpop.f32.mrf.mxu0
    %v398 = vadd.f32 0.0, %v397
    %v399 = vpop.f32.mrf.mxu0
    %v400 = vadd.f32 0.0, %v399
    %401 = vmatmul.bf16.gmra.mxu0 %v344
    %v402 = vpop.f32.mrf.mxu0
    %v403 = vadd.f32 0.0, %v402
    %v404 = vpop.f32.mrf.mxu0
    %v405 = vadd.f32 0.0, %v404
    %406 = vdwg.mxu0
    %v408 = vperm.slane %v323, 0
    %v410 = vadd.f32 %v408, %v398
    %v411 = vadd.f32 %v408, %v400
    %v412 = vadd.f32 %v408, %v403
    %v413 = vadd.f32 %v408, %v405
    %s414 = scalar_lea.vmem [#allocation2], 16
    %v415 = vld [vmem:[%s414] sm:$0xf]
    %v416 = vld [vmem:[%s414 + $0x4] sm:$0xf]
    %v417 = vld [vmem:[%s414 + $0x8] sm:$0xf]
    %v418 = vld [vmem:[%s414 + $0xc] sm:$0xf]
    %v423 = vunpack.c.l.b16 %v415
    %v424 = vunpack.c.l.b16 %v416
    %v425 = vunpack.c.l.b16 %v417
    %v426 = vunpack.c.l.b16 %v418
    %v427 = vpack.c.b16 %v424, %v423
    %v428 = vpack.c.b16 %v426, %v425
    %v432 = vsel %vm294, %v278, 0
    %v435 = vsel %vm294, %v279, 0
    %437 = vmatpush.bf16.msra.mxu0 0
    %438 = vmatpush.bf16.msra.mxu0 0
    %439 = vmatpush.bf16.msra.mxu0 0
    %440 = vmatpush.bf16.msra.mxu0 0
    %441 = vmatpush.bf16.msra.mxu0 0
    %442 = vmatpush.bf16.msra.mxu0 0
    %443 = vmatpush.bf16.msra.mxu0 %v428
    %444 = vmatpush.bf16.msra.mxu0 %v427
    %445 = vmatmul.bf16.gmra.mxu0 %v432
    %v446 = vpop.f32.mrf.mxu0
    %v447 = vadd.f32 0.0, %v446
    %v448 = vpop.f32.mrf.mxu0
    %v449 = vadd.f32 0.0, %v448
    %450 = vmatmul.bf16.gmra.mxu0 %v435
    %v451 = vpop.f32.mrf.mxu0
    %v452 = vadd.f32 0.0, %v451
    %v453 = vpop.f32.mrf.mxu0
    %v454 = vadd.f32 0.0, %v453
    %455 = vdwg.mxu0
    %v456 = vadd.f32 %v368, %v447
    %v457 = vadd.f32 %v369, %v449
    %v458 = vadd.f32 %v370, %v452
    %v459 = vadd.f32 %v371, %v454
    %s460 = scalar_lea.vmem [#allocation6], 16
    %v461 = vld [vmem:[%s460] sm:$0xf]
    %v462 = vld [vmem:[%s460 + $0x4] sm:$0xf]
    %v463 = vld [vmem:[%s460 + $0x8] sm:$0xf]
    %v464 = vld [vmem:[%s460 + $0xc] sm:$0xf]
    %v469 = vunpack.c.l.b16 %v461
    %v470 = vunpack.c.l.b16 %v462
    %v471 = vunpack.c.l.b16 %v463
    %v472 = vunpack.c.l.b16 %v464
    %v473 = vpack.c.b16 %v470, %v469
    %v474 = vpack.c.b16 %v472, %v471
    %477 = vmatpush.bf16.msra.mxu0 0
    %478 = vmatpush.bf16.msra.mxu0 0
    %479 = vmatpush.bf16.msra.mxu0 0
    %480 = vmatpush.bf16.msra.mxu0 0
    %481 = vmatpush.bf16.msra.mxu0 0
    %482 = vmatpush.bf16.msra.mxu0 0
    %483 = vmatpush.bf16.msra.mxu0 %v474
    %484 = vmatpush.bf16.msra.mxu0 %v473
    %485 = vmatmul.bf16.gmra.mxu0 %v432
    %v486 = vpop.f32.mrf.mxu0
    %v487 = vadd.f32 0.0, %v486
    %v488 = vpop.f32.mrf.mxu0
    %v489 = vadd.f32 0.0, %v488
    %490 = vmatmul.bf16.gmra.mxu0 %v435
    %v491 = vpop.f32.mrf.mxu0
    %v492 = vadd.f32 0.0, %v491
    %v493 = vpop.f32.mrf.mxu0
    %v494 = vadd.f32 0.0, %v493
    %495 = vdwg.mxu0
    %v496 = vadd.f32 %v410, %v487
    %v497 = vadd.f32 %v411, %v489
    %v498 = vadd.f32 %v412, %v492
    %v499 = vadd.f32 %v413, %v494
    %v500 = vtanh.pop %v456
    %v501 = vtanh.pop %v457
    %v502 = vtanh.pop %v458
    %v503 = vtanh.pop %v459
    %v504 = vmul.f32 %v496, 0.5
    %v505 = vmul.f32 %v497, 0.5
    %v506 = vmul.f32 %v498, 0.5
    %v507 = vmul.f32 %v499, 0.5
    %v508 = vtanh.pop %v504
    %v509 = vtanh.pop %v505
    %v510 = vtanh.pop %v506
    %v511 = vtanh.pop %v507
    %v512 = vadd.f32 %v508, 1.0
    %v513 = vadd.f32 %v509, 1.0
    %v514 = vadd.f32 %v510, 1.0
    %v515 = vadd.f32 %v511, 1.0
    %v516 = vmul.f32 %v512, 0.5
    %v517 = vmul.f32 %v513, 0.5
    %v518 = vmul.f32 %v514, 0.5
    %v519 = vmul.f32 %v515, 0.5
    %v520 = vmul.f32 %v500, %v516
    %v521 = vmul.f32 %v501, %v517
    %v522 = vmul.f32 %v502, %v518
    %v523 = vmul.f32 %v503, %v519
    %v524 = vpack.c.bf16 %v521, %v520
    %v525 = vpack.c.bf16 %v523, %v522
    %v526 = vld [vmem:[#allocation9] sm:$0xf]
    %v527 = vld [vmem:[#allocation9 + $0x4] sm:$0xf]
    %v528 = vld [vmem:[#allocation9 + $0x8] sm:$0xf]
    %v529 = vld [vmem:[#allocation9 + $0xc] sm:$0xf]
    %v534 = vunpack.c.l.b16 %v526
    %v535 = vunpack.c.l.b16 %v527
    %v536 = vunpack.c.l.b16 %v528
    %v537 = vunpack.c.l.b16 %v529
    %v538 = vpack.c.b16 %v535, %v534
    %v539 = vpack.c.b16 %v537, %v536
    %v543 = vsel %vm294, %v524, 0
    %v546 = vsel %vm294, %v525, 0
    %548 = vmatpush.bf16.msra.mxu0 0
    %549 = vmatpush.bf16.msra.mxu0 0
    %550 = vmatpush.bf16.msra.mxu0 0
    %551 = vmatpush.bf16.msra.mxu0 0
    %552 = vmatpush.bf16.msra.mxu0 0
    %553 = vmatpush.bf16.msra.mxu0 0
    %554 = vmatpush.bf16.msra.mxu0 %v539
    %555 = vmatpush.bf16.msra.mxu0 %v538
    %556 = vmatmul.bf16.gmra.mxu0 %v543
    %v557 = vpop.f32.mrf.mxu0
    %v558 = vadd.f32 0.0, %v557
    %v559 = vpop.f32.mrf.mxu0
    %v560 = vadd.f32 0.0, %v559
    %561 = vmatmul.bf16.gmra.mxu0 %v546
    %v562 = vpop.f32.mrf.mxu0
    %v563 = vadd.f32 0.0, %v562
    %v564 = vpop.f32.mrf.mxu0
    %v565 = vadd.f32 0.0, %v564
    %566 = vdwg.mxu0
    %v567 = vadd.f32 %v269, %v558
    %v568 = vadd.f32 %v271, %v560
    %v569 = vadd.f32 %v274, %v563
    %v570 = vadd.f32 %v276, %v565
    %v571 = vld [vmem:[#allocation10] sm:$0x1]
    %v573 = vperm.slane %v571, 0
    %v575 = vadd.f32 %v567, %v573
    %v576 = vadd.f32 %v568, %v573
    %v577 = vadd.f32 %v569, %v573
    %v578 = vadd.f32 %v570, %v573
    %v579 = vld [vmem:[#allocation12] sm:$0xf]
    %v580 = vld [vmem:[#allocation12 + $0x4] sm:$0xf]
    %v581 = vld [vmem:[#allocation12 + $0x8] sm:$0xf]
    %v582 = vld [vmem:[#allocation12 + $0xc] sm:$0xf]
    %v583 = vld [vmem:[#allocation13] sm:$0x1]
    %v585 = vperm.slane %v583, 0
    %v591 = vunpack.c.l.b16 %v579
    %v592 = vunpack.c.l.b16 %v580
    %v593 = vunpack.c.l.b16 %v581
    %v594 = vunpack.c.l.b16 %v582
    %v595 = vpack.c.b16 %v592, %v591
    %v596 = vpack.c.b16 %v594, %v593
    %599 = vmatpush.bf16.msra.mxu0 0
    %600 = vmatpush.bf16.msra.mxu0 0
    %601 = vmatpush.bf16.msra.mxu0 0
    %602 = vmatpush.bf16.msra.mxu0 0
    %603 = vmatpush.bf16.msra.mxu0 0
    %604 = vmatpush.bf16.msra.mxu0 0
    %605 = vmatpush.bf16.msra.mxu0 %v596
    %606 = vmatpush.bf16.msra.mxu0 %v595
    %607 = vmatmul.bf16.gmra.mxu0 %v543
    %v608 = vpop.f32.mrf.mxu0
    %v609 = vadd.f32 %v585, %v608
    %v610 = vpop.f32.mrf.mxu0
    %v611 = vadd.f32 %v585, %v610
    %612 = vmatmul.bf16.gmra.mxu0 %v546
    %v613 = vpop.f32.mrf.mxu0
    %v614 = vadd.f32 %v585, %v613
    %v615 = vpop.f32.mrf.mxu0
    %v616 = vadd.f32 %v585, %v615
    %617 = vdwg.mxu0
    %v618 = vpack.c.bf16 %v576, %v575
    %v619 = vpack.c.bf16 %v578, %v577
    %s620 = scalar_lea.vmem %s1, 16
    %v621 = vld [vmem:[%s620] sm:$0xf]
    %v622 = vld [vmem:[%s620 + $0x4] sm:$0xf]
    %v623 = vld [vmem:[%s620 + $0x8] sm:$0xf]
    %v624 = vld [vmem:[%s620 + $0xc] sm:$0xf]
    %v629 = vunpack.c.l.b16 %v621
    %v630 = vunpack.c.l.b16 %v622
    %v631 = vunpack.c.l.b16 %v623
    %v632 = vunpack.c.l.b16 %v624
    %v633 = vpack.c.b16 %v630, %v629
    %v634 = vpack.c.b16 %v632, %v631
    %v636 = vsel %vm294, %v633, 0
    %v639 = vsel %vm294, %v634, 0
    %641 = vmatpush.bf16.msra.mxu0 0
    %642 = vmatpush.bf16.msra.mxu0 0
    %643 = vmatpush.bf16.msra.mxu0 0
    %644 = vmatpush.bf16.msra.mxu0 0
    %645 = vmatpush.bf16.msra.mxu0 0
    %646 = vmatpush.bf16.msra.mxu0 0
    %647 = vmatpush.bf16.msra.mxu0 %v619
    %648 = vmatpush.bf16.msra.mxu0 %v618
    %649 = vmatmul.bf16.gmra.mxu0 %v636
    %v650 = vpop.f32.mrf.mxu0
    %v651 = vadd.f32 0.0, %v650
    %v652 = vpop.f32.mrf.mxu0
    %v653 = vadd.f32 0.0, %v652
    %654 = vmatmul.bf16.gmra.mxu0 %v639
    %v655 = vpop.f32.mrf.mxu0
    %v656 = vadd.f32 0.0, %v655
    %v657 = vpop.f32.mrf.mxu0
    %v658 = vadd.f32 0.0, %v657
    %659 = vdwg.mxu0
    %v660 = vpack.c.bf16 %v653, %v651
    %v661 = vpack.c.bf16 %v658, %v656
    %s662 = scalar_lea.vmem [#allocation4], 1
    %v663 = vld [vmem:[%s662] sm:$0x1]
    %s664 = scalar_lea.vmem [#allocation7], 1
    %v665 = vld [vmem:[%s664] sm:$0x1]
    %s666 = scalar_lea.vmem [#allocation2], 32
    %v667 = vld [vmem:[%s666] sm:$0xf]
    %v668 = vld [vmem:[%s666 + $0x4] sm:$0xf]
    %v669 = vld [vmem:[%s666 + $0x8] sm:$0xf]
    %v670 = vld [vmem:[%s666 + $0xc] sm:$0xf]
    %v675 = vunpack.c.l.b16 %v667
    %v676 = vunpack.c.l.b16 %v668
    %v677 = vunpack.c.l.b16 %v669
    %v678 = vunpack.c.l.b16 %v670
    %v679 = vpack.c.b16 %v676, %v675
    %v680 = vpack.c.b16 %v678, %v677
    %v684 = vsel %vm294, %v660, 0
    %v687 = vsel %vm294, %v661, 0
    %689 = vmatpush.bf16.msra.mxu0 0
    %690 = vmatpush.bf16.msra.mxu0 0
    %691 = vmatpush.bf16.msra.mxu0 0
    %692 = vmatpush.bf16.msra.mxu0 0
    %693 = vmatpush.bf16.msra.mxu0 0
    %694 = vmatpush.bf16.msra.mxu0 0
    %695 = vmatpush.bf16.msra.mxu0 %v680
    %696 = vmatpush.bf16.msra.mxu0 %v679
    %697 = vmatmul.bf16.gmra.mxu0 %v684
    %v698 = vpop.f32.mrf.mxu0
    %v699 = vadd.f32 0.0, %v698
    %v700 = vpop.f32.mrf.mxu0
    %v701 = vadd.f32 0.0, %v700
    %702 = vmatmul.bf16.gmra.mxu0 %v687
    %v703 = vpop.f32.mrf.mxu0
    %v704 = vadd.f32 0.0, %v703
    %v705 = vpop.f32.mrf.mxu0
    %v706 = vadd.f32 0.0, %v705
    %707 = vdwg.mxu0
    %v709 = vperm.slane %v663, 0
    %v711 = vadd.f32 %v709, %v699
    %v712 = vadd.f32 %v709, %v701
    %v713 = vadd.f32 %v709, %v704
    %v714 = vadd.f32 %v709, %v706
    %s715 = scalar_lea.vmem [#allocation6], 32
    %v716 = vld [vmem:[%s715] sm:$0xf]
    %v717 = vld [vmem:[%s715 + $0x4] sm:$0xf]
    %v718 = vld [vmem:[%s715 + $0x8] sm:$0xf]
    %v719 = vld [vmem:[%s715 + $0xc] sm:$0xf]
    %v724 = vunpack.c.l.b16 %v716
    %v725 = vunpack.c.l.b16 %v717
    %v726 = vunpack.c.l.b16 %v718
    %v727 = vunpack.c.l.b16 %v719
    %v728 = vpack.c.b16 %v725, %v724
    %v729 = vpack.c.b16 %v727, %v726
    %732 = vmatpush.bf16.msra.mxu0 0
    %733 = vmatpush.bf16.msra.mxu0 0
    %734 = vmatpush.bf16.msra.mxu0 0
    %735 = vmatpush.bf16.msra.mxu0 0
    %736 = vmatpush.bf16.msra.mxu0 0
    %737 = vmatpush.bf16.msra.mxu0 0
    %738 = vmatpush.bf16.msra.mxu0 %v729
    %739 = vmatpush.bf16.msra.mxu0 %v728
    %740 = vmatmul.bf16.gmra.mxu0 %v684
    %v741 = vpop.f32.mrf.mxu0
    %v742 = vadd.f32 0.0, %v741
    %v743 = vpop.f32.mrf.mxu0
    %v744 = vadd.f32 0.0, %v743
    %745 = vmatmul.bf16.gmra.mxu0 %v687
    %v746 = vpop.f32.mrf.mxu0
    %v747 = vadd.f32 0.0, %v746
    %v748 = vpop.f32.mrf.mxu0
    %v749 = vadd.f32 0.0, %v748
    %750 = vdwg.mxu0
    %v752 = vperm.slane %v665, 0
    %v754 = vadd.f32 %v752, %v742
    %v755 = vadd.f32 %v752, %v744
    %v756 = vadd.f32 %v752, %v747
    %v757 = vadd.f32 %v752, %v749
    %s758 = scalar_lea.vmem [#allocation2], 48
    %v759 = vld [vmem:[%s758] sm:$0xf]
    %v760 = vld [vmem:[%s758 + $0x4] sm:$0xf]
    %v761 = vld [vmem:[%s758 + $0x8] sm:$0xf]
    %v762 = vld [vmem:[%s758 + $0xc] sm:$0xf]
    %v767 = vunpack.c.l.b16 %v759
    %v768 = vunpack.c.l.b16 %v760
    %v769 = vunpack.c.l.b16 %v761
    %v770 = vunpack.c.l.b16 %v762
    %v771 = vpack.c.b16 %v768, %v767
    %v772 = vpack.c.b16 %v770, %v769
    %v776 = vsel %vm294, %v618, 0
    %v779 = vsel %vm294, %v619, 0
    %781 = vmatpush.bf16.msra.mxu0 0
    %782 = vmatpush.bf16.msra.mxu0 0
    %783 = vmatpush.bf16.msra.mxu0 0
    %784 = vmatpush.bf16.msra.mxu0 0
    %785 = vmatpush.bf16.msra.mxu0 0
    %786 = vmatpush.bf16.msra.mxu0 0
    %787 = vmatpush.bf16.msra.mxu0 %v772
    %788 = vmatpush.bf16.msra.mxu0 %v771
    %789 = vmatmul.bf16.gmra.mxu0 %v776
    %v790 = vpop.f32.mrf.mxu0
    %v791 = vadd.f32 0.0, %v790
    %v792 = vpop.f32.mrf.mxu0
    %v793 = vadd.f32 0.0, %v792
    %794 = vmatmul.bf16.gmra.mxu0 %v779
    %v795 = vpop.f32.mrf.mxu0
    %v796 = vadd.f32 0.0, %v795
    %v797 = vpop.f32.mrf.mxu0
    %v798 = vadd.f32 0.0, %v797
    %799 = vdwg.mxu0
    %v800 = vadd.f32 %v711, %v791
    %v801 = vadd.f32 %v712, %v793
    %v802 = vadd.f32 %v713, %v796
    %v803 = vadd.f32 %v714, %v798
    %s804 = scalar_lea.vmem [#allocation6], 48
    %v805 = vld [vmem:[%s804] sm:$0xf]
    %v806 = vld [vmem:[%s804 + $0x4] sm:$0xf]
    %v807 = vld [vmem:[%s804 + $0x8] sm:$0xf]
    %v808 = vld [vmem:[%s804 + $0xc] sm:$0xf]
    %v813 = vunpack.c.l.b16 %v805
    %v814 = vunpack.c.l.b16 %v806
    %v815 = vunpack.c.l.b16 %v807
    %v816 = vunpack.c.l.b16 %v808
    %v817 = vpack.c.b16 %v814, %v813
    %v818 = vpack.c.b16 %v816, %v815
    %821 = vmatpush.bf16.msra.mxu0 0
    %822 = vmatpush.bf16.msra.mxu0 0
    %823 = vmatpush.bf16.msra.mxu0 0
    %824 = vmatpush.bf16.msra.mxu0 0
    %825 = vmatpush.bf16.msra.mxu0 0
    %826 = vmatpush.bf16.msra.mxu0 0
    %827 = vmatpush.bf16.msra.mxu0 %v818
    %828 = vmatpush.bf16.msra.mxu0 %v817
    %829 = vmatmul.bf16.gmra.mxu0 %v776
    %v830 = vpop.f32.mrf.mxu0
    %v831 = vadd.f32 0.0, %v830
    %v832 = vpop.f32.mrf.mxu0
    %v833 = vadd.f32 0.0, %v832
    %834 = vmatmul.bf16.gmra.mxu0 %v779
    %v835 = vpop.f32.mrf.mxu0
    %v836 = vadd.f32 0.0, %v835
    %v837 = vpop.f32.mrf.mxu0
    %v838 = vadd.f32 0.0, %v837
    %839 = vdwg.mxu0
    %v840 = vadd.f32 %v754, %v831
    %v841 = vadd.f32 %v755, %v833
    %v842 = vadd.f32 %v756, %v836
    %v843 = vadd.f32 %v757, %v838
    %v844 = vtanh.pop %v800
    %v845 = vtanh.pop %v801
    %v846 = vtanh.pop %v802
    %v847 = vtanh.pop %v803
    %v848 = vmul.f32 %v840, 0.5
    %v849 = vmul.f32 %v841, 0.5
    %v850 = vmul.f32 %v842, 0.5
    %v851 = vmul.f32 %v843, 0.5
    %v852 = vtanh.pop %v848
    %v853 = vtanh.pop %v849
    %v854 = vtanh.pop %v850
    %v855 = vtanh.pop %v851
    %v856 = vadd.f32 %v852, 1.0
    %v857 = vadd.f32 %v853, 1.0
    %v858 = vadd.f32 %v854, 1.0
    %v859 = vadd.f32 %v855, 1.0
    %v860 = vmul.f32 %v856, 0.5
    %v861 = vmul.f32 %v857, 0.5
    %v862 = vmul.f32 %v858, 0.5
    %v863 = vmul.f32 %v859, 0.5
    %v864 = vmul.f32 %v844, %v860
    %v865 = vmul.f32 %v845, %v861
    %v866 = vmul.f32 %v846, %v862
    %v867 = vmul.f32 %v847, %v863
    %v868 = vpack.c.bf16 %v865, %v864
    %v869 = vpack.c.bf16 %v867, %v866
    %s870 = scalar_lea.vmem [#allocation9], 16
    %v871 = vld [vmem:[%s870] sm:$0xf]
    %v872 = vld [vmem:[%s870 + $0x4] sm:$0xf]
    %v873 = vld [vmem:[%s870 + $0x8] sm:$0xf]
    %v874 = vld [vmem:[%s870 + $0xc] sm:$0xf]
    %v879 = vunpack.c.l.b16 %v871
    %v880 = vunpack.c.l.b16 %v872
    %v881 = vunpack.c.l.b16 %v873
    %v882 = vunpack.c.l.b16 %v874
    %v883 = vpack.c.b16 %v880, %v879
    %v884 = vpack.c.b16 %v882, %v881
    %v888 = vsel %vm294, %v868, 0
    %v891 = vsel %vm294, %v869, 0
    %893 = vmatpush.bf16.msra.mxu0 0
    %894 = vmatpush.bf16.msra.mxu0 0
    %895 = vmatpush.bf16.msra.mxu0 0
    %896 = vmatpush.bf16.msra.mxu0 0
    %897 = vmatpush.bf16.msra.mxu0 0
    %898 = vmatpush.bf16.msra.mxu0 0
    %899 = vmatpush.bf16.msra.mxu0 %v884
    %900 = vmatpush.bf16.msra.mxu0 %v883
    %901 = vmatmul.bf16.gmra.mxu0 %v888
    %v902 = vpop.f32.mrf.mxu0
    %v903 = vadd.f32 0.0, %v902
    %v904 = vpop.f32.mrf.mxu0
    %v905 = vadd.f32 0.0, %v904
    %906 = vmatmul.bf16.gmra.mxu0 %v891
    %v907 = vpop.f32.mrf.mxu0
    %v908 = vadd.f32 0.0, %v907
    %v909 = vpop.f32.mrf.mxu0
    %v910 = vadd.f32 0.0, %v909
    %911 = vdwg.mxu0
    %v912 = vadd.f32 %v575, %v903
    %v913 = vadd.f32 %v576, %v905
    %v914 = vadd.f32 %v577, %v908
    %v915 = vadd.f32 %v578, %v910
    %s916 = scalar_lea.vmem [#allocation10], 1
    %v917 = vld [vmem:[%s916] sm:$0x1]
    %v919 = vperm.slane %v917, 0
    %v921 = vadd.f32 %v912, %v919
    %v922 = vadd.f32 %v913, %v919
    %v923 = vadd.f32 %v914, %v919
    %v924 = vadd.f32 %v915, %v919
    %s925 = scalar_lea.vmem [#allocation12], 16
    %v926 = vld [vmem:[%s925] sm:$0xf]
    %v927 = vld [vmem:[%s925 + $0x4] sm:$0xf]
    %v928 = vld [vmem:[%s925 + $0x8] sm:$0xf]
    %v929 = vld [vmem:[%s925 + $0xc] sm:$0xf]
    %v934 = vunpack.c.l.b16 %v926
    %v935 = vunpack.c.l.b16 %v927
    %v936 = vunpack.c.l.b16 %v928
    %v937 = vunpack.c.l.b16 %v929
    %v938 = vpack.c.b16 %v935, %v934
    %v939 = vpack.c.b16 %v937, %v936
    %942 = vmatpush.bf16.msra.mxu0 0
    %943 = vmatpush.bf16.msra.mxu0 0
    %944 = vmatpush.bf16.msra.mxu0 0
    %945 = vmatpush.bf16.msra.mxu0 0
    %946 = vmatpush.bf16.msra.mxu0 0
    %947 = vmatpush.bf16.msra.mxu0 0
    %948 = vmatpush.bf16.msra.mxu0 %v939
    %949 = vmatpush.bf16.msra.mxu0 %v938
    %950 = vmatmul.bf16.gmra.mxu0 %v888
    %v951 = vpop.f32.mrf.mxu0
    %v952 = vadd.f32 0.0, %v951
    %v953 = vpop.f32.mrf.mxu0
    %v954 = vadd.f32 0.0, %v953
    %955 = vmatmul.bf16.gmra.mxu0 %v891
    %v956 = vpop.f32.mrf.mxu0
    %v957 = vadd.f32 0.0, %v956
    %v958 = vpop.f32.mrf.mxu0
    %v959 = vadd.f32 0.0, %v958
    %960 = vdwg.mxu0
    %v961 = vadd.f32 %v609, %v952
    %v962 = vadd.f32 %v611, %v954
    %v963 = vadd.f32 %v614, %v957
    %v964 = vadd.f32 %v616, %v959
    %s965 = scalar_lea.vmem [#allocation13], 1
    %v966 = vld [vmem:[%s965] sm:$0x1]
    %v968 = vperm.slane %v966, 0
    %v970 = vadd.f32 %v961, %v968
    %v971 = vadd.f32 %v962, %v968
    %v972 = vadd.f32 %v963, %v968
    %v973 = vadd.f32 %v964, %v968
    %v974 = vpack.c.bf16 %v922, %v921
    %v975 = vpack.c.bf16 %v924, %v923
    %s976 = scalar_lea.vmem %s1, 32
    %v977 = vld [vmem:[%s976] sm:$0xf]
    %v978 = vld [vmem:[%s976 + $0x4] sm:$0xf]
    %v979 = vld [vmem:[%s976 + $0x8] sm:$0xf]
    %v980 = vld [vmem:[%s976 + $0xc] sm:$0xf]
    %v985 = vunpack.c.l.b16 %v977
    %v986 = vunpack.c.l.b16 %v978
    %v987 = vunpack.c.l.b16 %v979
    %v988 = vunpack.c.l.b16 %v980
    %v989 = vpack.c.b16 %v986, %v985
    %v990 = vpack.c.b16 %v988, %v987
    %v992 = vsel %vm294, %v989, 0
    %v995 = vsel %vm294, %v990, 0
    %997 = vmatpush.bf16.msra.mxu0 0
    %998 = vmatpush.bf16.msra.mxu0 0
    %999 = vmatpush.bf16.msra.mxu0 0
    %1000 = vmatpush.bf16.msra.mxu0 0
    %1001 = vmatpush.bf16.msra.mxu0 0
    %1002 = vmatpush.bf16.msra.mxu0 0
    %1003 = vmatpush.bf16.msra.mxu0 %v975
    %1004 = vmatpush.bf16.msra.mxu0 %v974
    %1005 = vmatmul.bf16.gmra.mxu0 %v992
    %v1006 = vpop.f32.mrf.mxu0
    %v1007 = vadd.f32 0.0, %v1006
    %v1008 = vpop.f32.mrf.mxu0
    %v1009 = vadd.f32 0.0, %v1008
    %1010 = vmatmul.bf16.gmra.mxu0 %v995
    %v1011 = vpop.f32.mrf.mxu0
    %v1012 = vadd.f32 0.0, %v1011
    %v1013 = vpop.f32.mrf.mxu0
    %v1014 = vadd.f32 0.0, %v1013
    %1015 = vdwg.mxu0
    %v1016 = vpack.c.bf16 %v1009, %v1007
    %v1017 = vpack.c.bf16 %v1014, %v1012
    %s1018 = scalar_lea.vmem [#allocation4], 2
    %v1019 = vld [vmem:[%s1018] sm:$0x1]
    %s1020 = scalar_lea.vmem [#allocation7], 2
    %v1021 = vld [vmem:[%s1020] sm:$0x1]
    %s1022 = scalar_lea.vmem [#allocation2], 64
    %v1023 = vld [vmem:[%s1022] sm:$0xf]
    %v1024 = vld [vmem:[%s1022 + $0x4] sm:$0xf]
    %v1025 = vld [vmem:[%s1022 + $0x8] sm:$0xf]
    %v1026 = vld [vmem:[%s1022 + $0xc] sm:$0xf]
    %v1031 = vunpack.c.l.b16 %v1023
    %v1032 = vunpack.c.l.b16 %v1024
    %v1033 = vunpack.c.l.b16 %v1025
    %v1034 = vunpack.c.l.b16 %v1026
    %v1035 = vpack.c.b16 %v1032, %v1031
    %v1036 = vpack.c.b16 %v1034, %v1033
    %v1040 = vsel %vm294, %v1016, 0
    %v1043 = vsel %vm294, %v1017, 0
    %1045 = vmatpush.bf16.msra.mxu0 0
    %1046 = vmatpush.bf16.msra.mxu0 0
    %1047 = vmatpush.bf16.msra.mxu0 0
    %1048 = vmatpush.bf16.msra.mxu0 0
    %1049 = vmatpush.bf16.msra.mxu0 0
    %1050 = vmatpush.bf16.msra.mxu0 0
    %1051 = vmatpush.bf16.msra.mxu0 %v1036
    %1052 = vmatpush.bf16.msra.mxu0 %v1035
    %1053 = vmatmul.bf16.gmra.mxu0 %v1040
    %v1054 = vpop.f32.mrf.mxu0
    %v1055 = vadd.f32 0.0, %v1054
    %v1056 = vpop.f32.mrf.mxu0
    %v1057 = vadd.f32 0.0, %v1056
    %1058 = vmatmul.bf16.gmra.mxu0 %v1043
    %v1059 = vpop.f32.mrf.mxu0
    %v1060 = vadd.f32 0.0, %v1059
    %v1061 = vpop.f32.mrf.mxu0
    %v1062 = vadd.f32 0.0, %v1061
    %1063 = vdwg.mxu0
    %v1065 = vperm.slane %v1019, 0
    %v1067 = vadd.f32 %v1065, %v1055
    %v1068 = vadd.f32 %v1065, %v1057
    %v1069 = vadd.f32 %v1065, %v1060
    %v1070 = vadd.f32 %v1065, %v1062
    %s1071 = scalar_lea.vmem [#allocation6], 64
    %v1072 = vld [vmem:[%s1071] sm:$0xf]
    %v1073 = vld [vmem:[%s1071 + $0x4] sm:$0xf]
    %v1074 = vld [vmem:[%s1071 + $0x8] sm:$0xf]
    %v1075 = vld [vmem:[%s1071 + $0xc] sm:$0xf]
    %v1080 = vunpack.c.l.b16 %v1072
    %v1081 = vunpack.c.l.b16 %v1073
    %v1082 = vunpack.c.l.b16 %v1074
    %v1083 = vunpack.c.l.b16 %v1075
    %v1084 = vpack.c.b16 %v1081, %v1080
    %v1085 = vpack.c.b16 %v1083, %v1082
    %1088 = vmatpush.bf16.msra.mxu0 0
    %1089 = vmatpush.bf16.msra.mxu0 0
    %1090 = vmatpush.bf16.msra.mxu0 0
    %1091 = vmatpush.bf16.msra.mxu0 0
    %1092 = vmatpush.bf16.msra.mxu0 0
    %1093 = vmatpush.bf16.msra.mxu0 0
    %1094 = vmatpush.bf16.msra.mxu0 %v1085
    %1095 = vmatpush.bf16.msra.mxu0 %v1084
    %1096 = vmatmul.bf16.gmra.mxu0 %v1040
    %v1097 = vpop.f32.mrf.mxu0
    %v1098 = vadd.f32 0.0, %v1097
    %v1099 = vpop.f32.mrf.mxu0
    %v1100 = vadd.f32 0.0, %v1099
    %1101 = vmatmul.bf16.gmra.mxu0 %v1043
    %v1102 = vpop.f32.mrf.mxu0
    %v1103 = vadd.f32 0.0, %v1102
    %v1104 = vpop.f32.mrf.mxu0
    %v1105 = vadd.f32 0.0, %v1104
    %1106 = vdwg.mxu0
    %v1108 = vperm.slane %v1021, 0
    %v1110 = vadd.f32 %v1108, %v1098
    %v1111 = vadd.f32 %v1108, %v1100
    %v1112 = vadd.f32 %v1108, %v1103
    %v1113 = vadd.f32 %v1108, %v1105
    %s1114 = scalar_lea.vmem [#allocation2], 80
    %v1115 = vld [vmem:[%s1114] sm:$0xf]
    %v1116 = vld [vmem:[%s1114 + $0x4] sm:$0xf]
    %v1117 = vld [vmem:[%s1114 + $0x8] sm:$0xf]
    %v1118 = vld [vmem:[%s1114 + $0xc] sm:$0xf]
    %v1123 = vunpack.c.l.b16 %v1115
    %v1124 = vunpack.c.l.b16 %v1116
    %v1125 = vunpack.c.l.b16 %v1117
    %v1126 = vunpack.c.l.b16 %v1118
    %v1127 = vpack.c.b16 %v1124, %v1123
    %v1128 = vpack.c.b16 %v1126, %v1125
    %v1132 = vsel %vm294, %v974, 0
    %v1135 = vsel %vm294, %v975, 0
    %1137 = vmatpush.bf16.msra.mxu0 0
    %1138 = vmatpush.bf16.msra.mxu0 0
    %1139 = vmatpush.bf16.msra.mxu0 0
    %1140 = vmatpush.bf16.msra.mxu0 0
    %1141 = vmatpush.bf16.msra.mxu0 0
    %1142 = vmatpush.bf16.msra.mxu0 0
    %1143 = vmatpush.bf16.msra.mxu0 %v1128
    %1144 = vmatpush.bf16.msra.mxu0 %v1127
    %1145 = vmatmul.bf16.gmra.mxu0 %v1132
    %v1146 = vpop.f32.mrf.mxu0
    %v1147 = vadd.f32 0.0, %v1146
    %v1148 = vpop.f32.mrf.mxu0
    %v1149 = vadd.f32 0.0, %v1148
    %1150 = vmatmul.bf16.gmra.mxu0 %v1135
    %v1151 = vpop.f32.mrf.mxu0
    %v1152 = vadd.f32 0.0, %v1151
    %v1153 = vpop.f32.mrf.mxu0
    %v1154 = vadd.f32 0.0, %v1153
    %1155 = vdwg.mxu0
    %v1156 = vadd.f32 %v1067, %v1147
    %v1157 = vadd.f32 %v1068, %v1149
    %v1158 = vadd.f32 %v1069, %v1152
    %v1159 = vadd.f32 %v1070, %v1154
    %s1160 = scalar_lea.vmem [#allocation6], 80
    %v1161 = vld [vmem:[%s1160] sm:$0xf]
    %v1162 = vld [vmem:[%s1160 + $0x4] sm:$0xf]
    %v1163 = vld [vmem:[%s1160 + $0x8] sm:$0xf]
    %v1164 = vld [vmem:[%s1160 + $0xc] sm:$0xf]
    %v1169 = vunpack.c.l.b16 %v1161
    %v1170 = vunpack.c.l.b16 %v1162
    %v1171 = vunpack.c.l.b16 %v1163
    %v1172 = vunpack.c.l.b16 %v1164
    %v1173 = vpack.c.b16 %v1170, %v1169
    %v1174 = vpack.c.b16 %v1172, %v1171
    %1177 = vmatpush.bf16.msra.mxu0 0
    %1178 = vmatpush.bf16.msra.mxu0 0
    %1179 = vmatpush.bf16.msra.mxu0 0
    %1180 = vmatpush.bf16.msra.mxu0 0
    %1181 = vmatpush.bf16.msra.mxu0 0
    %1182 = vmatpush.bf16.msra.mxu0 0
    %1183 = vmatpush.bf16.msra.mxu0 %v1174
    %1184 = vmatpush.bf16.msra.mxu0 %v1173
    %1185 = vmatmul.bf16.gmra.mxu0 %v1132
    %v1186 = vpop.f32.mrf.mxu0
    %v1187 = vadd.f32 0.0, %v1186
    %v1188 = vpop.f32.mrf.mxu0
    %v1189 = vadd.f32 0.0, %v1188
    %1190 = vmatmul.bf16.gmra.mxu0 %v1135
    %v1191 = vpop.f32.mrf.mxu0
    %v1192 = vadd.f32 0.0, %v1191
    %v1193 = vpop.f32.mrf.mxu0
    %v1194 = vadd.f32 0.0, %v1193
    %1195 = vdwg.mxu0
    %v1196 = vadd.f32 %v1110, %v1187
    %v1197 = vadd.f32 %v1111, %v1189
    %v1198 = vadd.f32 %v1112, %v1192
    %v1199 = vadd.f32 %v1113, %v1194
    %v1200 = vtanh.pop %v1156
    %v1201 = vtanh.pop %v1157
    %v1202 = vtanh.pop %v1158
    %v1203 = vtanh.pop %v1159
    %v1204 = vmul.f32 %v1196, 0.5
    %v1205 = vmul.f32 %v1197, 0.5
    %v1206 = vmul.f32 %v1198, 0.5
    %v1207 = vmul.f32 %v1199, 0.5
    %v1208 = vtanh.pop %v1204
    %v1209 = vtanh.pop %v1205
    %v1210 = vtanh.pop %v1206
    %v1211 = vtanh.pop %v1207
    %v1212 = vadd.f32 %v1208, 1.0
    %v1213 = vadd.f32 %v1209, 1.0
    %v1214 = vadd.f32 %v1210, 1.0
    %v1215 = vadd.f32 %v1211, 1.0
    %v1216 = vmul.f32 %v1212, 0.5
    %v1217 = vmul.f32 %v1213, 0.5
    %v1218 = vmul.f32 %v1214, 0.5
    %v1219 = vmul.f32 %v1215, 0.5
    %v1220 = vmul.f32 %v1200, %v1216
    %v1221 = vmul.f32 %v1201, %v1217
    %v1222 = vmul.f32 %v1202, %v1218
    %v1223 = vmul.f32 %v1203, %v1219
    %v1224 = vpack.c.bf16 %v1221, %v1220
    %v1225 = vpack.c.bf16 %v1223, %v1222
    %s1226 = scalar_lea.vmem [#allocation9], 32
    %v1227 = vld [vmem:[%s1226] sm:$0xf]
    %v1228 = vld [vmem:[%s1226 + $0x4] sm:$0xf]
    %v1229 = vld [vmem:[%s1226 + $0x8] sm:$0xf]
    %v1230 = vld [vmem:[%s1226 + $0xc] sm:$0xf]
    %v1235 = vunpack.c.l.b16 %v1227
    %v1236 = vunpack.c.l.b16 %v1228
    %v1237 = vunpack.c.l.b16 %v1229
    %v1238 = vunpack.c.l.b16 %v1230
    %v1239 = vpack.c.b16 %v1236, %v1235
    %v1240 = vpack.c.b16 %v1238, %v1237
    %v1244 = vsel %vm294, %v1224, 0
    %v1247 = vsel %vm294, %v1225, 0
    %1249 = vmatpush.bf16.msra.mxu0 0
    %1250 = vmatpush.bf16.msra.mxu0 0
    %1251 = vmatpush.bf16.msra.mxu0 0
    %1252 = vmatpush.bf16.msra.mxu0 0
    %1253 = vmatpush.bf16.msra.mxu0 0
    %1254 = vmatpush.bf16.msra.mxu0 0
    %1255 = vmatpush.bf16.msra.mxu0 %v1240
    %1256 = vmatpush.bf16.msra.mxu0 %v1239
    %1257 = vmatmul.bf16.gmra.mxu0 %v1244
    %v1258 = vpop.f32.mrf.mxu0
    %v1259 = vadd.f32 0.0, %v1258
    %v1260 = vpop.f32.mrf.mxu0
    %v1261 = vadd.f32 0.0, %v1260
    %1262 = vmatmul.bf16.gmra.mxu0 %v1247
    %v1263 = vpop.f32.mrf.mxu0
    %v1264 = vadd.f32 0.0, %v1263
    %v1265 = vpop.f32.mrf.mxu0
    %v1266 = vadd.f32 0.0, %v1265
    %1267 = vdwg.mxu0
    %v1268 = vadd.f32 %v921, %v1259
    %v1269 = vadd.f32 %v922, %v1261
    %v1270 = vadd.f32 %v923, %v1264
    %v1271 = vadd.f32 %v924, %v1266
    %s1272 = scalar_lea.vmem [#allocation10], 2
    %v1273 = vld [vmem:[%s1272] sm:$0x1]
    %v1275 = vperm.slane %v1273, 0
    %v1277 = vadd.f32 %v1268, %v1275
    %v1278 = vadd.f32 %v1269, %v1275
    %v1279 = vadd.f32 %v1270, %v1275
    %v1280 = vadd.f32 %v1271, %v1275
    %s1281 = scalar_lea.vmem [#allocation12], 32
    %v1282 = vld [vmem:[%s1281] sm:$0xf]
    %v1283 = vld [vmem:[%s1281 + $0x4] sm:$0xf]
    %v1284 = vld [vmem:[%s1281 + $0x8] sm:$0xf]
    %v1285 = vld [vmem:[%s1281 + $0xc] sm:$0xf]
    %v1290 = vunpack.c.l.b16 %v1282
    %v1291 = vunpack.c.l.b16 %v1283
    %v1292 = vunpack.c.l.b16 %v1284
    %v1293 = vunpack.c.l.b16 %v1285
    %v1294 = vpack.c.b16 %v1291, %v1290
    %v1295 = vpack.c.b16 %v1293, %v1292
    %1298 = vmatpush.bf16.msra.mxu0 0
    %1299 = vmatpush.bf16.msra.mxu0 0
    %1300 = vmatpush.bf16.msra.mxu0 0
    %1301 = vmatpush.bf16.msra.mxu0 0
    %1302 = vmatpush.bf16.msra.mxu0 0
    %1303 = vmatpush.bf16.msra.mxu0 0
    %1304 = vmatpush.bf16.msra.mxu0 %v1295
    %1305 = vmatpush.bf16.msra.mxu0 %v1294
    %1306 = vmatmul.bf16.gmra.mxu0 %v1244
    %v1307 = vpop.f32.mrf.mxu0
    %v1308 = vadd.f32 0.0, %v1307
    %v1309 = vpop.f32.mrf.mxu0
    %v1310 = vadd.f32 0.0, %v1309
    %1311 = vmatmul.bf16.gmra.mxu0 %v1247
    %v1312 = vpop.f32.mrf.mxu0
    %v1313 = vadd.f32 0.0, %v1312
    %v1314 = vpop.f32.mrf.mxu0
    %v1315 = vadd.f32 0.0, %v1314
    %1316 = vdwg.mxu0
    %v1317 = vadd.f32 %v970, %v1308
    %v1318 = vadd.f32 %v971, %v1310
    %v1319 = vadd.f32 %v972, %v1313
    %v1320 = vadd.f32 %v973, %v1315
    %s1321 = scalar_lea.vmem [#allocation13], 2
    %v1322 = vld [vmem:[%s1321] sm:$0x1]
    %v1324 = vperm.slane %v1322, 0
    %v1326 = vadd.f32 %v1317, %v1324
    %v1327 = vadd.f32 %v1318, %v1324
    %v1328 = vadd.f32 %v1319, %v1324
    %v1329 = vadd.f32 %v1320, %v1324
    %v1330 = vpack.c.bf16 %v1278, %v1277
    %v1331 = vpack.c.bf16 %v1280, %v1279
    %1332 = vmatpush.bf16.msra.mxu0 0
    %1333 = vmatpush.bf16.msra.mxu0 0
    %1334 = vmatpush.bf16.msra.mxu0 0
    %1335 = vmatpush.bf16.msra.mxu0 0
    %1336 = vmatpush.bf16.msra.mxu0 0
    %1337 = vmatpush.bf16.msra.mxu0 0
    %1338 = vmatpush.bf16.msra.mxu0 %v1331
    %1339 = vmatpush.bf16.msra.mxu0 %v1330
    %1340 = vmatmul.bf16.gmra.mxu0 %v296
    %v1341 = vpop.f32.mrf.mxu0
    %v1342 = vadd.f32 0.0, %v1341
    %v1343 = vpop.f32.mrf.mxu0
    %v1344 = vadd.f32 0.0, %v1343
    %1345 = vmatmul.bf16.gmra.mxu0 %v299
    %v1346 = vpop.f32.mrf.mxu0
    %v1347 = vadd.f32 0.0, %v1346
    %v1348 = vpop.f32.mrf.mxu0
    %v1349 = vadd.f32 0.0, %v1348
    %1350 = vdwg.mxu0
    %v1351 = vpack.c.bf16 %v1344, %v1342
    %v1352 = vpack.c.bf16 %v1349, %v1347
    %s1353 = scalar_lea.vmem [#allocation4], 3
    %v1354 = vld [vmem:[%s1353] sm:$0x1]
    %s1355 = scalar_lea.vmem [#allocation7], 3
    %v1356 = vld [vmem:[%s1355] sm:$0x1]
    %s1357 = scalar_lea.vmem [#allocation2], 96
    %v1358 = vld [vmem:[%s1357] sm:$0xf]
    %v1359 = vld [vmem:[%s1357 + $0x4] sm:$0xf]
    %v1360 = vld [vmem:[%s1357 + $0x8] sm:$0xf]
    %v1361 = vld [vmem:[%s1357 + $0xc] sm:$0xf]
    %v1366 = vunpack.c.l.b16 %v1358
    %v1367 = vunpack.c.l.b16 %v1359
    %v1368 = vunpack.c.l.b16 %v1360
    %v1369 = vunpack.c.l.b16 %v1361
    %v1370 = vpack.c.b16 %v1367, %v1366
    %v1371 = vpack.c.b16 %v1369, %v1368
    %v1375 = vsel %vm294, %v1351, 0
    %v1378 = vsel %vm294, %v1352, 0
    %1380 = vmatpush.bf16.msra.mxu0 0
    %1381 = vmatpush.bf16.msra.mxu0 0
    %1382 = vmatpush.bf16.msra.mxu0 0
    %1383 = vmatpush.bf16.msra.mxu0 0
    %1384 = vmatpush.bf16.msra.mxu0 0
    %1385 = vmatpush.bf16.msra.mxu0 0
    %1386 = vmatpush.bf16.msra.mxu0 %v1371
    %1387 = vmatpush.bf16.msra.mxu0 %v1370
    %1388 = vmatmul.bf16.gmra.mxu0 %v1375
    %v1389 = vpop.f32.mrf.mxu0
    %v1390 = vadd.f32 0.0, %v1389
    %v1391 = vpop.f32.mrf.mxu0
    %v1392 = vadd.f32 0.0, %v1391
    %1393 = vmatmul.bf16.gmra.mxu0 %v1378
    %v1394 = vpop.f32.mrf.mxu0
    %v1395 = vadd.f32 0.0, %v1394
    %v1396 = vpop.f32.mrf.mxu0
    %v1397 = vadd.f32 0.0, %v1396
    %1398 = vdwg.mxu0
    %v1400 = vperm.slane %v1354, 0
    %v1402 = vadd.f32 %v1400, %v1390
    %v1403 = vadd.f32 %v1400, %v1392
    %v1404 = vadd.f32 %v1400, %v1395
    %v1405 = vadd.f32 %v1400, %v1397
    %s1406 = scalar_lea.vmem [#allocation6], 96
    %v1407 = vld [vmem:[%s1406] sm:$0xf]
    %v1408 = vld [vmem:[%s1406 + $0x4] sm:$0xf]
    %v1409 = vld [vmem:[%s1406 + $0x8] sm:$0xf]
    %v1410 = vld [vmem:[%s1406 + $0xc] sm:$0xf]
    %v1415 = vunpack.c.l.b16 %v1407
    %v1416 = vunpack.c.l.b16 %v1408
    %v1417 = vunpack.c.l.b16 %v1409
    %v1418 = vunpack.c.l.b16 %v1410
    %v1419 = vpack.c.b16 %v1416, %v1415
    %v1420 = vpack.c.b16 %v1418, %v1417
    %1423 = vmatpush.bf16.msra.mxu0 0
    %1424 = vmatpush.bf16.msra.mxu0 0
    %1425 = vmatpush.bf16.msra.mxu0 0
    %1426 = vmatpush.bf16.msra.mxu0 0
    %1427 = vmatpush.bf16.msra.mxu0 0
    %1428 = vmatpush.bf16.msra.mxu0 0
    %1429 = vmatpush.bf16.msra.mxu0 %v1420
    %1430 = vmatpush.bf16.msra.mxu0 %v1419
    %1431 = vmatmul.bf16.gmra.mxu0 %v1375
    %v1432 = vpop.f32.mrf.mxu0
    %v1433 = vadd.f32 0.0, %v1432
    %v1434 = vpop.f32.mrf.mxu0
    %v1435 = vadd.f32 0.0, %v1434
    %1436 = vmatmul.bf16.gmra.mxu0 %v1378
    %v1437 = vpop.f32.mrf.mxu0
    %v1438 = vadd.f32 0.0, %v1437
    %v1439 = vpop.f32.mrf.mxu0
    %v1440 = vadd.f32 0.0, %v1439
    %1441 = vdwg.mxu0
    %v1443 = vperm.slane %v1356, 0
    %v1445 = vadd.f32 %v1443, %v1433
    %v1446 = vadd.f32 %v1443, %v1435
    %v1447 = vadd.f32 %v1443, %v1438
    %v1448 = vadd.f32 %v1443, %v1440
    %s1449 = scalar_lea.vmem [#allocation2], 112
    %v1450 = vld [vmem:[%s1449] sm:$0xf]
    %v1451 = vld [vmem:[%s1449 + $0x4] sm:$0xf]
    %v1452 = vld [vmem:[%s1449 + $0x8] sm:$0xf]
    %v1453 = vld [vmem:[%s1449 + $0xc] sm:$0xf]
    %v1458 = vunpack.c.l.b16 %v1450
    %v1459 = vunpack.c.l.b16 %v1451
    %v1460 = vunpack.c.l.b16 %v1452
    %v1461 = vunpack.c.l.b16 %v1453
    %v1462 = vpack.c.b16 %v1459, %v1458
    %v1463 = vpack.c.b16 %v1461, %v1460
    %v1467 = vsel %vm294, %v1330, 0
    %v1470 = vsel %vm294, %v1331, 0
    %1472 = vmatpush.bf16.msra.mxu0 0
    %1473 = vmatpush.bf16.msra.mxu0 0
    %1474 = vmatpush.bf16.msra.mxu0 0
    %1475 = vmatpush.bf16.msra.mxu0 0
    %1476 = vmatpush.bf16.msra.mxu0 0
    %1477 = vmatpush.bf16.msra.mxu0 0
    %1478 = vmatpush.bf16.msra.mxu0 %v1463
    %1479 = vmatpush.bf16.msra.mxu0 %v1462
    %1480 = vmatmul.bf16.gmra.mxu0 %v1467
    %v1481 = vpop.f32.mrf.mxu0
    %v1482 = vadd.f32 0.0, %v1481
    %v1483 = vpop.f32.mrf.mxu0
    %v1484 = vadd.f32 0.0, %v1483
    %1485 = vmatmul.bf16.gmra.mxu0 %v1470
    %v1486 = vpop.f32.mrf.mxu0
    %v1487 = vadd.f32 0.0, %v1486
    %v1488 = vpop.f32.mrf.mxu0
    %v1489 = vadd.f32 0.0, %v1488
    %1490 = vdwg.mxu0
    %v1491 = vadd.f32 %v1402, %v1482
    %v1492 = vadd.f32 %v1403, %v1484
    %v1493 = vadd.f32 %v1404, %v1487
    %v1494 = vadd.f32 %v1405, %v1489
    %s1495 = scalar_lea.vmem [#allocation6], 112
    %v1496 = vld [vmem:[%s1495] sm:$0xf]
    %v1497 = vld [vmem:[%s1495 + $0x4] sm:$0xf]
    %v1498 = vld [vmem:[%s1495 + $0x8] sm:$0xf]
    %v1499 = vld [vmem:[%s1495 + $0xc] sm:$0xf]
    %v1504 = vunpack.c.l.b16 %v1496
    %v1505 = vunpack.c.l.b16 %v1497
    %v1506 = vunpack.c.l.b16 %v1498
    %v1507 = vunpack.c.l.b16 %v1499
    %v1508 = vpack.c.b16 %v1505, %v1504
    %v1509 = vpack.c.b16 %v1507, %v1506
    %1512 = vmatpush.bf16.msra.mxu0 0
    %1513 = vmatpush.bf16.msra.mxu0 0
    %1514 = vmatpush.bf16.msra.mxu0 0
    %1515 = vmatpush.bf16.msra.mxu0 0
    %1516 = vmatpush.bf16.msra.mxu0 0
    %1517 = vmatpush.bf16.msra.mxu0 0
    %1518 = vmatpush.bf16.msra.mxu0 %v1509
    %1519 = vmatpush.bf16.msra.mxu0 %v1508
    %1520 = vmatmul.bf16.gmra.mxu0 %v1467
    %v1521 = vpop.f32.mrf.mxu0
    %v1522 = vadd.f32 0.0, %v1521
    %v1523 = vpop.f32.mrf.mxu0
    %v1524 = vadd.f32 0.0, %v1523
    %1525 = vmatmul.bf16.gmra.mxu0 %v1470
    %v1526 = vpop.f32.mrf.mxu0
    %v1527 = vadd.f32 0.0, %v1526
    %v1528 = vpop.f32.mrf.mxu0
    %v1529 = vadd.f32 0.0, %v1528
    %1530 = vdwg.mxu0
    %v1531 = vadd.f32 %v1445, %v1522
    %v1532 = vadd.f32 %v1446, %v1524
    %v1533 = vadd.f32 %v1447, %v1527
    %v1534 = vadd.f32 %v1448, %v1529
    %v1535 = vtanh.pop %v1491
    %v1536 = vtanh.pop %v1492
    %v1537 = vtanh.pop %v1493
    %v1538 = vtanh.pop %v1494
    %v1539 = vmul.f32 %v1531, 0.5
    %v1540 = vmul.f32 %v1532, 0.5
    %v1541 = vmul.f32 %v1533, 0.5
    %v1542 = vmul.f32 %v1534, 0.5
    %v1543 = vtanh.pop %v1539
    %v1544 = vtanh.pop %v1540
    %v1545 = vtanh.pop %v1541
    %v1546 = vtanh.pop %v1542
    %v1547 = vadd.f32 %v1543, 1.0
    %v1548 = vadd.f32 %v1544, 1.0
    %v1549 = vadd.f32 %v1545, 1.0
    %v1550 = vadd.f32 %v1546, 1.0
    %v1551 = vmul.f32 %v1547, 0.5
    %v1552 = vmul.f32 %v1548, 0.5
    %v1553 = vmul.f32 %v1549, 0.5
    %v1554 = vmul.f32 %v1550, 0.5
    %v1555 = vmul.f32 %v1535, %v1551
    %v1556 = vmul.f32 %v1536, %v1552
    %v1557 = vmul.f32 %v1537, %v1553
    %v1558 = vmul.f32 %v1538, %v1554
    %v1559 = vpack.c.bf16 %v1556, %v1555
    %v1560 = vpack.c.bf16 %v1558, %v1557
    %s1561 = scalar_lea.vmem [#allocation9], 48
    %v1562 = vld [vmem:[%s1561] sm:$0xf]
    %v1563 = vld [vmem:[%s1561 + $0x4] sm:$0xf]
    %v1564 = vld [vmem:[%s1561 + $0x8] sm:$0xf]
    %v1565 = vld [vmem:[%s1561 + $0xc] sm:$0xf]
    %v1570 = vunpack.c.l.b16 %v1562
    %v1571 = vunpack.c.l.b16 %v1563
    %v1572 = vunpack.c.l.b16 %v1564
    %v1573 = vunpack.c.l.b16 %v1565
    %v1574 = vpack.c.b16 %v1571, %v1570
    %v1575 = vpack.c.b16 %v1573, %v1572
    %v1579 = vsel %vm294, %v1559, 0
    %v1582 = vsel %vm294, %v1560, 0
    %1584 = vmatpush.bf16.msra.mxu0 0
    %1585 = vmatpush.bf16.msra.mxu0 0
    %1586 = vmatpush.bf16.msra.mxu0 0
    %1587 = vmatpush.bf16.msra.mxu0 0
    %1588 = vmatpush.bf16.msra.mxu0 0
    %1589 = vmatpush.bf16.msra.mxu0 0
    %1590 = vmatpush.bf16.msra.mxu0 %v1575
    %1591 = vmatpush.bf16.msra.mxu0 %v1574
    %1592 = vmatmul.bf16.gmra.mxu0 %v1579
    %v1593 = vpop.f32.mrf.mxu0
    %v1594 = vadd.f32 0.0, %v1593
    %v1595 = vpop.f32.mrf.mxu0
    %v1596 = vadd.f32 0.0, %v1595
    %1597 = vmatmul.bf16.gmra.mxu0 %v1582
    %v1598 = vpop.f32.mrf.mxu0
    %v1599 = vadd.f32 0.0, %v1598
    %v1600 = vpop.f32.mrf.mxu0
    %v1601 = vadd.f32 0.0, %v1600
    %1602 = vdwg.mxu0
    %v1603 = vadd.f32 %v1277, %v1594
    %v1604 = vadd.f32 %v1278, %v1596
    %v1605 = vadd.f32 %v1279, %v1599
    %v1606 = vadd.f32 %v1280, %v1601
    %s1607 = scalar_lea.vmem [#allocation10], 3
    %v1608 = vld [vmem:[%s1607] sm:$0x1]
    %v1610 = vperm.slane %v1608, 0
    %v1612 = vadd.f32 %v1603, %v1610
    %v1613 = vadd.f32 %v1604, %v1610
    %v1614 = vadd.f32 %v1605, %v1610
    %v1615 = vadd.f32 %v1606, %v1610
    %s1616 = scalar_lea.vmem [#allocation12], 48
    %v1617 = vld [vmem:[%s1616] sm:$0xf]
    %v1618 = vld [vmem:[%s1616 + $0x4] sm:$0xf]
    %v1619 = vld [vmem:[%s1616 + $0x8] sm:$0xf]
    %v1620 = vld [vmem:[%s1616 + $0xc] sm:$0xf]
    %v1625 = vunpack.c.l.b16 %v1617
    %v1626 = vunpack.c.l.b16 %v1618
    %v1627 = vunpack.c.l.b16 %v1619
    %v1628 = vunpack.c.l.b16 %v1620
    %v1629 = vpack.c.b16 %v1626, %v1625
    %v1630 = vpack.c.b16 %v1628, %v1627
    %1633 = vmatpush.bf16.msra.mxu0 0
    %1634 = vmatpush.bf16.msra.mxu0 0
    %1635 = vmatpush.bf16.msra.mxu0 0
    %1636 = vmatpush.bf16.msra.mxu0 0
    %1637 = vmatpush.bf16.msra.mxu0 0
    %1638 = vmatpush.bf16.msra.mxu0 0
    %1639 = vmatpush.bf16.msra.mxu0 %v1630
    %1640 = vmatpush.bf16.msra.mxu0 %v1629
    %1641 = vmatmul.bf16.gmra.mxu0 %v1579
    %v1642 = vpop.f32.mrf.mxu0
    %v1643 = vadd.f32 0.0, %v1642
    %v1644 = vpop.f32.mrf.mxu0
    %v1645 = vadd.f32 0.0, %v1644
    %1646 = vmatmul.bf16.gmra.mxu0 %v1582
    %v1647 = vpop.f32.mrf.mxu0
    %v1648 = vadd.f32 0.0, %v1647
    %v1649 = vpop.f32.mrf.mxu0
    %v1650 = vadd.f32 0.0, %v1649
    %1651 = vdwg.mxu0
    %v1652 = vadd.f32 %v1326, %v1643
    %v1653 = vadd.f32 %v1327, %v1645
    %v1654 = vadd.f32 %v1328, %v1648
    %v1655 = vadd.f32 %v1329, %v1650
    %s1656 = scalar_lea.vmem [#allocation13], 3
    %v1657 = vld [vmem:[%s1656] sm:$0x1]
    %v1659 = vperm.slane %v1657, 0
    %v1661 = vadd.f32 %v1652, %v1659
    %v1662 = vadd.f32 %v1653, %v1659
    %v1663 = vadd.f32 %v1654, %v1659
    %v1664 = vadd.f32 %v1655, %v1659
    %v1665 = vpack.c.bf16 %v1613, %v1612
    %v1666 = vpack.c.bf16 %v1615, %v1614
    %1667 = vmatpush.bf16.msra.mxu0 0
    %1668 = vmatpush.bf16.msra.mxu0 0
    %1669 = vmatpush.bf16.msra.mxu0 0
    %1670 = vmatpush.bf16.msra.mxu0 0
    %1671 = vmatpush.bf16.msra.mxu0 0
    %1672 = vmatpush.bf16.msra.mxu0 0
    %1673 = vmatpush.bf16.msra.mxu0 %v1666
    %1674 = vmatpush.bf16.msra.mxu0 %v1665
    %1675 = vmatmul.bf16.gmra.mxu0 %v636
    %v1676 = vpop.f32.mrf.mxu0
    %v1677 = vadd.f32 0.0, %v1676
    %v1678 = vpop.f32.mrf.mxu0
    %v1679 = vadd.f32 0.0, %v1678
    %1680 = vmatmul.bf16.gmra.mxu0 %v639
    %v1681 = vpop.f32.mrf.mxu0
    %v1682 = vadd.f32 0.0, %v1681
    %v1683 = vpop.f32.mrf.mxu0
    %v1684 = vadd.f32 0.0, %v1683
    %1685 = vdwg.mxu0
    %v1686 = vpack.c.bf16 %v1679, %v1677
    %v1687 = vpack.c.bf16 %v1684, %v1682
    %s1688 = scalar_lea.vmem [#allocation4], 4
    %v1689 = vld [vmem:[%s1688] sm:$0x1]
    %s1690 = scalar_lea.vmem [#allocation7], 4
    %v1691 = vld [vmem:[%s1690] sm:$0x1]
    %s1692 = scalar_lea.vmem [#allocation2], 128
    %v1693 = vld [vmem:[%s1692] sm:$0xf]
    %v1694 = vld [vmem:[%s1692 + $0x4] sm:$0xf]
    %v1695 = vld [vmem:[%s1692 + $0x8] sm:$0xf]
    %v1696 = vld [vmem:[%s1692 + $0xc] sm:$0xf]
    %v1701 = vunpack.c.l.b16 %v1693
    %v1702 = vunpack.c.l.b16 %v1694
    %v1703 = vunpack.c.l.b16 %v1695
    %v1704 = vunpack.c.l.b16 %v1696
    %v1705 = vpack.c.b16 %v1702, %v1701
    %v1706 = vpack.c.b16 %v1704, %v1703
    %v1710 = vsel %vm294, %v1686, 0
    %v1713 = vsel %vm294, %v1687, 0
    %1715 = vmatpush.bf16.msra.mxu0 0
    %1716 = vmatpush.bf16.msra.mxu0 0
    %1717 = vmatpush.bf16.msra.mxu0 0
    %1718 = vmatpush.bf16.msra.mxu0 0
    %1719 = vmatpush.bf16.msra.mxu0 0
    %1720 = vmatpush.bf16.msra.mxu0 0
    %1721 = vmatpush.bf16.msra.mxu0 %v1706
    %1722 = vmatpush.bf16.msra.mxu0 %v1705
    %1723 = vmatmul.bf16.gmra.mxu0 %v1710
    %v1724 = vpop.f32.mrf.mxu0
    %v1725 = vadd.f32 0.0, %v1724
    %v1726 = vpop.f32.mrf.mxu0
    %v1727 = vadd.f32 0.0, %v1726
    %1728 = vmatmul.bf16.gmra.mxu0 %v1713
    %v1729 = vpop.f32.mrf.mxu0
    %v1730 = vadd.f32 0.0, %v1729
    %v1731 = vpop.f32.mrf.mxu0
    %v1732 = vadd.f32 0.0, %v1731
    %1733 = vdwg.mxu0
    %v1735 = vperm.slane %v1689, 0
    %v1737 = vadd.f32 %v1735, %v1725
    %v1738 = vadd.f32 %v1735, %v1727
    %v1739 = vadd.f32 %v1735, %v1730
    %v1740 = vadd.f32 %v1735, %v1732
    %s1741 = scalar_lea.vmem [#allocation6], 128
    %v1742 = vld [vmem:[%s1741] sm:$0xf]
    %v1743 = vld [vmem:[%s1741 + $0x4] sm:$0xf]
    %v1744 = vld [vmem:[%s1741 + $0x8] sm:$0xf]
    %v1745 = vld [vmem:[%s1741 + $0xc] sm:$0xf]
    %v1750 = vunpack.c.l.b16 %v1742
    %v1751 = vunpack.c.l.b16 %v1743
    %v1752 = vunpack.c.l.b16 %v1744
    %v1753 = vunpack.c.l.b16 %v1745
    %v1754 = vpack.c.b16 %v1751, %v1750
    %v1755 = vpack.c.b16 %v1753, %v1752
    %1758 = vmatpush.bf16.msra.mxu0 0
    %1759 = vmatpush.bf16.msra.mxu0 0
    %1760 = vmatpush.bf16.msra.mxu0 0
    %1761 = vmatpush.bf16.msra.mxu0 0
    %1762 = vmatpush.bf16.msra.mxu0 0
    %1763 = vmatpush.bf16.msra.mxu0 0
    %1764 = vmatpush.bf16.msra.mxu0 %v1755
    %1765 = vmatpush.bf16.msra.mxu0 %v1754
    %1766 = vmatmul.bf16.gmra.mxu0 %v1710
    %v1767 = vpop.f32.mrf.mxu0
    %v1768 = vadd.f32 0.0, %v1767
    %v1769 = vpop.f32.mrf.mxu0
    %v1770 = vadd.f32 0.0, %v1769
    %1771 = vmatmul.bf16.gmra.mxu0 %v1713
    %v1772 = vpop.f32.mrf.mxu0
    %v1773 = vadd.f32 0.0, %v1772
    %v1774 = vpop.f32.mrf.mxu0
    %v1775 = vadd.f32 0.0, %v1774
    %1776 = vdwg.mxu0
    %v1778 = vperm.slane %v1691, 0
    %v1780 = vadd.f32 %v1778, %v1768
    %v1781 = vadd.f32 %v1778, %v1770
    %v1782 = vadd.f32 %v1778, %v1773
    %v1783 = vadd.f32 %v1778, %v1775
    %s1784 = scalar_lea.vmem [#allocation2], 144
    %v1785 = vld [vmem:[%s1784] sm:$0xf]
    %v1786 = vld [vmem:[%s1784 + $0x4] sm:$0xf]
    %v1787 = vld [vmem:[%s1784 + $0x8] sm:$0xf]
    %v1788 = vld [vmem:[%s1784 + $0xc] sm:$0xf]
    %v1793 = vunpack.c.l.b16 %v1785
    %v1794 = vunpack.c.l.b16 %v1786
    %v1795 = vunpack.c.l.b16 %v1787
    %v1796 = vunpack.c.l.b16 %v1788
    %v1797 = vpack.c.b16 %v1794, %v1793
    %v1798 = vpack.c.b16 %v1796, %v1795
    %v1802 = vsel %vm294, %v1665, 0
    %v1805 = vsel %vm294, %v1666, 0
    %1807 = vmatpush.bf16.msra.mxu0 0
    %1808 = vmatpush.bf16.msra.mxu0 0
    %1809 = vmatpush.bf16.msra.mxu0 0
    %1810 = vmatpush.bf16.msra.mxu0 0
    %1811 = vmatpush.bf16.msra.mxu0 0
    %1812 = vmatpush.bf16.msra.mxu0 0
    %1813 = vmatpush.bf16.msra.mxu0 %v1798
    %1814 = vmatpush.bf16.msra.mxu0 %v1797
    %1815 = vmatmul.bf16.gmra.mxu0 %v1802
    %v1816 = vpop.f32.mrf.mxu0
    %v1817 = vadd.f32 0.0, %v1816
    %v1818 = vpop.f32.mrf.mxu0
    %v1819 = vadd.f32 0.0, %v1818
    %1820 = vmatmul.bf16.gmra.mxu0 %v1805
    %v1821 = vpop.f32.mrf.mxu0
    %v1822 = vadd.f32 0.0, %v1821
    %v1823 = vpop.f32.mrf.mxu0
    %v1824 = vadd.f32 0.0, %v1823
    %1825 = vdwg.mxu0
    %v1826 = vadd.f32 %v1737, %v1817
    %v1827 = vadd.f32 %v1738, %v1819
    %v1828 = vadd.f32 %v1739, %v1822
    %v1829 = vadd.f32 %v1740, %v1824
    %s1830 = scalar_lea.vmem [#allocation6], 144
    %v1831 = vld [vmem:[%s1830] sm:$0xf]
    %v1832 = vld [vmem:[%s1830 + $0x4] sm:$0xf]
    %v1833 = vld [vmem:[%s1830 + $0x8] sm:$0xf]
    %v1834 = vld [vmem:[%s1830 + $0xc] sm:$0xf]
    %v1839 = vunpack.c.l.b16 %v1831
    %v1840 = vunpack.c.l.b16 %v1832
    %v1841 = vunpack.c.l.b16 %v1833
    %v1842 = vunpack.c.l.b16 %v1834
    %v1843 = vpack.c.b16 %v1840, %v1839
    %v1844 = vpack.c.b16 %v1842, %v1841
    %1847 = vmatpush.bf16.msra.mxu0 0
    %1848 = vmatpush.bf16.msra.mxu0 0
    %1849 = vmatpush.bf16.msra.mxu0 0
    %1850 = vmatpush.bf16.msra.mxu0 0
    %1851 = vmatpush.bf16.msra.mxu0 0
    %1852 = vmatpush.bf16.msra.mxu0 0
    %1853 = vmatpush.bf16.msra.mxu0 %v1844
    %1854 = vmatpush.bf16.msra.mxu0 %v1843
    %1855 = vmatmul.bf16.gmra.mxu0 %v1802
    %v1856 = vpop.f32.mrf.mxu0
    %v1857 = vadd.f32 0.0, %v1856
    %v1858 = vpop.f32.mrf.mxu0
    %v1859 = vadd.f32 0.0, %v1858
    %1860 = vmatmul.bf16.gmra.mxu0 %v1805
    %v1861 = vpop.f32.mrf.mxu0
    %v1862 = vadd.f32 0.0, %v1861
    %v1863 = vpop.f32.mrf.mxu0
    %v1864 = vadd.f32 0.0, %v1863
    %1865 = vdwg.mxu0
    %v1866 = vadd.f32 %v1780, %v1857
    %v1867 = vadd.f32 %v1781, %v1859
    %v1868 = vadd.f32 %v1782, %v1862
    %v1869 = vadd.f32 %v1783, %v1864
    %v1870 = vtanh.pop %v1826
    %v1871 = vtanh.pop %v1827
    %v1872 = vtanh.pop %v1828
    %v1873 = vtanh.pop %v1829
    %v1874 = vmul.f32 %v1866, 0.5
    %v1875 = vmul.f32 %v1867, 0.5
    %v1876 = vmul.f32 %v1868, 0.5
    %v1877 = vmul.f32 %v1869, 0.5
    %v1878 = vtanh.pop %v1874
    %v1879 = vtanh.pop %v1875
    %v1880 = vtanh.pop %v1876
    %v1881 = vtanh.pop %v1877
    %v1882 = vadd.f32 %v1878, 1.0
    %v1883 = vadd.f32 %v1879, 1.0
    %v1884 = vadd.f32 %v1880, 1.0
    %v1885 = vadd.f32 %v1881, 1.0
    %v1886 = vmul.f32 %v1882, 0.5
    %v1887 = vmul.f32 %v1883, 0.5
    %v1888 = vmul.f32 %v1884, 0.5
    %v1889 = vmul.f32 %v1885, 0.5
    %v1890 = vmul.f32 %v1870, %v1886
    %v1891 = vmul.f32 %v1871, %v1887
    %v1892 = vmul.f32 %v1872, %v1888
    %v1893 = vmul.f32 %v1873, %v1889
    %v1894 = vpack.c.bf16 %v1891, %v1890
    %v1895 = vpack.c.bf16 %v1893, %v1892
    %s1896 = scalar_lea.vmem [#allocation9], 64
    %v1897 = vld [vmem:[%s1896] sm:$0xf]
    %v1898 = vld [vmem:[%s1896 + $0x4] sm:$0xf]
    %v1899 = vld [vmem:[%s1896 + $0x8] sm:$0xf]
    %v1900 = vld [vmem:[%s1896 + $0xc] sm:$0xf]
    %v1905 = vunpack.c.l.b16 %v1897
    %v1906 = vunpack.c.l.b16 %v1898
    %v1907 = vunpack.c.l.b16 %v1899
    %v1908 = vunpack.c.l.b16 %v1900
    %v1909 = vpack.c.b16 %v1906, %v1905
    %v1910 = vpack.c.b16 %v1908, %v1907
    %v1914 = vsel %vm294, %v1894, 0
    %v1917 = vsel %vm294, %v1895, 0
    %1919 = vmatpush.bf16.msra.mxu0 0
    %1920 = vmatpush.bf16.msra.mxu0 0
    %1921 = vmatpush.bf16.msra.mxu0 0
    %1922 = vmatpush.bf16.msra.mxu0 0
    %1923 = vmatpush.bf16.msra.mxu0 0
    %1924 = vmatpush.bf16.msra.mxu0 0
    %1925 = vmatpush.bf16.msra.mxu0 %v1910
    %1926 = vmatpush.bf16.msra.mxu0 %v1909
    %1927 = vmatmul.bf16.gmra.mxu0 %v1914
    %v1928 = vpop.f32.mrf.mxu0
    %v1929 = vadd.f32 0.0, %v1928
    %v1930 = vpop.f32.mrf.mxu0
    %v1931 = vadd.f32 0.0, %v1930
    %1932 = vmatmul.bf16.gmra.mxu0 %v1917
    %v1933 = vpop.f32.mrf.mxu0
    %v1934 = vadd.f32 0.0, %v1933
    %v1935 = vpop.f32.mrf.mxu0
    %v1936 = vadd.f32 0.0, %v1935
    %1937 = vdwg.mxu0
    %v1938 = vadd.f32 %v1612, %v1929
    %v1939 = vadd.f32 %v1613, %v1931
    %v1940 = vadd.f32 %v1614, %v1934
    %v1941 = vadd.f32 %v1615, %v1936
    %s1942 = scalar_lea.vmem [#allocation10], 4
    %v1943 = vld [vmem:[%s1942] sm:$0x1]
    %v1945 = vperm.slane %v1943, 0
    %v1947 = vadd.f32 %v1938, %v1945
    %v1948 = vadd.f32 %v1939, %v1945
    %v1949 = vadd.f32 %v1940, %v1945
    %v1950 = vadd.f32 %v1941, %v1945
    %s1951 = scalar_lea.vmem [#allocation12], 64
    %v1952 = vld [vmem:[%s1951] sm:$0xf]
    %v1953 = vld [vmem:[%s1951 + $0x4] sm:$0xf]
    %v1954 = vld [vmem:[%s1951 + $0x8] sm:$0xf]
    %v1955 = vld [vmem:[%s1951 + $0xc] sm:$0xf]
    %v1960 = vunpack.c.l.b16 %v1952
    %v1961 = vunpack.c.l.b16 %v1953
    %v1962 = vunpack.c.l.b16 %v1954
    %v1963 = vunpack.c.l.b16 %v1955
    %v1964 = vpack.c.b16 %v1961, %v1960
    %v1965 = vpack.c.b16 %v1963, %v1962
    %1968 = vmatpush.bf16.msra.mxu0 0
    %1969 = vmatpush.bf16.msra.mxu0 0
    %1970 = vmatpush.bf16.msra.mxu0 0
    %1971 = vmatpush.bf16.msra.mxu0 0
    %1972 = vmatpush.bf16.msra.mxu0 0
    %1973 = vmatpush.bf16.msra.mxu0 0
    %1974 = vmatpush.bf16.msra.mxu0 %v1965
    %1975 = vmatpush.bf16.msra.mxu0 %v1964
    %1976 = vmatmul.bf16.gmra.mxu0 %v1914
    %v1977 = vpop.f32.mrf.mxu0
    %v1978 = vadd.f32 0.0, %v1977
    %v1979 = vpop.f32.mrf.mxu0
    %v1980 = vadd.f32 0.0, %v1979
    %1981 = vmatmul.bf16.gmra.mxu0 %v1917
    %v1982 = vpop.f32.mrf.mxu0
    %v1983 = vadd.f32 0.0, %v1982
    %v1984 = vpop.f32.mrf.mxu0
    %v1985 = vadd.f32 0.0, %v1984
    %1986 = vdwg.mxu0
    %v1987 = vadd.f32 %v1661, %v1978
    %v1988 = vadd.f32 %v1662, %v1980
    %v1989 = vadd.f32 %v1663, %v1983
    %v1990 = vadd.f32 %v1664, %v1985
    %s1991 = scalar_lea.vmem [#allocation13], 4
    %v1992 = vld [vmem:[%s1991] sm:$0x1]
    %v1994 = vperm.slane %v1992, 0
    %v1996 = vadd.f32 %v1987, %v1994
    %v1997 = vadd.f32 %v1988, %v1994
    %v1998 = vadd.f32 %v1989, %v1994
    %v1999 = vadd.f32 %v1990, %v1994
    %v2000 = vpack.c.bf16 %v1948, %v1947
    %v2001 = vpack.c.bf16 %v1950, %v1949
    %2002 = vmatpush.bf16.msra.mxu0 0
    %2003 = vmatpush.bf16.msra.mxu0 0
    %2004 = vmatpush.bf16.msra.mxu0 0
    %2005 = vmatpush.bf16.msra.mxu0 0
    %2006 = vmatpush.bf16.msra.mxu0 0
    %2007 = vmatpush.bf16.msra.mxu0 0
    %2008 = vmatpush.bf16.msra.mxu0 %v2001
    %2009 = vmatpush.bf16.msra.mxu0 %v2000
    %2010 = vmatmul.bf16.gmra.mxu0 %v992
    %v2011 = vpop.f32.mrf.mxu0
    %v2012 = vadd.f32 0.0, %v2011
    %v2013 = vpop.f32.mrf.mxu0
    %v2014 = vadd.f32 0.0, %v2013
    %2015 = vmatmul.bf16.gmra.mxu0 %v995
    %v2016 = vpop.f32.mrf.mxu0
    %v2017 = vadd.f32 0.0, %v2016
    %v2018 = vpop.f32.mrf.mxu0
    %v2019 = vadd.f32 0.0, %v2018
    %2020 = vdwg.mxu0
    %v2021 = vpack.c.bf16 %v2014, %v2012
    %v2022 = vpack.c.bf16 %v2019, %v2017
    %s2023 = scalar_lea.vmem [#allocation4], 5
    %v2024 = vld [vmem:[%s2023] sm:$0x1]
    %s2025 = scalar_lea.vmem [#allocation7], 5
    %v2026 = vld [vmem:[%s2025] sm:$0x1]
    %s2027 = scalar_lea.vmem [#allocation2], 160
    %v2028 = vld [vmem:[%s2027] sm:$0xf]
    %v2029 = vld [vmem:[%s2027 + $0x4] sm:$0xf]
    %v2030 = vld [vmem:[%s2027 + $0x8] sm:$0xf]
    %v2031 = vld [vmem:[%s2027 + $0xc] sm:$0xf]
    %v2036 = vunpack.c.l.b16 %v2028
    %v2037 = vunpack.c.l.b16 %v2029
    %v2038 = vunpack.c.l.b16 %v2030
    %v2039 = vunpack.c.l.b16 %v2031
    %v2040 = vpack.c.b16 %v2037, %v2036
    %v2041 = vpack.c.b16 %v2039, %v2038
    %v2045 = vsel %vm294, %v2021, 0
    %v2048 = vsel %vm294, %v2022, 0
    %2050 = vmatpush.bf16.msra.mxu0 0
    %2051 = vmatpush.bf16.msra.mxu0 0
    %2052 = vmatpush.bf16.msra.mxu0 0
    %2053 = vmatpush.bf16.msra.mxu0 0
    %2054 = vmatpush.bf16.msra.mxu0 0
    %2055 = vmatpush.bf16.msra.mxu0 0
    %2056 = vmatpush.bf16.msra.mxu0 %v2041
    %2057 = vmatpush.bf16.msra.mxu0 %v2040
    %2058 = vmatmul.bf16.gmra.mxu0 %v2045
    %v2059 = vpop.f32.mrf.mxu0
    %v2060 = vadd.f32 0.0, %v2059
    %v2061 = vpop.f32.mrf.mxu0
    %v2062 = vadd.f32 0.0, %v2061
    %2063 = vmatmul.bf16.gmra.mxu0 %v2048
    %v2064 = vpop.f32.mrf.mxu0
    %v2065 = vadd.f32 0.0, %v2064
    %v2066 = vpop.f32.mrf.mxu0
    %v2067 = vadd.f32 0.0, %v2066
    %2068 = vdwg.mxu0
    %v2070 = vperm.slane %v2024, 0
    %v2072 = vadd.f32 %v2070, %v2060
    %v2073 = vadd.f32 %v2070, %v2062
    %v2074 = vadd.f32 %v2070, %v2065
    %v2075 = vadd.f32 %v2070, %v2067
    %s2076 = scalar_lea.vmem [#allocation6], 160
    %v2077 = vld [vmem:[%s2076] sm:$0xf]
    %v2078 = vld [vmem:[%s2076 + $0x4] sm:$0xf]
    %v2079 = vld [vmem:[%s2076 + $0x8] sm:$0xf]
    %v2080 = vld [vmem:[%s2076 + $0xc] sm:$0xf]
    %v2085 = vunpack.c.l.b16 %v2077
    %v2086 = vunpack.c.l.b16 %v2078
    %v2087 = vunpack.c.l.b16 %v2079
    %v2088 = vunpack.c.l.b16 %v2080
    %v2089 = vpack.c.b16 %v2086, %v2085
    %v2090 = vpack.c.b16 %v2088, %v2087
    %2093 = vmatpush.bf16.msra.mxu0 0
    %2094 = vmatpush.bf16.msra.mxu0 0
    %2095 = vmatpush.bf16.msra.mxu0 0
    %2096 = vmatpush.bf16.msra.mxu0 0
    %2097 = vmatpush.bf16.msra.mxu0 0
    %2098 = vmatpush.bf16.msra.mxu0 0
    %2099 = vmatpush.bf16.msra.mxu0 %v2090
    %2100 = vmatpush.bf16.msra.mxu0 %v2089
    %2101 = vmatmul.bf16.gmra.mxu0 %v2045
    %v2102 = vpop.f32.mrf.mxu0
    %v2103 = vadd.f32 0.0, %v2102
    %v2104 = vpop.f32.mrf.mxu0
    %v2105 = vadd.f32 0.0, %v2104
    %2106 = vmatmul.bf16.gmra.mxu0 %v2048
    %v2107 = vpop.f32.mrf.mxu0
    %v2108 = vadd.f32 0.0, %v2107
    %v2109 = vpop.f32.mrf.mxu0
    %v2110 = vadd.f32 0.0, %v2109
    %2111 = vdwg.mxu0
    %v2113 = vperm.slane %v2026, 0
    %v2115 = vadd.f32 %v2113, %v2103
    %v2116 = vadd.f32 %v2113, %v2105
    %v2117 = vadd.f32 %v2113, %v2108
    %v2118 = vadd.f32 %v2113, %v2110
    %s2119 = scalar_lea.vmem [#allocation2], 176
    %v2120 = vld [vmem:[%s2119] sm:$0xf]
    %v2121 = vld [vmem:[%s2119 + $0x4] sm:$0xf]
    %v2122 = vld [vmem:[%s2119 + $0x8] sm:$0xf]
    %v2123 = vld [vmem:[%s2119 + $0xc] sm:$0xf]
    %v2128 = vunpack.c.l.b16 %v2120
    %v2129 = vunpack.c.l.b16 %v2121
    %v2130 = vunpack.c.l.b16 %v2122
    %v2131 = vunpack.c.l.b16 %v2123
    %v2132 = vpack.c.b16 %v2129, %v2128
    %v2133 = vpack.c.b16 %v2131, %v2130
    %v2137 = vsel %vm294, %v2000, 0
    %v2140 = vsel %vm294, %v2001, 0
    %2142 = vmatpush.bf16.msra.mxu0 0
    %2143 = vmatpush.bf16.msra.mxu0 0
    %2144 = vmatpush.bf16.msra.mxu0 0
    %2145 = vmatpush.bf16.msra.mxu0 0
    %2146 = vmatpush.bf16.msra.mxu0 0
    %2147 = vmatpush.bf16.msra.mxu0 0
    %2148 = vmatpush.bf16.msra.mxu0 %v2133
    %2149 = vmatpush.bf16.msra.mxu0 %v2132
    %2150 = vmatmul.bf16.gmra.mxu0 %v2137
    %v2151 = vpop.f32.mrf.mxu0
    %v2152 = vadd.f32 0.0, %v2151
    %v2153 = vpop.f32.mrf.mxu0
    %v2154 = vadd.f32 0.0, %v2153
    %2155 = vmatmul.bf16.gmra.mxu0 %v2140
    %v2156 = vpop.f32.mrf.mxu0
    %v2157 = vadd.f32 0.0, %v2156
    %v2158 = vpop.f32.mrf.mxu0
    %v2159 = vadd.f32 0.0, %v2158
    %2160 = vdwg.mxu0
    %v2161 = vadd.f32 %v2072, %v2152
    %v2162 = vadd.f32 %v2073, %v2154
    %v2163 = vadd.f32 %v2074, %v2157
    %v2164 = vadd.f32 %v2075, %v2159
    %s2165 = scalar_lea.vmem [#allocation6], 176
    %v2166 = vld [vmem:[%s2165] sm:$0xf]
    %v2167 = vld [vmem:[%s2165 + $0x4] sm:$0xf]
    %v2168 = vld [vmem:[%s2165 + $0x8] sm:$0xf]
    %v2169 = vld [vmem:[%s2165 + $0xc] sm:$0xf]
    %v2174 = vunpack.c.l.b16 %v2166
    %v2175 = vunpack.c.l.b16 %v2167
    %v2176 = vunpack.c.l.b16 %v2168
    %v2177 = vunpack.c.l.b16 %v2169
    %v2178 = vpack.c.b16 %v2175, %v2174
    %v2179 = vpack.c.b16 %v2177, %v2176
    %2182 = vmatpush.bf16.msra.mxu0 0
    %2183 = vmatpush.bf16.msra.mxu0 0
    %2184 = vmatpush.bf16.msra.mxu0 0
    %2185 = vmatpush.bf16.msra.mxu0 0
    %2186 = vmatpush.bf16.msra.mxu0 0
    %2187 = vmatpush.bf16.msra.mxu0 0
    %2188 = vmatpush.bf16.msra.mxu0 %v2179
    %2189 = vmatpush.bf16.msra.mxu0 %v2178
    %2190 = vmatmul.bf16.gmra.mxu0 %v2137
    %v2191 = vpop.f32.mrf.mxu0
    %v2192 = vadd.f32 0.0, %v2191
    %v2193 = vpop.f32.mrf.mxu0
    %v2194 = vadd.f32 0.0, %v2193
    %2195 = vmatmul.bf16.gmra.mxu0 %v2140
    %v2196 = vpop.f32.mrf.mxu0
    %v2197 = vadd.f32 0.0, %v2196
    %v2198 = vpop.f32.mrf.mxu0
    %v2199 = vadd.f32 0.0, %v2198
    %2200 = vdwg.mxu0
    %v2201 = vadd.f32 %v2115, %v2192
    %v2202 = vadd.f32 %v2116, %v2194
    %v2203 = vadd.f32 %v2117, %v2197
    %v2204 = vadd.f32 %v2118, %v2199
    %v2205 = vtanh.pop %v2161
    %v2206 = vtanh.pop %v2162
    %v2207 = vtanh.pop %v2163
    %v2208 = vtanh.pop %v2164
    %v2209 = vmul.f32 %v2201, 0.5
    %v2210 = vmul.f32 %v2202, 0.5
    %v2211 = vmul.f32 %v2203, 0.5
    %v2212 = vmul.f32 %v2204, 0.5
    %v2213 = vtanh.pop %v2209
    %v2214 = vtanh.pop %v2210
    %v2215 = vtanh.pop %v2211
    %v2216 = vtanh.pop %v2212
    %v2217 = vadd.f32 %v2213, 1.0
    %v2218 = vadd.f32 %v2214, 1.0
    %v2219 = vadd.f32 %v2215, 1.0
    %v2220 = vadd.f32 %v2216, 1.0
    %v2221 = vmul.f32 %v2217, 0.5
    %v2222 = vmul.f32 %v2218, 0.5
    %v2223 = vmul.f32 %v2219, 0.5
    %v2224 = vmul.f32 %v2220, 0.5
    %v2225 = vmul.f32 %v2205, %v2221
    %v2226 = vmul.f32 %v2206, %v2222
    %v2227 = vmul.f32 %v2207, %v2223
    %v2228 = vmul.f32 %v2208, %v2224
    %v2229 = vpack.c.bf16 %v2226, %v2225
    %v2230 = vpack.c.bf16 %v2228, %v2227
    %s2231 = scalar_lea.vmem [#allocation12], 80
    %v2232 = vld [vmem:[%s2231] sm:$0xf]
    %v2233 = vld [vmem:[%s2231 + $0x4] sm:$0xf]
    %v2234 = vld [vmem:[%s2231 + $0x8] sm:$0xf]
    %v2235 = vld [vmem:[%s2231 + $0xc] sm:$0xf]
    %v2240 = vunpack.c.l.b16 %v2232
    %v2241 = vunpack.c.l.b16 %v2233
    %v2242 = vunpack.c.l.b16 %v2234
    %v2243 = vunpack.c.l.b16 %v2235
    %v2244 = vpack.c.b16 %v2241, %v2240
    %v2245 = vpack.c.b16 %v2243, %v2242
    %v2249 = vsel %vm294, %v2229, 0
    %v2252 = vsel %vm294, %v2230, 0
    %2254 = vmatpush.bf16.msra.mxu0 0
    %2255 = vmatpush.bf16.msra.mxu0 0
    %2256 = vmatpush.bf16.msra.mxu0 0
    %2257 = vmatpush.bf16.msra.mxu0 0
    %2258 = vmatpush.bf16.msra.mxu0 0
    %2259 = vmatpush.bf16.msra.mxu0 0
    %2260 = vmatpush.bf16.msra.mxu0 %v2245
    %2261 = vmatpush.bf16.msra.mxu0 %v2244
    %2262 = vmatmul.bf16.gmra.mxu0 %v2249
    %v2263 = vpop.f32.mrf.mxu0
    %v2264 = vadd.f32 0.0, %v2263
    %v2265 = vpop.f32.mrf.mxu0
    %v2266 = vadd.f32 0.0, %v2265
    %2267 = vmatmul.bf16.gmra.mxu0 %v2252
    %v2268 = vpop.f32.mrf.mxu0
    %v2269 = vadd.f32 0.0, %v2268
    %v2270 = vpop.f32.mrf.mxu0
    %v2271 = vadd.f32 0.0, %v2270
    %2272 = vdwg.mxu0
    %v2273 = vadd.f32 %v1996, %v2264
    %v2274 = vadd.f32 %v1997, %v2266
    %v2275 = vadd.f32 %v1998, %v2269
    %v2276 = vadd.f32 %v1999, %v2271
    %s2277 = scalar_lea.vmem [#allocation13], 5
    %v2278 = vld [vmem:[%s2277] sm:$0x1]
    %v2280 = vperm.slane %v2278, 0
    %v2282 = vadd.f32 %v2273, %v2280
    %v2283 = vadd.f32 %v2274, %v2280
    %v2284 = vadd.f32 %v2275, %v2280
    %v2285 = vadd.f32 %v2276, %v2280
    %v2286 = vmax.f32 %v2282, 0.0
    %v2287 = vmax.f32 %v2283, 0.0
    %v2288 = vmax.f32 %v2284, 0.0
    %v2289 = vmax.f32 %v2285, 0.0
    %v2290 = vpack.c.bf16 %v2287, %v2286
    %v2291 = vpack.c.bf16 %v2289, %v2288
    %v2292 = vld [vmem:[#allocation15] sm:$0xf]
    %v2293 = vld [vmem:[#allocation15 + $0x4] sm:$0xf]
    %v2294 = vld [vmem:[#allocation15 + $0x8] sm:$0xf]
    %v2295 = vld [vmem:[#allocation15 + $0xc] sm:$0xf]
    %v2296 = vld [vmem:[#allocation16] sm:$0x1]
    %v2298 = vperm.slane %v2296, 0
    %v2304 = vunpack.c.l.b16 %v2292
    %v2305 = vunpack.c.l.b16 %v2293
    %v2306 = vunpack.c.l.b16 %v2294
    %v2307 = vunpack.c.l.b16 %v2295
    %v2308 = vpack.c.b16 %v2305, %v2304
    %v2309 = vpack.c.b16 %v2307, %v2306
    %v2313 = vsel %vm294, %v2290, 0
    %v2316 = vsel %vm294, %v2291, 0
    %2318 = vmatpush.bf16.msra.mxu0 0
    %2319 = vmatpush.bf16.msra.mxu0 0
    %2320 = vmatpush.bf16.msra.mxu0 0
    %2321 = vmatpush.bf16.msra.mxu0 0
    %2322 = vmatpush.bf16.msra.mxu0 0
    %2323 = vmatpush.bf16.msra.mxu0 0
    %2324 = vmatpush.bf16.msra.mxu0 %v2309
    %2325 = vmatpush.bf16.msra.mxu0 %v2308
    %2326 = vmatmul.bf16.gmra.mxu0 %v2313
    %v2327 = vpop.f32.mrf.mxu0
    %v2328 = vadd.f32 %v2298, %v2327
    %v2329 = vpop.f32.mrf.mxu0
    %v2330 = vadd.f32 %v2298, %v2329
    %2331 = vmatmul.bf16.gmra.mxu0 %v2316
    %v2332 = vpop.f32.mrf.mxu0
    %v2333 = vadd.f32 %v2298, %v2332
    %v2334 = vpop.f32.mrf.mxu0
    %v2335 = vadd.f32 %v2298, %v2334
    %2336 = vdwg.mxu0
    %v2337 = vmax.f32 %v2328, 0.0
    %v2338 = vmax.f32 %v2330, 0.0
    %v2339 = vmax.f32 %v2333, 0.0
    %v2340 = vmax.f32 %v2335, 0.0
    %v2341 = vpack.c.bf16 %v2338, %v2337
    %v2342 = vpack.c.bf16 %v2340, %v2339
    %v2343 = vld [vmem:[#allocation18] sm:$0xf]
    %v2344 = vld [vmem:[#allocation18 + $0x4] sm:$0xf]
    %v2345 = vld [vmem:[#allocation18 + $0x8] sm:$0xf]
    %v2346 = vld [vmem:[#allocation18 + $0xc] sm:$0xf]
    %v2347 = vld [vmem:[#allocation19] sm:$0x1]
    %v2349 = vperm.slane %v2347, 0
    %v2355 = vunpack.c.l.b16 %v2343
    %v2356 = vunpack.c.l.b16 %v2344
    %v2357 = vunpack.c.l.b16 %v2345
    %v2358 = vunpack.c.l.b16 %v2346
    %v2359 = vpack.c.b16 %v2356, %v2355
    %v2360 = vpack.c.b16 %v2358, %v2357
    %v2364 = vsel %vm294, %v2341, 0
    %v2367 = vsel %vm294, %v2342, 0
    %2369 = vmatpush.bf16.msra.mxu0 0
    %2370 = vmatpush.bf16.msra.mxu0 0
    %2371 = vmatpush.bf16.msra.mxu0 0
    %2372 = vmatpush.bf16.msra.mxu0 0
    %2373 = vmatpush.bf16.msra.mxu0 0
    %2374 = vmatpush.bf16.msra.mxu0 0
    %2375 = vmatpush.bf16.msra.mxu0 %v2360
    %2376 = vmatpush.bf16.msra.mxu0 %v2359
    %2377 = vmatmul.bf16.gmra.mxu0 %v2364
    %v2378 = vpop.f32.mrf.mxu0
    %v2379 = vadd.f32 %v2349, %v2378
    %v2380 = vpop.f32.mrf.mxu0
    %v2381 = vadd.f32 %v2349, %v2380
    %2382 = vmatmul.bf16.gmra.mxu0 %v2367
    %v2383 = vpop.f32.mrf.mxu0
    %v2384 = vadd.f32 %v2349, %v2383
    %v2385 = vpop.f32.mrf.mxu0
    %v2386 = vadd.f32 %v2349, %v2385
    %2387 = vdwg.mxu0
    %v2388 = vpack.c.bf16 %v2379, %v2379
    %v2389 = vpack.c.bf16 %v2381, %v2381
    %v2390 = vpack.c.bf16 %v2384, %v2384
    %v2391 = vpack.c.bf16 %v2386, %v2386
    %2392 = vst [vmem:[%s16] sm:$0xf] %v2388
    %2393 = vst [vmem:[%s16 + $0x4] sm:$0xf] %v2389
    %2394 = vst [vmem:[%s16 + $0x8] sm:$0xf] %v2390
    %2395 = vst [vmem:[%s16 + $0xc] sm:$0xf] %v2391
    // Predicated region
    $region114: #{wavenet_forward.1} parent=1 // pred_check
      _
    $region115: #{wavenet_forward.1} parent=1 // pred_check_branch
      %2397 = sbr.rel (0) target = $region117
    $region116: #{wavenet_forward.1} parent=1 // pred_region
      _
    $region117: #{wavenet_forward.1} parent=1 // pred_fallthru
      _
    // Predicated region
    $region118: #{wavenet_forward.1} parent=1 // pred_check
      _
    $region119: #{wavenet_forward.1} parent=1 // pred_check_branch
      %2399 = sbr.rel (0) target = $region121
    $region120: #{wavenet_forward.1} parent=1 // pred_region
      _
    $region121: #{wavenet_forward.1} parent=1 // pred_fallthru
      _
    %2400 = vsyncpa [#allocation3], 1
    %2401 = vsyncpa [#allocation5], 1
    %2402 = vsyncpa [#allocation8], 1
    %2403 = vsyncpa [#allocation11], 1
    %2404 = vsyncpa [#allocation14], 1
    %2405 = vsyncpa [#allocation17], 1
    %2406 = vsyncpa [#allocation20], 1

</llo_original>
